<compile_context>
chip_gen: v7x
topology: tpu7x:2x2x1
jax: 0.10.0
libtpu: 0.0.40
codegen_flags: <defaults>
</compile_context>

<pallas_src>
import jax
import jax.numpy as jnp
from jax import lax
from jax.experimental import pallas as pl
from jax.experimental.pallas import tpu as pltpu

NUM_CLASSES = 3
ENC_CH = 512   # resnet34 deepest-stage channel count
MID_CH = 64
VMEM_LIMIT = 32 * 1024 * 1024


def _round_up(a, b):
    return (a + b - 1) // b * b


# ----------------------------------------------------------------------------
# Kernel 1: conv1 (3x3, stride 2, pad 1, Cin=1 -> 64) as 9 VPU multiply-adds
# over full-K (K=9) im2col patches — no K padding in HBM, no MXU needed.
# ----------------------------------------------------------------------------
def _conv1_kernel(x_ref, w_ref, b_ref, o_ref):
    x = x_ref[...].astype(jnp.float32)          # [tm, 9]
    w = w_ref[...].astype(jnp.float32)          # [9, Cout]
    acc = jnp.zeros((x.shape[0], w.shape[1]), jnp.float32)
    for k in range(w.shape[0]):                 # 9 static taps
        acc = acc + x[:, k:k + 1] * w[k:k + 1, :]
    y = jnp.maximum(acc + b_ref[...], 0.0)
    o_ref[...] = y.astype(o_ref.dtype)


def conv1_s2_p1(x, w, b):
    """x:[B,H,W,1] -> relu(conv3x3 stride2 pad1) : [B,H/2,W/2,64] bf16."""
    x = x.astype(jnp.bfloat16)
    B, H, W, Cin = x.shape
    assert Cin == 1
    kh = kw = 3
    stride, pad = 2, 1
    Ho = (H + 2 * pad - kh) // stride + 1
    Wo = (W + 2 * pad - kw) // stride + 1
    xp = jnp.pad(x, ((0, 0), (pad, pad), (pad, pad), (0, 0)))
    cols = []
    for i in range(kh):
        for j in range(kw):
            cols.append(xp[:, i:i + stride * (Ho - 1) + 1:stride,
                              j:j + stride * (Wo - 1) + 1:stride, :])
    K = kh * kw * Cin
    patches = jnp.concatenate(cols, axis=-1).reshape(B * Ho * Wo, K)

    Cout = w.shape[-1]
    M = B * Ho * Wo
    tm = min(512, _round_up(M, 8))
    M_pad = _round_up(M, tm)
    Xp = jnp.pad(patches, ((0, M_pad - M), (0, 0)))
    wb = w.reshape(K, Cout).astype(jnp.bfloat16)
    bias = b.astype(jnp.float32).reshape(1, Cout)

    y = pl.pallas_call(
        _conv1_kernel,
        out_shape=jax.ShapeDtypeStruct((M_pad, Cout), jnp.bfloat16),
        grid_spec=pltpu.PrefetchScalarGridSpec(
            num_scalar_prefetch=0,
            grid=(M_pad // tm,),
            in_specs=[
                pl.BlockSpec((tm, K), lambda i: (i, 0)),      # full-K block
                pl.BlockSpec((K, Cout), lambda i: (0, 0)),
                pl.BlockSpec((1, Cout), lambda i: (0, 0)),
            ],
            out_specs=pl.BlockSpec((tm, Cout), lambda i: (i, 0)),
        ),
        compiler_params=pltpu.CompilerParams(
            dimension_semantics=("parallel",),
            vmem_limit_bytes=VMEM_LIMIT),
    )(Xp, wb, bias)
    return y[:M].reshape(B, Ho, Wo, Cout)


# ----------------------------------------------------------------------------
# Kernel 2: conv2 (3x3, stride 2, pad 1, 64 -> 512) directly from the padded
# NHWC activations.  Column phases are merged onto 128 lanes by a free reshape;
# the three kernel rows arrive as three BlockSpecs with per-tap row offsets.
# Per output row: 6 MXU dots [Wo,128]x[128,512], f32 accumulate, bias+relu.
# ----------------------------------------------------------------------------
def _conv2_kernel(x0_ref, x1_ref, x2_ref, w_ref, b_ref, o_ref):
    wo = o_ref.shape[2]
    acc = jnp.zeros((o_ref.shape[2], o_ref.shape[3]), jnp.float32)
    for i, xref in enumerate((x0_ref, x1_ref, x2_ref)):
        row = xref[0, 0, 0]                              # [Wp2, 2*Cin] bf16
        acc += jnp.dot(row[0:wo, :], w_ref[i, 0],
                       preferred_element_type=jnp.float32)
        acc += jnp.dot(row[1:wo + 1, :], w_ref[i, 1],
                       preferred_element_type=jnp.float32)
    y = jnp.maximum(acc + b_ref[...], 0.0)
    o_ref[0, 0] = y.astype(o_ref.dtype)


def conv2_s2_p1(h1, w, b):
    """h1:[B,H1,W1,64] bf16 -> relu(conv3x3 stride2 pad1) : [B,H1/2,W1/2,512] bf16."""
    B, H1, W1, Cin = h1.shape
    assert H1 % 2 == 0 and W1 % 2 == 0
    Cout = w.shape[-1]
    Ho, Wo = H1 // 2, W1 // 2
    Hp2, Wp2 = Ho + 1, Wo + 1

    hp = jnp.pad(h1.astype(jnp.bfloat16), ((0, 0), (1, 1), (1, 1), (0, 0)))
    # Free reshape: xr[b, R, q, Cc, p*Cin+ch] = hp[b, 2R+q, 2Cc+p, ch]
    xr = hp.reshape(B, Hp2, 2, Wp2, 2 * Cin)

    wb = w.astype(jnp.bfloat16)
    zeros = jnp.zeros((Cin, Cout), jnp.bfloat16)
    # w_taps[i, 0] covers column taps j=0 (even phase) and j=1 (odd phase);
    # w_taps[i, 1] covers j=2 (even phase of the next column), odd half zeroed.
    w_taps = jnp.stack(
        [jnp.stack([jnp.concatenate([wb[i, 0], wb[i, 1]], axis=0),
                    jnp.concatenate([wb[i, 2], zeros], axis=0)], axis=0)
         for i in range(3)], axis=0)                     # [3, 2, 2*Cin, Cout]
    bias = b.astype(jnp.float32).reshape(1, Cout)

    xspec = lambda dr, q: pl.BlockSpec(
        (1, 1, 1, Wp2, 2 * Cin),
        (lambda bb, r, _dr=dr, _q=q: (bb, r + _dr, _q, 0, 0)))

    out = pl.pallas_call(
        _conv2_kernel,
        out_shape=jax.ShapeDtypeStruct((B, Ho, Wo, Cout), jnp.bfloat16),
        grid_spec=pltpu.PrefetchScalarGridSpec(
            num_scalar_prefetch=0,
            grid=(B, Ho),
            in_specs=[
                xspec(0, 0),                              # kernel row i=0
                xspec(0, 1),                              # kernel row i=1
                xspec(1, 0),                              # kernel row i=2
                pl.BlockSpec((3, 2, 2 * Cin, Cout), lambda bb, r: (0, 0, 0, 0)),
                pl.BlockSpec((1, Cout), lambda bb, r: (0, 0)),
            ],
            out_specs=pl.BlockSpec((1, 1, Wo, Cout), lambda bb, r: (bb, r, 0, 0)),
        ),
        compiler_params=pltpu.CompilerParams(
            dimension_semantics=("parallel", "arbitrary"),
            vmem_limit_bytes=VMEM_LIMIT),
    )(xr, xr, xr, w_taps, bias)
    return out


# ----------------------------------------------------------------------------
# Kernel 3: fused head, tiled over batch ("parallel") and spatial P tiles:
#   running f32 pool sum + 1x1 seg conv on the MXU -> sigmoid written straight
#   into the resident seg output block -> fc -> (argmax==0) mask in the finale.
# ----------------------------------------------------------------------------
def _head_kernel(enc_ref, segw_ref, segb_ref, fcw_ref, fcb_ref,
                 cls_ref, seg_ref, sum_sc):
    k = pl.program_id(1)
    tp = enc_ref.shape[1]
    inv_p = 1.0 / seg_ref.shape[1]

    @pl.when(k == 0)
    def _init():
        sum_sc[...] = jnp.zeros_like(sum_sc)

    e = enc_ref[0]                                              # [tp, C] bf16
    sum_sc[...] += jnp.sum(e.astype(jnp.float32), axis=0, keepdims=True)

    # 1x1 seg conv on the MXU: [tp, C] @ [C, 1]
    logits = jnp.dot(e, segw_ref[...],
                     preferred_element_type=jnp.float32) + segb_ref[...]
    start = pl.multiple_of(k * tp, tp)
    seg_ref[0, pl.ds(start, tp), :] = jax.nn.sigmoid(logits)

    @pl.when(k == pl.num_programs(1) - 1)
    def _finish():
        pooled = sum_sc[...] * inv_p                            # AdaptiveAvgPool2d(1)
        cls = jnp.dot(pooled, fcw_ref[...],
                      preferred_element_type=jnp.float32) + fcb_ref[...]
        cls_ref[0] = cls.astype(cls_ref.dtype)
        # argmax(cls,1)==0  <=>  cls[:,0] >= max(cls)  (first-occurrence)
        mx = jnp.max(cls, axis=1, keepdims=True)
        normal = (cls[:, 0:1] >= mx).astype(jnp.float32)        # [1, 1]
        seg_ref[...] = seg_ref[...] * (1.0 - normal[0, 0])


def head_pool_fc_seg_mask(enc_flat, seg_w_col, seg_b, fc_w, fc_b):
    """enc_flat:[B,P,C] bf16 -> (cls:[B,1,NC] f32, seg_lo_masked:[B,P,1] f32)."""
    B, P, C = enc_flat.shape
    NC = fc_w.shape[1]
    tp = P
    for cand in (512, 256, 128, 64, 32, 16, 8):
        if P % cand == 0:
            tp = cand
            break
    nP = P // tp

    return pl.pallas_call(
        _head_kernel,
        out_shape=(
            jax.ShapeDtypeStruct((B, 1, NC), jnp.float32),
            jax.ShapeDtypeStruct((B, P, 1), jnp.float32),
        ),
        grid_spec=pltpu.PrefetchScalarGridSpec(
            num_scalar_prefetch=0,
            grid=(B, nP),
            in_specs=[
                pl.BlockSpec((1, tp, C), lambda b, k: (b, k, 0)),
                pl.BlockSpec((C, 1), lambda b, k: (0, 0)),
                pl.BlockSpec((1, 1), lambda b, k: (0, 0)),
                pl.BlockSpec((C, NC), lambda b, k: (0, 0)),
                pl.BlockSpec((1, NC), lambda b, k: (0, 0)),
            ],
            out_specs=(
                pl.BlockSpec((1, 1, NC), lambda b, k: (b, 0, 0)),
                pl.BlockSpec((1, P, 1), lambda b, k: (b, 0, 0)),
            ),
            scratch_shapes=[pltpu.VMEM((1, C), jnp.float32)],   # pool running sum
        ),
        compiler_params=pltpu.CompilerParams(
            dimension_semantics=("parallel", "arbitrary"),
            vmem_limit_bytes=VMEM_LIMIT),
    )(enc_flat, seg_w_col, seg_b.reshape(1, 1).astype(jnp.float32),
      fc_w.astype(jnp.float32), fc_b.reshape(1, NC).astype(jnp.float32))


# ----------------------------------------------------------------------------
# Model
# ----------------------------------------------------------------------------
def init_params(key):
    ks = jax.random.split(key, 5)
    s = 0.05
    return {
        "c1_w": jax.random.normal(ks[0], (3, 3, 1, MID_CH), jnp.float32) * s,
        "c1_b": jnp.zeros((MID_CH,), jnp.float32),
        "c2_w": jax.random.normal(ks[1], (3, 3, MID_CH, ENC_CH), jnp.float32) * s,
        "c2_b": jnp.zeros((ENC_CH,), jnp.float32),
        "seg_w": jax.random.normal(ks[2], (1, ENC_CH), jnp.float32) * s,
        "seg_b": jnp.zeros((1,), jnp.float32),
        "fc_w": jax.random.normal(ks[3], (ENC_CH, NUM_CLASSES), jnp.float32) * s,
        "fc_b": jax.random.normal(ks[4], (NUM_CLASSES,), jnp.float32) * s,
    }


def multitask_forward(params, x_nchw):
    """x_nchw:[B,1,H,W] -> (seg:[B,1,H,W] sigmoid-masked, cls:[B,NUM_CLASSES])."""
    B, Cin, H, W = x_nchw.shape
    assert Cin == 1 and H % 4 == 0 and W % 4 == 0
    x = jnp.transpose(x_nchw, (0, 2, 3, 1))                       # -> NHWC

    # --- simplified encoder (stand-in for resnet34 encoder) ------------------
    h1 = conv1_s2_p1(x, params["c1_w"], params["c1_b"])           # [B,H/2,W/2,64]  bf16
    enc = conv2_s2_p1(h1, params["c2_w"], params["c2_b"])         # [B,H/4,W/4,512] bf16
    _, Hf, Wf, C = enc.shape
    enc_flat = enc.reshape(B, Hf * Wf, C)

    # --- fused exact head (pool -> fc -> mask) + low-res seg conv ------------
    seg_w_col = params["seg_w"].astype(jnp.bfloat16).reshape(C, 1)
    cls3, seg3 = head_pool_fc_seg_mask(enc_flat, seg_w_col, params["seg_b"],
                                       params["fc_w"], params["fc_b"])
    cls = cls3.reshape(B, NUM_CLASSES)

    # nearest-neighbour upsample of the (already masked) 1-channel map as a
    # single broadcast + reshape; the per-batch mask commutes with upsampling.
    seg_lo = seg3.reshape(B, Hf, Wf)
    sh, sw = H // Hf, W // Wf
    seg = jnp.broadcast_to(seg_lo[:, :, None, :, None],
                           (B, Hf, sh, Wf, sw)).reshape(B, H, W)
    return seg[:, None, :, :], cls


# pure-JAX reference of the same simplified network (mirrors bf16 cast points)
def _ref_forward(params, x_nchw):
    dn = ("NHWC", "HWIO", "NHWC")
    B, _, H, W = x_nchw.shape
    x = jnp.transpose(x_nchw, (0, 2, 3, 1)).astype(jnp.bfloat16)

    h1 = lax.conv_general_dilated(
        x, params["c1_w"].astype(jnp.bfloat16), (2, 2), ((1, 1), (1, 1)),
        dimension_numbers=dn, preferred_element_type=jnp.float32)
    h1 = jnp.maximum(h1 + params["c1_b"], 0.0).astype(jnp.bfloat16)

    enc = lax.conv_general_dilated(
        h1, params["c2_w"].astype(jnp.bfloat16), (2, 2), ((1, 1), (1, 1)),
        dimension_numbers=dn, preferred_element_type=jnp.float32)
    enc = jnp.maximum(enc + params["c2_b"], 0.0).astype(jnp.bfloat16)

    _, Hf, Wf, C = enc.shape
    seg_logit = jnp.dot(enc.reshape(-1, C),
                        params["seg_w"].astype(jnp.bfloat16).reshape(C, 1),
                        preferred_element_type=jnp.float32).reshape(B, Hf, Wf)
    seg_lo = jax.nn.sigmoid(seg_logit + params["seg_b"][0])
    seg = jnp.repeat(jnp.repeat(seg_lo, H // Hf, axis=1),
                     W // Wf, axis=2)[:, None, :, :]

    pooled = jnp.mean(enc.astype(jnp.float32).reshape(B, Hf * Wf, C), axis=1)
    cls = pooled @ params["fc_w"] + params["fc_b"]
    normal = (jnp.argmax(cls, axis=1) == 0).astype(jnp.float32)[:, None, None, None]
    return seg * (1.0 - normal), cls


if __name__ == "__main__":
    x = jax.random.normal(jax.random.PRNGKey(0), (2, 1, 16, 16), jnp.float32)
    params = init_params(jax.random.PRNGKey(42))

    fwd = jax.jit(multitask_forward)
    seg_out, cls_out = fwd(params, x)
    seg_out = jax.block_until_ready(seg_out)
    cls_out = jax.block_until_ready(cls_out)

    assert seg_out.shape == (2, 1, 16, 16)
    assert cls_out.shape == (2, NUM_CLASSES)

    seg_ref, cls_ref = _ref_forward(params, x)
    assert jnp.allclose(cls_out, cls_ref, atol=5e-3, rtol=5e-3), \
        float(jnp.max(jnp.abs(cls_out - cls_ref)))
    assert jnp.allclose(seg_out, seg_ref, atol=5e-3, rtol=5e-3), \
        float(jnp.max(jnp.abs(seg_out - seg_ref)))

    print("KERNEL_OK")
</pallas_src>

<mosaic_0001>
module attributes {stable_mosaic.version = 11 : i64} {
  func.func @_conv1_kernel(%arg0: i32, %arg1: memref<128x9xbf16, #tpu.memory_space<vmem>>, %arg2: memref<9x64xbf16, #tpu.memory_space<vmem>>, %arg3: memref<1x64xf32, #tpu.memory_space<vmem>>, %arg4: memref<128x64xbf16, #tpu.memory_space<vmem>>) attributes {dimension_semantics = [#tpu.dimension_semantics<parallel>], iteration_bounds = array<i64: 1>, scalar_prefetch = 0 : i64, scratch_operands = 0 : i64, tpu.core_type = #tpu.core_type<tc>, window_params = [{transform_indices = @transform_0, window_bounds = array<i64: 128, 9>}, {pipeline_mode = #tpu.pipeline_mode<synchronous>, transform_indices = @transform_1, window_bounds = array<i64: 9, 64>}, {pipeline_mode = #tpu.pipeline_mode<synchronous>, transform_indices = @transform_2, window_bounds = array<i64: 1, 64>}, {transform_indices = @transform_3, window_bounds = array<i64: 128, 64>}]} {
    %c0 = arith.constant 0 : index
    %c0_0 = arith.constant 0 : index
    %0 = vector.load %arg1[%c0, %c0_0] : memref<128x9xbf16, #tpu.memory_space<vmem>>, vector<128x9xbf16>
    %1 = arith.extf %0 : vector<128x9xbf16> to vector<128x9xf32>
    %c0_1 = arith.constant 0 : index
    %c0_2 = arith.constant 0 : index
    %2 = vector.load %arg2[%c0_1, %c0_2] : memref<9x64xbf16, #tpu.memory_space<vmem>>, vector<9x64xbf16>
    %3 = arith.extf %2 : vector<9x64xbf16> to vector<9x64xf32>
    %cst = arith.constant 0.000000e+00 : f32
    %4 = vector.broadcast %cst : f32 to vector<128x64xf32>
    %5 = vector.extract_strided_slice %1 {offsets = [0, 0], sizes = [128, 1], strides = [1, 1]} : vector<128x9xf32> to vector<128x1xf32>
    %6 = vector.extract_strided_slice %3 {offsets = [0, 0], sizes = [1, 64], strides = [1, 1]} : vector<9x64xf32> to vector<1x64xf32>
    %7 = vector.broadcast %5 : vector<128x1xf32> to vector<128x64xf32>
    %8 = vector.broadcast %6 : vector<1x64xf32> to vector<128x64xf32>
    %9 = arith.mulf %7, %8 : vector<128x64xf32>
    %10 = arith.addf %4, %9 : vector<128x64xf32>
    %11 = vector.extract_strided_slice %1 {offsets = [0, 1], sizes = [128, 1], strides = [1, 1]} : vector<128x9xf32> to vector<128x1xf32>
    %12 = vector.extract_strided_slice %3 {offsets = [1, 0], sizes = [1, 64], strides = [1, 1]} : vector<9x64xf32> to vector<1x64xf32>
    %13 = vector.broadcast %11 : vector<128x1xf32> to vector<128x64xf32>
    %14 = vector.broadcast %12 : vector<1x64xf32> to vector<128x64xf32>
    %15 = arith.mulf %13, %14 : vector<128x64xf32>
    %16 = arith.addf %10, %15 : vector<128x64xf32>
    %17 = vector.extract_strided_slice %1 {offsets = [0, 2], sizes = [128, 1], strides = [1, 1]} : vector<128x9xf32> to vector<128x1xf32>
    %18 = vector.extract_strided_slice %3 {offsets = [2, 0], sizes = [1, 64], strides = [1, 1]} : vector<9x64xf32> to vector<1x64xf32>
    %19 = vector.broadcast %17 : vector<128x1xf32> to vector<128x64xf32>
    %20 = vector.broadcast %18 : vector<1x64xf32> to vector<128x64xf32>
    %21 = arith.mulf %19, %20 : vector<128x64xf32>
    %22 = arith.addf %16, %21 : vector<128x64xf32>
    %23 = vector.extract_strided_slice %1 {offsets = [0, 3], sizes = [128, 1], strides = [1, 1]} : vector<128x9xf32> to vector<128x1xf32>
    %24 = vector.extract_strided_slice %3 {offsets = [3, 0], sizes = [1, 64], strides = [1, 1]} : vector<9x64xf32> to vector<1x64xf32>
    %25 = vector.broadcast %23 : vector<128x1xf32> to vector<128x64xf32>
    %26 = vector.broadcast %24 : vector<1x64xf32> to vector<128x64xf32>
    %27 = arith.mulf %25, %26 : vector<128x64xf32>
    %28 = arith.addf %22, %27 : vector<128x64xf32>
    %29 = vector.extract_strided_slice %1 {offsets = [0, 4], sizes = [128, 1], strides = [1, 1]} : vector<128x9xf32> to vector<128x1xf32>
    %30 = vector.extract_strided_slice %3 {offsets = [4, 0], sizes = [1, 64], strides = [1, 1]} : vector<9x64xf32> to vector<1x64xf32>
    %31 = vector.broadcast %29 : vector<128x1xf32> to vector<128x64xf32>
    %32 = vector.broadcast %30 : vector<1x64xf32> to vector<128x64xf32>
    %33 = arith.mulf %31, %32 : vector<128x64xf32>
    %34 = arith.addf %28, %33 : vector<128x64xf32>
    %35 = vector.extract_strided_slice %1 {offsets = [0, 5], sizes = [128, 1], strides = [1, 1]} : vector<128x9xf32> to vector<128x1xf32>
    %36 = vector.extract_strided_slice %3 {offsets = [5, 0], sizes = [1, 64], strides = [1, 1]} : vector<9x64xf32> to vector<1x64xf32>
    %37 = vector.broadcast %35 : vector<128x1xf32> to vector<128x64xf32>
    %38 = vector.broadcast %36 : vector<1x64xf32> to vector<128x64xf32>
    %39 = arith.mulf %37, %38 : vector<128x64xf32>
    %40 = arith.addf %34, %39 : vector<128x64xf32>
    %41 = vector.extract_strided_slice %1 {offsets = [0, 6], sizes = [128, 1], strides = [1, 1]} : vector<128x9xf32> to vector<128x1xf32>
    %42 = vector.extract_strided_slice %3 {offsets = [6, 0], sizes = [1, 64], strides = [1, 1]} : vector<9x64xf32> to vector<1x64xf32>
    %43 = vector.broadcast %41 : vector<128x1xf32> to vector<128x64xf32>
    %44 = vector.broadcast %42 : vector<1x64xf32> to vector<128x64xf32>
    %45 = arith.mulf %43, %44 : vector<128x64xf32>
    %46 = arith.addf %40, %45 : vector<128x64xf32>
    %47 = vector.extract_strided_slice %1 {offsets = [0, 7], sizes = [128, 1], strides = [1, 1]} : vector<128x9xf32> to vector<128x1xf32>
    %48 = vector.extract_strided_slice %3 {offsets = [7, 0], sizes = [1, 64], strides = [1, 1]} : vector<9x64xf32> to vector<1x64xf32>
    %49 = vector.broadcast %47 : vector<128x1xf32> to vector<128x64xf32>
    %50 = vector.broadcast %48 : vector<1x64xf32> to vector<128x64xf32>
    %51 = arith.mulf %49, %50 : vector<128x64xf32>
    %52 = arith.addf %46, %51 : vector<128x64xf32>
    %53 = vector.extract_strided_slice %1 {offsets = [0, 8], sizes = [128, 1], strides = [1, 1]} : vector<128x9xf32> to vector<128x1xf32>
    %54 = vector.extract_strided_slice %3 {offsets = [8, 0], sizes = [1, 64], strides = [1, 1]} : vector<9x64xf32> to vector<1x64xf32>
    %55 = vector.broadcast %53 : vector<128x1xf32> to vector<128x64xf32>
    %56 = vector.broadcast %54 : vector<1x64xf32> to vector<128x64xf32>
    %57 = arith.mulf %55, %56 : vector<128x64xf32>
    %58 = arith.addf %52, %57 : vector<128x64xf32>
    %c0_3 = arith.constant 0 : index
    %c0_4 = arith.constant 0 : index
    %59 = vector.load %arg3[%c0_3, %c0_4] : memref<1x64xf32, #tpu.memory_space<vmem>>, vector<1x64xf32>
    %60 = vector.broadcast %59 : vector<1x64xf32> to vector<128x64xf32>
    %61 = arith.addf %58, %60 : vector<128x64xf32>
    %cst_5 = arith.constant 0.000000e+00 : f32
    %62 = vector.broadcast %cst_5 : f32 to vector<128x64xf32>
    %63 = arith.maximumf %61, %62 : vector<128x64xf32>
    %64 = arith.truncf %63 : vector<128x64xf32> to vector<128x64xbf16>
    %c0_6 = arith.constant 0 : index
    %c0_7 = arith.constant 0 : index
    %65 = vector.load %arg4[%c0_6, %c0_7] : memref<128x64xbf16, #tpu.memory_space<vmem>>, vector<128x64xbf16>
    tpu.vector_store %arg4[%c0_6, %c0_7], %64 {strides = array<i32>} : memref<128x64xbf16, #tpu.memory_space<vmem>>, vector<128x64xbf16>,
    return
  }
  func.func @transform_0(%arg0: i32) -> (i32, i32) {
    %c0_i32 = arith.constant 0 : i32
    %c0_i32_0 = arith.constant 0 : i32
    return %arg0, %c0_i32 : i32, i32
  }
  func.func @transform_1(%arg0: i32) -> (i32, i32) {
    %c0_i32 = arith.constant 0 : i32
    %c0_i32_0 = arith.constant 0 : i32
    %c0_i32_1 = arith.constant 0 : i32
    return %c0_i32, %c0_i32_0 : i32, i32
  }
  func.func @transform_2(%arg0: i32) -> (i32, i32) {
    %c0_i32 = arith.constant 0 : i32
    %c0_i32_0 = arith.constant 0 : i32
    %c0_i32_1 = arith.constant 0 : i32
    return %c0_i32, %c0_i32_0 : i32, i32
  }
  func.func @transform_3(%arg0: i32) -> (i32, i32) {
    %c0_i32 = arith.constant 0 : i32
    %c0_i32_0 = arith.constant 0 : i32
    return %arg0, %c0_i32 : i32, i32
  }
}

module attributes {stable_mosaic.version = 11 : i64} {
  func.func @_conv2_kernel(%arg0: i32, %arg1: i32, %arg2: memref<1x1x1x5x128xbf16, #tpu.memory_space<vmem>>, %arg3: memref<1x1x1x5x128xbf16, #tpu.memory_space<vmem>>, %arg4: memref<1x1x1x5x128xbf16, #tpu.memory_space<vmem>>, %arg5: memref<3x2x128x512xbf16, #tpu.memory_space<vmem>>, %arg6: memref<1x512xf32, #tpu.memory_space<vmem>>, %arg7: memref<1x1x4x512xbf16, #tpu.memory_space<vmem>>) attributes {dimension_semantics = [#tpu.dimension_semantics<parallel>, #tpu.dimension_semantics<arbitrary>], iteration_bounds = array<i64: 2, 4>, scalar_prefetch = 0 : i64, scratch_operands = 0 : i64, tpu.core_type = #tpu.core_type<tc>, window_params = [{transform_indices = @transform_0, window_bounds = array<i64: 1, 1, 1, 5, 128>}, {transform_indices = @transform_1, window_bounds = array<i64: 1, 1, 1, 5, 128>}, {transform_indices = @transform_2, window_bounds = array<i64: 1, 1, 1, 5, 128>}, {pipeline_mode = #tpu.pipeline_mode<synchronous>, transform_indices = @transform_3, window_bounds = array<i64: 3, 2, 128, 512>}, {pipeline_mode = #tpu.pipeline_mode<synchronous>, transform_indices = @transform_4, window_bounds = array<i64: 1, 512>}, {transform_indices = @transform_5, window_bounds = array<i64: 1, 1, 4, 512>}]} {
    %cst = arith.constant 0.000000e+00 : f32
    %0 = vector.broadcast %cst : f32 to vector<4x512xf32>
    %c0 = arith.constant 0 : index
    %c0_0 = arith.constant 0 : index
    %c0_1 = arith.constant 0 : index
    %c0_2 = arith.constant 0 : index
    %c0_3 = arith.constant 0 : index
    %1 = vector.load %arg2[%c0, %c0_0, %c0_1, %c0_2, %c0_3] : memref<1x1x1x5x128xbf16, #tpu.memory_space<vmem>>, vector<1x1x1x5x128xbf16>
    %2 = vector.shape_cast %1 : vector<1x1x1x5x128xbf16> to vector<5x128xbf16>
    %3 = vector.extract_strided_slice %2 {offsets = [0, 0], sizes = [4, 128], strides = [1, 1]} : vector<5x128xbf16> to vector<4x128xbf16>
    %c0_4 = arith.constant 0 : index
    %c0_5 = arith.constant 0 : index
    %c0_6 = arith.constant 0 : index
    %c0_7 = arith.constant 0 : index
    %4 = vector.load %arg5[%c0_4, %c0_5, %c0_6, %c0_7] : memref<3x2x128x512xbf16, #tpu.memory_space<vmem>>, vector<1x1x128x512xbf16>
    %5 = vector.shape_cast %4 : vector<1x1x128x512xbf16> to vector<128x512xbf16>
    %cst_8 = arith.constant dense<0.000000e+00> : vector<4x512xf32>
    %6 = tpu.matmul %3, %5, %cst_8 {dimension_numbers = #tpu.dot_dimension_numbers<[1], [0], [0], [1], [0, 0, 1, 1], [], []>} : vector<4x128xbf16>, vector<128x512xbf16>, vector<4x512xf32> -> vector<4x512xf32>
    %7 = arith.addf %0, %6 : vector<4x512xf32>
    %8 = vector.extract_strided_slice %2 {offsets = [1, 0], sizes = [4, 128], strides = [1, 1]} : vector<5x128xbf16> to vector<4x128xbf16>
    %c0_9 = arith.constant 0 : index
    %c1 = arith.constant 1 : index
    %c0_10 = arith.constant 0 : index
    %c0_11 = arith.constant 0 : index
    %9 = vector.load %arg5[%c0_9, %c1, %c0_10, %c0_11] : memref<3x2x128x512xbf16, #tpu.memory_space<vmem>>, vector<1x1x128x512xbf16>
    %10 = vector.shape_cast %9 : vector<1x1x128x512xbf16> to vector<128x512xbf16>
    %cst_12 = arith.constant dense<0.000000e+00> : vector<4x512xf32>
    %11 = tpu.matmul %8, %10, %cst_12 {dimension_numbers = #tpu.dot_dimension_numbers<[1], [0], [0], [1], [0, 0, 1, 1], [], []>} : vector<4x128xbf16>, vector<128x512xbf16>, vector<4x512xf32> -> vector<4x512xf32>
    %12 = arith.addf %7, %11 : vector<4x512xf32>
    %c0_13 = arith.constant 0 : index
    %c0_14 = arith.constant 0 : index
    %c0_15 = arith.constant 0 : index
    %c0_16 = arith.constant 0 : index
    %c0_17 = arith.constant 0 : index
    %13 = vector.load %arg3[%c0_13, %c0_14, %c0_15, %c0_16, %c0_17] : memref<1x1x1x5x128xbf16, #tpu.memory_space<vmem>>, vector<1x1x1x5x128xbf16>
    %14 = vector.shape_cast %13 : vector<1x1x1x5x128xbf16> to vector<5x128xbf16>
    %15 = vector.extract_strided_slice %14 {offsets = [0, 0], sizes = [4, 128], strides = [1, 1]} : vector<5x128xbf16> to vector<4x128xbf16>
    %c1_18 = arith.constant 1 : index
    %c0_19 = arith.constant 0 : index
    %c0_20 = arith.constant 0 : index
    %c0_21 = arith.constant 0 : index
    %16 = vector.load %arg5[%c1_18, %c0_19, %c0_20, %c0_21] : memref<3x2x128x512xbf16, #tpu.memory_space<vmem>>, vector<1x1x128x512xbf16>
    %17 = vector.shape_cast %16 : vector<1x1x128x512xbf16> to vector<128x512xbf16>
    %cst_22 = arith.constant dense<0.000000e+00> : vector<4x512xf32>
    %18 = tpu.matmul %15, %17, %cst_22 {dimension_numbers = #tpu.dot_dimension_numbers<[1], [0], [0], [1], [0, 0, 1, 1], [], []>} : vector<4x128xbf16>, vector<128x512xbf16>, vector<4x512xf32> -> vector<4x512xf32>
    %19 = arith.addf %12, %18 : vector<4x512xf32>
    %20 = vector.extract_strided_slice %14 {offsets = [1, 0], sizes = [4, 128], strides = [1, 1]} : vector<5x128xbf16> to vector<4x128xbf16>
    %c1_23 = arith.constant 1 : index
    %c1_24 = arith.constant 1 : index
    %c0_25 = arith.constant 0 : index
    %c0_26 = arith.constant 0 : index
    %21 = vector.load %arg5[%c1_23, %c1_24, %c0_25, %c0_26] : memref<3x2x128x512xbf16, #tpu.memory_space<vmem>>, vector<1x1x128x512xbf16>
    %22 = vector.shape_cast %21 : vector<1x1x128x512xbf16> to vector<128x512xbf16>
    %cst_27 = arith.constant dense<0.000000e+00> : vector<4x512xf32>
    %23 = tpu.matmul %20, %22, %cst_27 {dimension_numbers = #tpu.dot_dimension_numbers<[1], [0], [0], [1], [0, 0, 1, 1], [], []>} : vector<4x128xbf16>, vector<128x512xbf16>, vector<4x512xf32> -> vector<4x512xf32>
    %24 = arith.addf %19, %23 : vector<4x512xf32>
    %c0_28 = arith.constant 0 : index
    %c0_29 = arith.constant 0 : index
    %c0_30 = arith.constant 0 : index
    %c0_31 = arith.constant 0 : index
    %c0_32 = arith.constant 0 : index
    %25 = vector.load %arg4[%c0_28, %c0_29, %c0_30, %c0_31, %c0_32] : memref<1x1x1x5x128xbf16, #tpu.memory_space<vmem>>, vector<1x1x1x5x128xbf16>
    %26 = vector.shape_cast %25 : vector<1x1x1x5x128xbf16> to vector<5x128xbf16>
    %27 = vector.extract_strided_slice %26 {offsets = [0, 0], sizes = [4, 128], strides = [1, 1]} : vector<5x128xbf16> to vector<4x128xbf16>
    %c2 = arith.constant 2 : index
    %c0_33 = arith.constant 0 : index
    %c0_34 = arith.constant 0 : index
    %c0_35 = arith.constant 0 : index
    %28 = vector.load %arg5[%c2, %c0_33, %c0_34, %c0_35] : memref<3x2x128x512xbf16, #tpu.memory_space<vmem>>, vector<1x1x128x512xbf16>
    %29 = vector.shape_cast %28 : vector<1x1x128x512xbf16> to vector<128x512xbf16>
    %cst_36 = arith.constant dense<0.000000e+00> : vector<4x512xf32>
    %30 = tpu.matmul %27, %29, %cst_36 {dimension_numbers = #tpu.dot_dimension_numbers<[1], [0], [0], [1], [0, 0, 1, 1], [], []>} : vector<4x128xbf16>, vector<128x512xbf16>, vector<4x512xf32> -> vector<4x512xf32>
    %31 = arith.addf %24, %30 : vector<4x512xf32>
    %32 = vector.extract_strided_slice %26 {offsets = [1, 0], sizes = [4, 128], strides = [1, 1]} : vector<5x128xbf16> to vector<4x128xbf16>
    %c2_37 = arith.constant 2 : index
    %c1_38 = arith.constant 1 : index
    %c0_39 = arith.constant 0 : index
    %c0_40 = arith.constant 0 : index
    %33 = vector.load %arg5[%c2_37, %c1_38, %c0_39, %c0_40] : memref<3x2x128x512xbf16, #tpu.memory_space<vmem>>, vector<1x1x128x512xbf16>
    %34 = vector.shape_cast %33 : vector<1x1x128x512xbf16> to vector<128x512xbf16>
    %cst_41 = arith.constant dense<0.000000e+00> : vector<4x512xf32>
    %35 = tpu.matmul %32, %34, %cst_41 {dimension_numbers = #tpu.dot_dimension_numbers<[1], [0], [0], [1], [0, 0, 1, 1], [], []>} : vector<4x128xbf16>, vector<128x512xbf16>, vector<4x512xf32> -> vector<4x512xf32>
    %36 = arith.addf %31, %35 : vector<4x512xf32>
    %c0_42 = arith.constant 0 : index
    %c0_43 = arith.constant 0 : index
    %37 = vector.load %arg6[%c0_42, %c0_43] : memref<1x512xf32, #tpu.memory_space<vmem>>, vector<1x512xf32>
    %38 = vector.broadcast %37 : vector<1x512xf32> to vector<4x512xf32>
    %39 = arith.addf %36, %38 : vector<4x512xf32>
    %cst_44 = arith.constant 0.000000e+00 : f32
    %40 = vector.broadcast %cst_44 : f32 to vector<4x512xf32>
    %41 = arith.maximumf %39, %40 : vector<4x512xf32>
    %42 = arith.truncf %41 : vector<4x512xf32> to vector<4x512xbf16>
    %c0_45 = arith.constant 0 : index
    %c0_46 = arith.constant 0 : index
    %c0_47 = arith.constant 0 : index
    %c0_48 = arith.constant 0 : index
    %43 = vector.load %arg7[%c0_45, %c0_46, %c0_47, %c0_48] : memref<1x1x4x512xbf16, #tpu.memory_space<vmem>>, vector<1x1x4x512xbf16>
    %44 = vector.shape_cast %43 : vector<1x1x4x512xbf16> to vector<4x512xbf16>
    %45 = vector.shape_cast %42 : vector<4x512xbf16> to vector<1x1x4x512xbf16>
    tpu.vector_store %arg7[%c0_45, %c0_46, %c0_47, %c0_48], %45 {strides = array<i32>} : memref<1x1x4x512xbf16, #tpu.memory_space<vmem>>, vector<1x1x4x512xbf16>,
    return
  }
  func.func @transform_0(%arg0: i32, %arg1: i32) -> (i32, i32, i32, i32, i32) {
    %c0_i32 = arith.constant 0 : i32
    %0 = arith.addi %arg1, %c0_i32 : i32
    %c0_i32_0 = arith.constant 0 : i32
    %c0_i32_1 = arith.constant 0 : i32
    %c0_i32_2 = arith.constant 0 : i32
    %c0_i32_3 = arith.constant 0 : i32
    return %arg0, %0, %c0_i32_0, %c0_i32_1, %c0_i32_2 : i32, i32, i32, i32, i32
  }
  func.func @transform_1(%arg0: i32, %arg1: i32) -> (i32, i32, i32, i32, i32) {
    %c0_i32 = arith.constant 0 : i32
    %0 = arith.addi %arg1, %c0_i32 : i32
    %c1_i32 = arith.constant 1 : i32
    %c0_i32_0 = arith.constant 0 : i32
    %c0_i32_1 = arith.constant 0 : i32
    %c0_i32_2 = arith.constant 0 : i32
    return %arg0, %0, %c1_i32, %c0_i32_0, %c0_i32_1 : i32, i32, i32, i32, i32
  }
  func.func @transform_2(%arg0: i32, %arg1: i32) -> (i32, i32, i32, i32, i32) {
    %c1_i32 = arith.constant 1 : i32
    %0 = arith.addi %arg1, %c1_i32 : i32
    %c0_i32 = arith.constant 0 : i32
    %c0_i32_0 = arith.constant 0 : i32
    %c0_i32_1 = arith.constant 0 : i32
    %c0_i32_2 = arith.constant 0 : i32
    return %arg0, %0, %c0_i32, %c0_i32_0, %c0_i32_1 : i32, i32, i32, i32, i32
  }
  func.func @transform_3(%arg0: i32, %arg1: i32) -> (i32, i32, i32, i32) {
    %c0_i32 = arith.constant 0 : i32
    %c0_i32_0 = arith.constant 0 : i32
    %c0_i32_1 = arith.constant 0 : i32
    %c0_i32_2 = arith.constant 0 : i32
    %c0_i32_3 = arith.constant 0 : i32
    return %c0_i32, %c0_i32_0, %c0_i32_1, %c0_i32_2 : i32, i32, i32, i32
  }
  func.func @transform_4(%arg0: i32, %arg1: i32) -> (i32, i32) {
    %c0_i32 = arith.constant 0 : i32
    %c0_i32_0 = arith.constant 0 : i32
    %c0_i32_1 = arith.constant 0 : i32
    return %c0_i32, %c0_i32_0 : i32, i32
  }
  func.func @transform_5(%arg0: i32, %arg1: i32) -> (i32, i32, i32, i32) {
    %c0_i32 = arith.constant 0 : i32
    %c0_i32_0 = arith.constant 0 : i32
    %c0_i32_1 = arith.constant 0 : i32
    return %arg0, %arg1, %c0_i32, %c0_i32_0 : i32, i32, i32, i32
  }
}

module attributes {stable_mosaic.version = 11 : i64} {
  func.func @_head_kernel(%arg0: i32, %arg1: i32, %arg2: memref<1x16x512xbf16, #tpu.memory_space<vmem>>, %arg3: memref<512x1xbf16, #tpu.memory_space<vmem>>, %arg4: memref<1x1xf32, #tpu.memory_space<vmem>>, %arg5: memref<512x3xf32, #tpu.memory_space<vmem>>, %arg6: memref<1x3xf32, #tpu.memory_space<vmem>>, %arg7: memref<1x1x3xf32, #tpu.memory_space<vmem>>, %arg8: memref<1x16x1xf32, #tpu.memory_space<vmem>>, %arg9: memref<1x512xf32, #tpu.memory_space<vmem>>) attributes {dimension_semantics = [#tpu.dimension_semantics<parallel>, #tpu.dimension_semantics<arbitrary>], iteration_bounds = array<i64: 2, 1>, scalar_prefetch = 0 : i64, scratch_operands = 1 : i64, tpu.core_type = #tpu.core_type<tc>, window_params = [{transform_indices = @transform_0, window_bounds = array<i64: 1, 16, 512>}, {pipeline_mode = #tpu.pipeline_mode<synchronous>, transform_indices = @transform_1, window_bounds = array<i64: 512, 1>}, {pipeline_mode = #tpu.pipeline_mode<synchronous>, transform_indices = @transform_2, window_bounds = array<i64: 1, 1>}, {pipeline_mode = #tpu.pipeline_mode<synchronous>, transform_indices = @transform_3, window_bounds = array<i64: 512, 3>}, {pipeline_mode = #tpu.pipeline_mode<synchronous>, transform_indices = @transform_4, window_bounds = array<i64: 1, 3>}, {transform_indices = @transform_5, window_bounds = array<i64: 1, 1, 3>}, {transform_indices = @transform_6, window_bounds = array<i64: 1, 16, 1>}]} {
    %c0_i32 = arith.constant 0 : i32
    %0 = arith.cmpi eq, %arg1, %c0_i32 : i32
    %1 = arith.extui %0 : i1 to i32
    %c0_i32_0 = arith.constant 0 : i32
    %2 = arith.cmpi ne, %1, %c0_i32_0 : i32
    scf.if %2 {
      %cst_17 = arith.constant 0.000000e+00 : f32
      %30 = vector.broadcast %cst_17 : f32 to vector<1x512xf32>
      %c0_18 = arith.constant 0 : index
      %c0_19 = arith.constant 0 : index
      %31 = vector.load %arg9[%c0_18, %c0_19] : memref<1x512xf32, #tpu.memory_space<vmem>>, vector<1x512xf32>
      tpu.vector_store %arg9[%c0_18, %c0_19], %30 {strides = array<i32>} : memref<1x512xf32, #tpu.memory_space<vmem>>, vector<1x512xf32>,
    } else {
    }
    %c0 = arith.constant 0 : index
    %c0_1 = arith.constant 0 : index
    %c0_2 = arith.constant 0 : index
    %3 = vector.load %arg2[%c0, %c0_1, %c0_2] : memref<1x16x512xbf16, #tpu.memory_space<vmem>>, vector<1x16x512xbf16>
    %4 = vector.shape_cast %3 : vector<1x16x512xbf16> to vector<16x512xbf16>
    %c0_3 = arith.constant 0 : index
    %c0_4 = arith.constant 0 : index
    %5 = vector.load %arg9[%c0_3, %c0_4] : memref<1x512xf32, #tpu.memory_space<vmem>>, vector<1x512xf32>
    %6 = arith.extf %4 : vector<16x512xbf16> to vector<16x512xf32>
    %cst = arith.constant dense<0.000000e+00> : vector<512xf32>
    %7 = vector.multi_reduction <add>, %6, %cst [0] : vector<16x512xf32> to vector<512xf32>
    %8 = vector.shape_cast %7 : vector<512xf32> to vector<1x512xf32>
    %9 = arith.addf %5, %8 : vector<1x512xf32>
    %c0_5 = arith.constant 0 : index
    %c0_6 = arith.constant 0 : index
    %10 = vector.load %arg9[%c0_5, %c0_6] : memref<1x512xf32, #tpu.memory_space<vmem>>, vector<1x512xf32>
    tpu.vector_store %arg9[%c0_5, %c0_6], %9 {strides = array<i32>} : memref<1x512xf32, #tpu.memory_space<vmem>>, vector<1x512xf32>,
    %c0_7 = arith.constant 0 : index
    %c0_8 = arith.constant 0 : index
    %11 = vector.load %arg3[%c0_7, %c0_8] : memref<512x1xbf16, #tpu.memory_space<vmem>>, vector<512x1xbf16>
    %cst_9 = arith.constant dense<0.000000e+00> : vector<16x1xf32>
    %12 = tpu.matmul %4, %11, %cst_9 {dimension_numbers = #tpu.dot_dimension_numbers<[1], [0], [0], [1], [0, 0, 1, 1], [], []>} : vector<16x512xbf16>, vector<512x1xbf16>, vector<16x1xf32> -> vector<16x1xf32>
    %c0_10 = arith.constant 0 : index
    %c0_11 = arith.constant 0 : index
    %13 = vector.load %arg4[%c0_10, %c0_11] : memref<1x1xf32, #tpu.memory_space<vmem>>, vector<1x1xf32>
    %14 = vector.broadcast %13 : vector<1x1xf32> to vector<16x1xf32>
    %15 = arith.addf %12, %14 : vector<16x1xf32>
    %c16_i32 = arith.constant 16 : i32
    %16 = arith.muli %arg1, %c16_i32 : i32
    %17 = tpu.assume_multiple %16, 16 : i32
    %18 = arith.negf %15 : vector<16x1xf32>
    %19 = math.exp %18 : vector<16x1xf32>
    %cst_12 = arith.constant 1.000000e+00 : f32
    %20 = vector.broadcast %cst_12 : f32 to vector<16x1xf32>
    %21 = arith.addf %20, %19 : vector<16x1xf32>
    %22 = arith.divf %20, %21 : vector<16x1xf32>
    %c0_13 = arith.constant 0 : index
    %23 = arith.index_cast %17 : i32 to index
    %c0_14 = arith.constant 0 : index
    %24 = vector.load %arg8[%c0_13, %23, %c0_14] : memref<1x16x1xf32, #tpu.memory_space<vmem>>, vector<1x16x1xf32>
    %25 = vector.shape_cast %24 : vector<1x16x1xf32> to vector<16x1xf32>
    %26 = vector.shape_cast %22 : vector<16x1xf32> to vector<1x16x1xf32>
    tpu.vector_store %arg8[%c0_13, %23, %c0_14], %26 {strides = array<i32>} : memref<1x16x1xf32, #tpu.memory_space<vmem>>, vector<1x16x1xf32>,
    %c0_i32_15 = arith.constant 0 : i32
    %27 = arith.cmpi eq, %arg1, %c0_i32_15 : i32
    %28 = arith.extui %27 : i1 to i32
    %c0_i32_16 = arith.constant 0 : i32
    %29 = arith.cmpi ne, %28, %c0_i32_16 : i32
    scf.if %29 {
      %c0_17 = arith.constant 0 : index
      %c0_18 = arith.constant 0 : index
      %30 = vector.load %arg9[%c0_17, %c0_18] : memref<1x512xf32, #tpu.memory_space<vmem>>, vector<1x512xf32>
      %cst_19 = arith.constant 6.250000e-02 : f32
      %31 = vector.broadcast %cst_19 : f32 to vector<1x512xf32>
      %32 = arith.mulf %30, %31 : vector<1x512xf32>
      %c0_20 = arith.constant 0 : index
      %c0_21 = arith.constant 0 : index
      %33 = vector.load %arg5[%c0_20, %c0_21] : memref<512x3xf32, #tpu.memory_space<vmem>>, vector<512x3xf32>
      %cst_22 = arith.constant dense<0.000000e+00> : vector<1x3xf32>
      %34 = tpu.matmul %32, %33, %cst_22 {dimension_numbers = #tpu.dot_dimension_numbers<[1], [0], [0], [1], [0, 0, 1, 1], [], []>} : vector<1x512xf32>, vector<512x3xf32>, vector<1x3xf32> -> vector<1x3xf32>
      %c0_23 = arith.constant 0 : index
      %c0_24 = arith.constant 0 : index
      %35 = vector.load %arg6[%c0_23, %c0_24] : memref<1x3xf32, #tpu.memory_space<vmem>>, vector<1x3xf32>
      %36 = arith.addf %34, %35 : vector<1x3xf32>
      %c0_25 = arith.constant 0 : index
      %c0_26 = arith.constant 0 : index
      %c0_27 = arith.constant 0 : index
      %37 = vector.load %arg7[%c0_25, %c0_26, %c0_27] : memref<1x1x3xf32, #tpu.memory_space<vmem>>, vector<1x1x3xf32>
      %38 = vector.shape_cast %37 : vector<1x1x3xf32> to vector<1x3xf32>
      %39 = vector.shape_cast %36 : vector<1x3xf32> to vector<1x1x3xf32>
      tpu.vector_store %arg7[%c0_25, %c0_26, %c0_27], %39 {strides = array<i32>} : memref<1x1x3xf32, #tpu.memory_space<vmem>>, vector<1x1x3xf32>,
      %cst_28 = arith.constant dense<0xFF800000> : vector<1xf32>
      %40 = vector.multi_reduction <maximumf>, %36, %cst_28 [1] : vector<1x3xf32> to vector<1xf32>
      %41 = vector.shape_cast %40 : vector<1xf32> to vector<1x1xf32>
      %42 = vector.extract_strided_slice %36 {offsets = [0, 0], sizes = [1, 1], strides = [1, 1]} : vector<1x3xf32> to vector<1x1xf32>
      %43 = arith.cmpf oge, %42, %41 : vector<1x1xf32>
      %44 = arith.extui %43 : vector<1x1xi1> to vector<1x1xi32>
      %45 = arith.sitofp %44 : vector<1x1xi32> to vector<1x1xf32>
      %c0_29 = arith.constant 0 : index
      %c0_30 = arith.constant 0 : index
      %c0_31 = arith.constant 0 : index
      %46 = vector.load %arg8[%c0_29, %c0_30, %c0_31] : memref<1x16x1xf32, #tpu.memory_space<vmem>>, vector<1x16x1xf32>
      %47 = vector.extract %45[0, 0] : f32 from vector<1x1xf32>
      %cst_32 = arith.constant 1.000000e+00 : f32
      %48 = arith.subf %cst_32, %47 : f32
      %49 = vector.broadcast %48 : f32 to vector<1x16x1xf32>
      %50 = arith.mulf %46, %49 : vector<1x16x1xf32>
      %c0_33 = arith.constant 0 : index
      %c0_34 = arith.constant 0 : index
      %c0_35 = arith.constant 0 : index
      %51 = vector.load %arg8[%c0_33, %c0_34, %c0_35] : memref<1x16x1xf32, #tpu.memory_space<vmem>>, vector<1x16x1xf32>
      tpu.vector_store %arg8[%c0_33, %c0_34, %c0_35], %50 {strides = array<i32>} : memref<1x16x1xf32, #tpu.memory_space<vmem>>, vector<1x16x1xf32>,
    } else {
    }
    return
  }
  func.func @transform_0(%arg0: i32, %arg1: i32) -> (i32, i32, i32) {
    %c0_i32 = arith.constant 0 : i32
    %c0_i32_0 = arith.constant 0 : i32
    return %arg0, %arg1, %c0_i32 : i32, i32, i32
  }
  func.func @transform_1(%arg0: i32, %arg1: i32) -> (i32, i32) {
    %c0_i32 = arith.constant 0 : i32
    %c0_i32_0 = arith.constant 0 : i32
    %c0_i32_1 = arith.constant 0 : i32
    return %c0_i32, %c0_i32_0 : i32, i32
  }
  func.func @transform_2(%arg0: i32, %arg1: i32) -> (i32, i32) {
    %c0_i32 = arith.constant 0 : i32
    %c0_i32_0 = arith.constant 0 : i32
    %c0_i32_1 = arith.constant 0 : i32
    return %c0_i32, %c0_i32_0 : i32, i32
  }
  func.func @transform_3(%arg0: i32, %arg1: i32) -> (i32, i32) {
    %c0_i32 = arith.constant 0 : i32
    %c0_i32_0 = arith.constant 0 : i32
    %c0_i32_1 = arith.constant 0 : i32
    return %c0_i32, %c0_i32_0 : i32, i32
  }
  func.func @transform_4(%arg0: i32, %arg1: i32) -> (i32, i32) {
    %c0_i32 = arith.constant 0 : i32
    %c0_i32_0 = arith.constant 0 : i32
    %c0_i32_1 = arith.constant 0 : i32
    return %c0_i32, %c0_i32_0 : i32, i32
  }
  func.func @transform_5(%arg0: i32, %arg1: i32) -> (i32, i32, i32) {
    %c0_i32 = arith.constant 0 : i32
    %c0_i32_0 = arith.constant 0 : i32
    %c0_i32_1 = arith.constant 0 : i32
    return %arg0, %c0_i32, %c0_i32_0 : i32, i32, i32
  }
  func.func @transform_6(%arg0: i32, %arg1: i32) -> (i32, i32, i32) {
    %c0_i32 = arith.constant 0 : i32
    %c0_i32_0 = arith.constant 0 : i32
    %c0_i32_1 = arith.constant 0 : i32
    return %arg0, %c0_i32, %c0_i32_0 : i32, i32, i32
  }
}

</mosaic_0001>

<llo_original>
// kernel: multitask_forward.3
$region0: #{multitask_forward.3}
  #allocation0 [shape = 'u32[]', space=smem, size = 0x4, offset = 0x4, fixed_abs, tag = 'smem constant byte address 0x4 - core index']
  #allocation1 [shape = 'u32[144,128]{1,0:T(1,128)}', space=vmem, size = 0x12000, scoped, tag = 'internal scratch']
  %s0 = inlined_call_operand.vmem [shape: bf16[128,9], index: 0, kind: input, shape index: {}]
  %s1 = inlined_call_operand.vmem [shape: bf16[9,64], index: 1, kind: input, shape index: {}]
  %s2 = inlined_call_operand.vmem [shape: f32[1,64], index: 2, kind: input, shape index: {}]
  %s3 = inlined_call_operand.vmem [shape: bf16[128,64], index: 3, kind: output, shape index: {}]
  %s4 = sld [smem:[#allocation0]]
  $region22: #{multitask_forward.3} parent=0
    _
  %s6 = ssub.s32 1, %s4
  %s7 = scalar_select 0, %s6, %s4
  // Predicated region
  $region2: #{multitask_forward.3} parent=0 // pred_check
    _
  $region3: #{multitask_forward.3} parent=0 // pred_check_branch
    %9 = sbr.rel (0) target = $region5
  $region4: #{multitask_forward.3} parent=0 // pred_region
    _
  $region5: #{multitask_forward.3} parent=0 // pred_fallthru
    _
  // Predicated region
  $region6: #{multitask_forward.3} parent=0 // pred_check
    _
  $region7: #{multitask_forward.3} parent=0 // pred_check_branch
    %11 = sbr.rel (0) target = $region9
  $region8: #{multitask_forward.3} parent=0 // pred_region
    _
  $region9: #{multitask_forward.3} parent=0 // pred_fallthru
    _
  // Predicated region
  $region10: #{multitask_forward.3} parent=0 // pred_check
    _
  $region11: #{multitask_forward.3} parent=0 // pred_check_branch
    %13 = sbr.rel (0) target = $region13
  $region12: #{multitask_forward.3} parent=0 // pred_region
    _
  $region13: #{multitask_forward.3} parent=0 // pred_fallthru
    _
  %v14 = vld [vmem:[%s0] sm:$0xf]
  %v15 = vld [vmem:[%s0 + $0x4] sm:$0xf]
  %v16 = vld [vmem:[%s0 + $0x8] sm:$0xf]
  %v17 = vld [vmem:[%s0 + $0xc] sm:$0xf]
  %v18 = vld [vmem:[%s0 + $0x10] sm:$0xf]
  %v19 = vld [vmem:[%s0 + $0x14] sm:$0xf]
  %v20 = vld [vmem:[%s0 + $0x18] sm:$0xf]
  %v21 = vld [vmem:[%s0 + $0x1c] sm:$0xf]
  %v22 = vld [vmem:[%s0 + $0x20] sm:$0xf]
  %v23 = vld [vmem:[%s0 + $0x24] sm:$0xf]
  %v24 = vld [vmem:[%s0 + $0x28] sm:$0xf]
  %v25 = vld [vmem:[%s0 + $0x2c] sm:$0xf]
  %v26 = vld [vmem:[%s0 + $0x30] sm:$0xf]
  %v27 = vld [vmem:[%s0 + $0x34] sm:$0xf]
  %v28 = vld [vmem:[%s0 + $0x38] sm:$0xf]
  %v29 = vld [vmem:[%s0 + $0x3c] sm:$0xf]
  %v30 = vunpack.c.l.bf16 %v14
  %v31 = vunpack.c.l.bf16 %v15
  %v32 = vunpack.c.l.bf16 %v16
  %v33 = vunpack.c.l.bf16 %v17
  %v34 = vunpack.c.l.bf16 %v18
  %v35 = vunpack.c.l.bf16 %v19
  %v36 = vunpack.c.l.bf16 %v20
  %v37 = vunpack.c.l.bf16 %v21
  %v38 = vunpack.c.l.bf16 %v22
  %v39 = vunpack.c.l.bf16 %v23
  %v40 = vunpack.c.l.bf16 %v24
  %v41 = vunpack.c.l.bf16 %v25
  %v42 = vunpack.c.l.bf16 %v26
  %v43 = vunpack.c.l.bf16 %v27
  %v44 = vunpack.c.l.bf16 %v28
  %v45 = vunpack.c.l.bf16 %v29
  %v46 = vld [vmem:[%s1] sm:$0xf]
  %v47 = vld [vmem:[%s1 + $0x4] sm:$0x1]
  %v48 = vunpack.c.l.bf16 %v46
  %v49 = vunpack.c.l.bf16 %v47
  %51 = vset.pattern.permute.xlu0 0
  %52 = vperm.xlu0 %51, %v30
  %v53 = vpop.permute.xlu0 %52
  %56 = vset.pattern.permute.xlu0 0
  %57 = vperm.xlu0 %56, %v31
  %v58 = vpop.permute.xlu0 %57
  %61 = vset.pattern.permute.xlu0 0
  %62 = vperm.xlu0 %61, %v32
  %v63 = vpop.permute.xlu0 %62
  %66 = vset.pattern.permute.xlu0 0
  %67 = vperm.xlu0 %66, %v33
  %v68 = vpop.permute.xlu0 %67
  %71 = vset.pattern.permute.xlu0 0
  %72 = vperm.xlu0 %71, %v34
  %v73 = vpop.permute.xlu0 %72
  %76 = vset.pattern.permute.xlu0 0
  %77 = vperm.xlu0 %76, %v35
  %v78 = vpop.permute.xlu0 %77
  %81 = vset.pattern.permute.xlu0 0
  %82 = vperm.xlu0 %81, %v36
  %v83 = vpop.permute.xlu0 %82
  %86 = vset.pattern.permute.xlu0 0
  %87 = vperm.xlu0 %86, %v37
  %v88 = vpop.permute.xlu0 %87
  %91 = vset.pattern.permute.xlu0 0
  %92 = vperm.xlu0 %91, %v38
  %v93 = vpop.permute.xlu0 %92
  %96 = vset.pattern.permute.xlu0 0
  %97 = vperm.xlu0 %96, %v39
  %v98 = vpop.permute.xlu0 %97
  %101 = vset.pattern.permute.xlu0 0
  %102 = vperm.xlu0 %101, %v40
  %v103 = vpop.permute.xlu0 %102
  %106 = vset.pattern.permute.xlu0 0
  %107 = vperm.xlu0 %106, %v41
  %v108 = vpop.permute.xlu0 %107
  %111 = vset.pattern.permute.xlu0 0
  %112 = vperm.xlu0 %111, %v42
  %v113 = vpop.permute.xlu0 %112
  %116 = vset.pattern.permute.xlu0 0
  %117 = vperm.xlu0 %116, %v43
  %v118 = vpop.permute.xlu0 %117
  %121 = vset.pattern.permute.xlu0 0
  %122 = vperm.xlu0 %121, %v44
  %v123 = vpop.permute.xlu0 %122
  %126 = vset.pattern.permute.xlu0 0
  %127 = vperm.xlu0 %126, %v45
  %v128 = vpop.permute.xlu0 %127
  %v130 = vlaneseq
  %v131 = vshrl.u32 %v130, 7
  %v132 = vsub.s32 0, %v131
  %v133 = vrot.slane %v48, %v132
  %v134 = vmul.f32 %v53, %v133
  %v135 = vmul.f32 %v58, %v133
  %v136 = vmul.f32 %v63, %v133
  %v137 = vmul.f32 %v68, %v133
  %v138 = vmul.f32 %v73, %v133
  %v139 = vmul.f32 %v78, %v133
  %v140 = vmul.f32 %v83, %v133
  %v141 = vmul.f32 %v88, %v133
  %v142 = vmul.f32 %v93, %v133
  %v143 = vmul.f32 %v98, %v133
  %v144 = vmul.f32 %v103, %v133
  %v145 = vmul.f32 %v108, %v133
  %v146 = vmul.f32 %v113, %v133
  %v147 = vmul.f32 %v118, %v133
  %v148 = vmul.f32 %v123, %v133
  %v149 = vmul.f32 %v128, %v133
  %v150 = vadd.f32 %v134, 0.0
  %v151 = vadd.f32 %v135, 0.0
  %v152 = vadd.f32 %v136, 0.0
  %v153 = vadd.f32 %v137, 0.0
  %v154 = vadd.f32 %v138, 0.0
  %v155 = vadd.f32 %v139, 0.0
  %v156 = vadd.f32 %v140, 0.0
  %v157 = vadd.f32 %v141, 0.0
  %v158 = vadd.f32 %v142, 0.0
  %v159 = vadd.f32 %v143, 0.0
  %v160 = vadd.f32 %v144, 0.0
  %v161 = vadd.f32 %v145, 0.0
  %v162 = vadd.f32 %v146, 0.0
  %v163 = vadd.f32 %v147, 0.0
  %v164 = vadd.f32 %v148, 0.0
  %v165 = vadd.f32 %v149, 0.0
  %166 = vset.pattern.permute.xlu0 1
  %167 = vperm.xlu0 %166, %v30
  %v168 = vpop.permute.xlu0 %167
  %170 = vset.pattern.permute.xlu0 1
  %171 = vperm.xlu0 %170, %v31
  %v172 = vpop.permute.xlu0 %171
  %174 = vset.pattern.permute.xlu0 1
  %175 = vperm.xlu0 %174, %v32
  %v176 = vpop.permute.xlu0 %175
  %178 = vset.pattern.permute.xlu0 1
  %179 = vperm.xlu0 %178, %v33
  %v180 = vpop.permute.xlu0 %179
  %182 = vset.pattern.permute.xlu0 1
  %183 = vperm.xlu0 %182, %v34
  %v184 = vpop.permute.xlu0 %183
  %186 = vset.pattern.permute.xlu0 1
  %187 = vperm.xlu0 %186, %v35
  %v188 = vpop.permute.xlu0 %187
  %190 = vset.pattern.permute.xlu0 1
  %191 = vperm.xlu0 %190, %v36
  %v192 = vpop.permute.xlu0 %191
  %194 = vset.pattern.permute.xlu0 1
  %195 = vperm.xlu0 %194, %v37
  %v196 = vpop.permute.xlu0 %195
  %198 = vset.pattern.permute.xlu0 1
  %199 = vperm.xlu0 %198, %v38
  %v200 = vpop.permute.xlu0 %199
  %202 = vset.pattern.permute.xlu0 1
  %203 = vperm.xlu0 %202, %v39
  %v204 = vpop.permute.xlu0 %203
  %206 = vset.pattern.permute.xlu0 1
  %207 = vperm.xlu0 %206, %v40
  %v208 = vpop.permute.xlu0 %207
  %210 = vset.pattern.permute.xlu0 1
  %211 = vperm.xlu0 %210, %v41
  %v212 = vpop.permute.xlu0 %211
  %214 = vset.pattern.permute.xlu0 1
  %215 = vperm.xlu0 %214, %v42
  %v216 = vpop.permute.xlu0 %215
  %218 = vset.pattern.permute.xlu0 1
  %219 = vperm.xlu0 %218, %v43
  %v220 = vpop.permute.xlu0 %219
  %222 = vset.pattern.permute.xlu0 1
  %223 = vperm.xlu0 %222, %v44
  %v224 = vpop.permute.xlu0 %223
  %226 = vset.pattern.permute.xlu0 1
  %227 = vperm.xlu0 %226, %v45
  %v228 = vpop.permute.xlu0 %227
  %v230 = vlaneseq
  %v231 = vshrl.u32 %v230, 7
  %v232 = vsub.s32 1, %v231
  %v233 = vrot.slane %v48, %v232
  %v234 = vmul.f32 %v168, %v233
  %v235 = vmul.f32 %v172, %v233
  %v236 = vmul.f32 %v176, %v233
  %v237 = vmul.f32 %v180, %v233
  %v238 = vmul.f32 %v184, %v233
  %v239 = vmul.f32 %v188, %v233
  %v240 = vmul.f32 %v192, %v233
  %v241 = vmul.f32 %v196, %v233
  %v242 = vmul.f32 %v200, %v233
  %v243 = vmul.f32 %v204, %v233
  %v244 = vmul.f32 %v208, %v233
  %v245 = vmul.f32 %v212, %v233
  %v246 = vmul.f32 %v216, %v233
  %v247 = vmul.f32 %v220, %v233
  %v248 = vmul.f32 %v224, %v233
  %v249 = vmul.f32 %v228, %v233
  %v250 = vadd.f32 %v150, %v234
  %v251 = vadd.f32 %v151, %v235
  %v252 = vadd.f32 %v152, %v236
  %v253 = vadd.f32 %v153, %v237
  %v254 = vadd.f32 %v154, %v238
  %v255 = vadd.f32 %v155, %v239
  %v256 = vadd.f32 %v156, %v240
  %v257 = vadd.f32 %v157, %v241
  %v258 = vadd.f32 %v158, %v242
  %v259 = vadd.f32 %v159, %v243
  %v260 = vadd.f32 %v160, %v244
  %v261 = vadd.f32 %v161, %v245
  %v262 = vadd.f32 %v162, %v246
  %v263 = vadd.f32 %v163, %v247
  %v264 = vadd.f32 %v164, %v248
  %v265 = vadd.f32 %v165, %v249
  %266 = vset.pattern.permute.xlu0 2
  %267 = vperm.xlu0 %266, %v30
  %v268 = vpop.permute.xlu0 %267
  %270 = vset.pattern.permute.xlu0 2
  %271 = vperm.xlu0 %270, %v31
  %v272 = vpop.permute.xlu0 %271
  %274 = vset.pattern.permute.xlu0 2
  %275 = vperm.xlu0 %274, %v32
  %v276 = vpop.permute.xlu0 %275
  %278 = vset.pattern.permute.xlu0 2
  %279 = vperm.xlu0 %278, %v33
  %v280 = vpop.permute.xlu0 %279
  %282 = vset.pattern.permute.xlu0 2
  %283 = vperm.xlu0 %282, %v34
  %v284 = vpop.permute.xlu0 %283
  %286 = vset.pattern.permute.xlu0 2
  %287 = vperm.xlu0 %286, %v35
  %v288 = vpop.permute.xlu0 %287
  %290 = vset.pattern.permute.xlu0 2
  %291 = vperm.xlu0 %290, %v36
  %v292 = vpop.permute.xlu0 %291
  %294 = vset.pattern.permute.xlu0 2
  %295 = vperm.xlu0 %294, %v37
  %v296 = vpop.permute.xlu0 %295
  %298 = vset.pattern.permute.xlu0 2
  %299 = vperm.xlu0 %298, %v38
  %v300 = vpop.permute.xlu0 %299
  %302 = vset.pattern.permute.xlu0 2
  %303 = vperm.xlu0 %302, %v39
  %v304 = vpop.permute.xlu0 %303
  %306 = vset.pattern.permute.xlu0 2
  %307 = vperm.xlu0 %306, %v40
  %v308 = vpop.permute.xlu0 %307
  %310 = vset.pattern.permute.xlu0 2
  %311 = vperm.xlu0 %310, %v41
  %v312 = vpop.permute.xlu0 %311
  %314 = vset.pattern.permute.xlu0 2
  %315 = vperm.xlu0 %314, %v42
  %v316 = vpop.permute.xlu0 %315
  %318 = vset.pattern.permute.xlu0 2
  %319 = vperm.xlu0 %318, %v43
  %v320 = vpop.permute.xlu0 %319
  %322 = vset.pattern.permute.xlu0 2
  %323 = vperm.xlu0 %322, %v44
  %v324 = vpop.permute.xlu0 %323
  %326 = vset.pattern.permute.xlu0 2
  %327 = vperm.xlu0 %326, %v45
  %v328 = vpop.permute.xlu0 %327
  %v330 = vlaneseq
  %v331 = vshrl.u32 %v330, 7
  %v332 = vsub.s32 2, %v331
  %v333 = vrot.slane %v48, %v332
  %v334 = vmul.f32 %v268, %v333
  %v335 = vmul.f32 %v272, %v333
  %v336 = vmul.f32 %v276, %v333
  %v337 = vmul.f32 %v280, %v333
  %v338 = vmul.f32 %v284, %v333
  %v339 = vmul.f32 %v288, %v333
  %v340 = vmul.f32 %v292, %v333
  %v341 = vmul.f32 %v296, %v333
  %v342 = vmul.f32 %v300, %v333
  %v343 = vmul.f32 %v304, %v333
  %v344 = vmul.f32 %v308, %v333
  %v345 = vmul.f32 %v312, %v333
  %v346 = vmul.f32 %v316, %v333
  %v347 = vmul.f32 %v320, %v333
  %v348 = vmul.f32 %v324, %v333
  %v349 = vmul.f32 %v328, %v333
  %v350 = vadd.f32 %v250, %v334
  %v351 = vadd.f32 %v251, %v335
  %v352 = vadd.f32 %v252, %v336
  %v353 = vadd.f32 %v253, %v337
  %v354 = vadd.f32 %v254, %v338
  %v355 = vadd.f32 %v255, %v339
  %v356 = vadd.f32 %v256, %v340
  %v357 = vadd.f32 %v257, %v341
  %v358 = vadd.f32 %v258, %v342
  %v359 = vadd.f32 %v259, %v343
  %v360 = vadd.f32 %v260, %v344
  %v361 = vadd.f32 %v261, %v345
  %v362 = vadd.f32 %v262, %v346
  %v363 = vadd.f32 %v263, %v347
  %v364 = vadd.f32 %v264, %v348
  %v365 = vadd.f32 %v265, %v349
  %366 = vset.pattern.permute.xlu0 3
  %367 = vperm.xlu0 %366, %v30
  %v368 = vpop.permute.xlu0 %367
  %370 = vset.pattern.permute.xlu0 3
  %371 = vperm.xlu0 %370, %v31
  %v372 = vpop.permute.xlu0 %371
  %374 = vset.pattern.permute.xlu0 3
  %375 = vperm.xlu0 %374, %v32
  %v376 = vpop.permute.xlu0 %375
  %378 = vset.pattern.permute.xlu0 3
  %379 = vperm.xlu0 %378, %v33
  %v380 = vpop.permute.xlu0 %379
  %382 = vset.pattern.permute.xlu0 3
  %383 = vperm.xlu0 %382, %v34
  %v384 = vpop.permute.xlu0 %383
  %386 = vset.pattern.permute.xlu0 3
  %387 = vperm.xlu0 %386, %v35
  %v388 = vpop.permute.xlu0 %387
  %390 = vset.pattern.permute.xlu0 3
  %391 = vperm.xlu0 %390, %v36
  %v392 = vpop.permute.xlu0 %391
  %394 = vset.pattern.permute.xlu0 3
  %395 = vperm.xlu0 %394, %v37
  %v396 = vpop.permute.xlu0 %395
  %398 = vset.pattern.permute.xlu0 3
  %399 = vperm.xlu0 %398, %v38
  %v400 = vpop.permute.xlu0 %399
  %402 = vset.pattern.permute.xlu0 3
  %403 = vperm.xlu0 %402, %v39
  %v404 = vpop.permute.xlu0 %403
  %406 = vset.pattern.permute.xlu0 3
  %407 = vperm.xlu0 %406, %v40
  %v408 = vpop.permute.xlu0 %407
  %410 = vset.pattern.permute.xlu0 3
  %411 = vperm.xlu0 %410, %v41
  %v412 = vpop.permute.xlu0 %411
  %414 = vset.pattern.permute.xlu0 3
  %415 = vperm.xlu0 %414, %v42
  %v416 = vpop.permute.xlu0 %415
  %418 = vset.pattern.permute.xlu0 3
  %419 = vperm.xlu0 %418, %v43
  %v420 = vpop.permute.xlu0 %419
  %422 = vset.pattern.permute.xlu0 3
  %423 = vperm.xlu0 %422, %v44
  %v424 = vpop.permute.xlu0 %423
  %426 = vset.pattern.permute.xlu0 3
  %427 = vperm.xlu0 %426, %v45
  %v428 = vpop.permute.xlu0 %427
  %v430 = vlaneseq
  %v431 = vshrl.u32 %v430, 7
  %v432 = vsub.s32 3, %v431
  %v433 = vrot.slane %v48, %v432
  %v434 = vmul.f32 %v368, %v433
  %v435 = vmul.f32 %v372, %v433
  %v436 = vmul.f32 %v376, %v433
  %v437 = vmul.f32 %v380, %v433
  %v438 = vmul.f32 %v384, %v433
  %v439 = vmul.f32 %v388, %v433
  %v440 = vmul.f32 %v392, %v433
  %v441 = vmul.f32 %v396, %v433
  %v442 = vmul.f32 %v400, %v433
  %v443 = vmul.f32 %v404, %v433
  %v444 = vmul.f32 %v408, %v433
  %v445 = vmul.f32 %v412, %v433
  %v446 = vmul.f32 %v416, %v433
  %v447 = vmul.f32 %v420, %v433
  %v448 = vmul.f32 %v424, %v433
  %v449 = vmul.f32 %v428, %v433
  %v450 = vadd.f32 %v350, %v434
  %v451 = vadd.f32 %v351, %v435
  %v452 = vadd.f32 %v352, %v436
  %v453 = vadd.f32 %v353, %v437
  %v454 = vadd.f32 %v354, %v438
  %v455 = vadd.f32 %v355, %v439
  %v456 = vadd.f32 %v356, %v440
  %v457 = vadd.f32 %v357, %v441
  %v458 = vadd.f32 %v358, %v442
  %v459 = vadd.f32 %v359, %v443
  %v460 = vadd.f32 %v360, %v444
  %v461 = vadd.f32 %v361, %v445
  %v462 = vadd.f32 %v362, %v446
  %v463 = vadd.f32 %v363, %v447
  %v464 = vadd.f32 %v364, %v448
  %v465 = vadd.f32 %v365, %v449
  %466 = vset.pattern.permute.xlu0 4
  %467 = vperm.xlu0 %466, %v30
  %v468 = vpop.permute.xlu0 %467
  %470 = vset.pattern.permute.xlu0 4
  %471 = vperm.xlu0 %470, %v31
  %v472 = vpop.permute.xlu0 %471
  %474 = vset.pattern.permute.xlu0 4
  %475 = vperm.xlu0 %474, %v32
  %v476 = vpop.permute.xlu0 %475
  %478 = vset.pattern.permute.xlu0 4
  %479 = vperm.xlu0 %478, %v33
  %v480 = vpop.permute.xlu0 %479
  %482 = vset.pattern.permute.xlu0 4
  %483 = vperm.xlu0 %482, %v34
  %v484 = vpop.permute.xlu0 %483
  %486 = vset.pattern.permute.xlu0 4
  %487 = vperm.xlu0 %486, %v35
  %v488 = vpop.permute.xlu0 %487
  %490 = vset.pattern.permute.xlu0 4
  %491 = vperm.xlu0 %490, %v36
  %v492 = vpop.permute.xlu0 %491
  %494 = vset.pattern.permute.xlu0 4
  %495 = vperm.xlu0 %494, %v37
  %v496 = vpop.permute.xlu0 %495
  %498 = vset.pattern.permute.xlu0 4
  %499 = vperm.xlu0 %498, %v38
  %v500 = vpop.permute.xlu0 %499
  %502 = vset.pattern.permute.xlu0 4
  %503 = vperm.xlu0 %502, %v39
  %v504 = vpop.permute.xlu0 %503
  %506 = vset.pattern.permute.xlu0 4
  %507 = vperm.xlu0 %506, %v40
  %v508 = vpop.permute.xlu0 %507
  %510 = vset.pattern.permute.xlu0 4
  %511 = vperm.xlu0 %510, %v41
  %v512 = vpop.permute.xlu0 %511
  %514 = vset.pattern.permute.xlu0 4
  %515 = vperm.xlu0 %514, %v42
  %v516 = vpop.permute.xlu0 %515
  %518 = vset.pattern.permute.xlu0 4
  %519 = vperm.xlu0 %518, %v43
  %v520 = vpop.permute.xlu0 %519
  %522 = vset.pattern.permute.xlu0 4
  %523 = vperm.xlu0 %522, %v44
  %v524 = vpop.permute.xlu0 %523
  %526 = vset.pattern.permute.xlu0 4
  %527 = vperm.xlu0 %526, %v45
  %v528 = vpop.permute.xlu0 %527
  %v530 = vlaneseq
  %v531 = vshrl.u32 %v530, 7
  %v532 = vsub.s32 4, %v531
  %v533 = vrot.slane %v48, %v532
  %v534 = vmul.f32 %v468, %v533
  %v535 = vmul.f32 %v472, %v533
  %v536 = vmul.f32 %v476, %v533
  %v537 = vmul.f32 %v480, %v533
  %v538 = vmul.f32 %v484, %v533
  %v539 = vmul.f32 %v488, %v533
  %v540 = vmul.f32 %v492, %v533
  %v541 = vmul.f32 %v496, %v533
  %v542 = vmul.f32 %v500, %v533
  %v543 = vmul.f32 %v504, %v533
  %v544 = vmul.f32 %v508, %v533
  %v545 = vmul.f32 %v512, %v533
  %v546 = vmul.f32 %v516, %v533
  %v547 = vmul.f32 %v520, %v533
  %v548 = vmul.f32 %v524, %v533
  %v549 = vmul.f32 %v528, %v533
  %v550 = vadd.f32 %v450, %v534
  %v551 = vadd.f32 %v451, %v535
  %v552 = vadd.f32 %v452, %v536
  %v553 = vadd.f32 %v453, %v537
  %v554 = vadd.f32 %v454, %v538
  %v555 = vadd.f32 %v455, %v539
  %v556 = vadd.f32 %v456, %v540
  %v557 = vadd.f32 %v457, %v541
  %v558 = vadd.f32 %v458, %v542
  %v559 = vadd.f32 %v459, %v543
  %v560 = vadd.f32 %v460, %v544
  %v561 = vadd.f32 %v461, %v545
  %v562 = vadd.f32 %v462, %v546
  %v563 = vadd.f32 %v463, %v547
  %v564 = vadd.f32 %v464, %v548
  %v565 = vadd.f32 %v465, %v549
  %566 = vset.pattern.permute.xlu0 5
  %567 = vperm.xlu0 %566, %v30
  %v568 = vpop.permute.xlu0 %567
  %570 = vset.pattern.permute.xlu0 5
  %571 = vperm.xlu0 %570, %v31
  %v572 = vpop.permute.xlu0 %571
  %574 = vset.pattern.permute.xlu0 5
  %575 = vperm.xlu0 %574, %v32
  %v576 = vpop.permute.xlu0 %575
  %578 = vset.pattern.permute.xlu0 5
  %579 = vperm.xlu0 %578, %v33
  %v580 = vpop.permute.xlu0 %579
  %582 = vset.pattern.permute.xlu0 5
  %583 = vperm.xlu0 %582, %v34
  %v584 = vpop.permute.xlu0 %583
  %586 = vset.pattern.permute.xlu0 5
  %587 = vperm.xlu0 %586, %v35
  %v588 = vpop.permute.xlu0 %587
  %590 = vset.pattern.permute.xlu0 5
  %591 = vperm.xlu0 %590, %v36
  %v592 = vpop.permute.xlu0 %591
  %594 = vset.pattern.permute.xlu0 5
  %595 = vperm.xlu0 %594, %v37
  %v596 = vpop.permute.xlu0 %595
  %598 = vset.pattern.permute.xlu0 5
  %599 = vperm.xlu0 %598, %v38
  %v600 = vpop.permute.xlu0 %599
  %602 = vset.pattern.permute.xlu0 5
  %603 = vperm.xlu0 %602, %v39
  %v604 = vpop.permute.xlu0 %603
  %606 = vset.pattern.permute.xlu0 5
  %607 = vperm.xlu0 %606, %v40
  %v608 = vpop.permute.xlu0 %607
  %610 = vset.pattern.permute.xlu0 5
  %611 = vperm.xlu0 %610, %v41
  %v612 = vpop.permute.xlu0 %611
  %614 = vset.pattern.permute.xlu0 5
  %615 = vperm.xlu0 %614, %v42
  %v616 = vpop.permute.xlu0 %615
  %618 = vset.pattern.permute.xlu0 5
  %619 = vperm.xlu0 %618, %v43
  %v620 = vpop.permute.xlu0 %619
  %622 = vset.pattern.permute.xlu0 5
  %623 = vperm.xlu0 %622, %v44
  %v624 = vpop.permute.xlu0 %623
  %626 = vset.pattern.permute.xlu0 5
  %627 = vperm.xlu0 %626, %v45
  %v628 = vpop.permute.xlu0 %627
  %v630 = vlaneseq
  %v631 = vshrl.u32 %v630, 7
  %v632 = vsub.s32 5, %v631
  %v633 = vrot.slane %v48, %v632
  %v634 = vmul.f32 %v568, %v633
  %v635 = vmul.f32 %v572, %v633
  %v636 = vmul.f32 %v576, %v633
  %v637 = vmul.f32 %v580, %v633
  %v638 = vmul.f32 %v584, %v633
  %v639 = vmul.f32 %v588, %v633
  %v640 = vmul.f32 %v592, %v633
  %v641 = vmul.f32 %v596, %v633
  %v642 = vmul.f32 %v600, %v633
  %v643 = vmul.f32 %v604, %v633
  %v644 = vmul.f32 %v608, %v633
  %v645 = vmul.f32 %v612, %v633
  %v646 = vmul.f32 %v616, %v633
  %v647 = vmul.f32 %v620, %v633
  %v648 = vmul.f32 %v624, %v633
  %v649 = vmul.f32 %v628, %v633
  %v650 = vadd.f32 %v550, %v634
  %v651 = vadd.f32 %v551, %v635
  %v652 = vadd.f32 %v552, %v636
  %v653 = vadd.f32 %v553, %v637
  %v654 = vadd.f32 %v554, %v638
  %v655 = vadd.f32 %v555, %v639
  %v656 = vadd.f32 %v556, %v640
  %v657 = vadd.f32 %v557, %v641
  %v658 = vadd.f32 %v558, %v642
  %v659 = vadd.f32 %v559, %v643
  %v660 = vadd.f32 %v560, %v644
  %v661 = vadd.f32 %v561, %v645
  %v662 = vadd.f32 %v562, %v646
  %v663 = vadd.f32 %v563, %v647
  %v664 = vadd.f32 %v564, %v648
  %v665 = vadd.f32 %v565, %v649
  %666 = vset.pattern.permute.xlu0 6
  %667 = vperm.xlu0 %666, %v30
  %v668 = vpop.permute.xlu0 %667
  %670 = vset.pattern.permute.xlu0 6
  %671 = vperm.xlu0 %670, %v31
  %v672 = vpop.permute.xlu0 %671
  %674 = vset.pattern.permute.xlu0 6
  %675 = vperm.xlu0 %674, %v32
  %v676 = vpop.permute.xlu0 %675
  %678 = vset.pattern.permute.xlu0 6
  %679 = vperm.xlu0 %678, %v33
  %v680 = vpop.permute.xlu0 %679
  %682 = vset.pattern.permute.xlu0 6
  %683 = vperm.xlu0 %682, %v34
  %v684 = vpop.permute.xlu0 %683
  %686 = vset.pattern.permute.xlu0 6
  %687 = vperm.xlu0 %686, %v35
  %v688 = vpop.permute.xlu0 %687
  %690 = vset.pattern.permute.xlu0 6
  %691 = vperm.xlu0 %690, %v36
  %v692 = vpop.permute.xlu0 %691
  %694 = vset.pattern.permute.xlu0 6
  %695 = vperm.xlu0 %694, %v37
  %v696 = vpop.permute.xlu0 %695
  %698 = vset.pattern.permute.xlu0 6
  %699 = vperm.xlu0 %698, %v38
  %v700 = vpop.permute.xlu0 %699
  %702 = vset.pattern.permute.xlu0 6
  %703 = vperm.xlu0 %702, %v39
  %v704 = vpop.permute.xlu0 %703
  %706 = vset.pattern.permute.xlu0 6
  %707 = vperm.xlu0 %706, %v40
  %v708 = vpop.permute.xlu0 %707
  %710 = vset.pattern.permute.xlu0 6
  %711 = vperm.xlu0 %710, %v41
  %v712 = vpop.permute.xlu0 %711
  %714 = vset.pattern.permute.xlu0 6
  %715 = vperm.xlu0 %714, %v42
  %v716 = vpop.permute.xlu0 %715
  %718 = vset.pattern.permute.xlu0 6
  %719 = vperm.xlu0 %718, %v43
  %v720 = vpop.permute.xlu0 %719
  %722 = vset.pattern.permute.xlu0 6
  %723 = vperm.xlu0 %722, %v44
  %v724 = vpop.permute.xlu0 %723
  %726 = vset.pattern.permute.xlu0 6
  %727 = vperm.xlu0 %726, %v45
  %v728 = vpop.permute.xlu0 %727
  %v730 = vlaneseq
  %v731 = vshrl.u32 %v730, 7
  %v732 = vsub.s32 6, %v731
  %v733 = vrot.slane %v48, %v732
  %v734 = vmul.f32 %v668, %v733
  %v735 = vmul.f32 %v672, %v733
  %v736 = vmul.f32 %v676, %v733
  %v737 = vmul.f32 %v680, %v733
  %v738 = vmul.f32 %v684, %v733
  %v739 = vmul.f32 %v688, %v733
  %v740 = vmul.f32 %v692, %v733
  %v741 = vmul.f32 %v696, %v733
  %v742 = vmul.f32 %v700, %v733
  %v743 = vmul.f32 %v704, %v733
  %v744 = vmul.f32 %v708, %v733
  %v745 = vmul.f32 %v712, %v733
  %v746 = vmul.f32 %v716, %v733
  %v747 = vmul.f32 %v720, %v733
  %v748 = vmul.f32 %v724, %v733
  %v749 = vmul.f32 %v728, %v733
  %v750 = vadd.f32 %v650, %v734
  %v751 = vadd.f32 %v651, %v735
  %v752 = vadd.f32 %v652, %v736
  %v753 = vadd.f32 %v653, %v737
  %v754 = vadd.f32 %v654, %v738
  %v755 = vadd.f32 %v655, %v739
  %v756 = vadd.f32 %v656, %v740
  %v757 = vadd.f32 %v657, %v741
  %v758 = vadd.f32 %v658, %v742
  %v759 = vadd.f32 %v659, %v743
  %v760 = vadd.f32 %v660, %v744
  %v761 = vadd.f32 %v661, %v745
  %v762 = vadd.f32 %v662, %v746
  %v763 = vadd.f32 %v663, %v747
  %v764 = vadd.f32 %v664, %v748
  %v765 = vadd.f32 %v665, %v749
  %766 = vset.pattern.permute.xlu0 7
  %767 = vperm.xlu0 %766, %v30
  %v768 = vpop.permute.xlu0 %767
  %770 = vset.pattern.permute.xlu0 7
  %771 = vperm.xlu0 %770, %v31
  %v772 = vpop.permute.xlu0 %771
  %774 = vset.pattern.permute.xlu0 7
  %775 = vperm.xlu0 %774, %v32
  %v776 = vpop.permute.xlu0 %775
  %778 = vset.pattern.permute.xlu0 7
  %779 = vperm.xlu0 %778, %v33
  %v780 = vpop.permute.xlu0 %779
  %782 = vset.pattern.permute.xlu0 7
  %783 = vperm.xlu0 %782, %v34
  %v784 = vpop.permute.xlu0 %783
  %786 = vset.pattern.permute.xlu0 7
  %787 = vperm.xlu0 %786, %v35
  %v788 = vpop.permute.xlu0 %787
  %790 = vset.pattern.permute.xlu0 7
  %791 = vperm.xlu0 %790, %v36
  %v792 = vpop.permute.xlu0 %791
  %794 = vset.pattern.permute.xlu0 7
  %795 = vperm.xlu0 %794, %v37
  %v796 = vpop.permute.xlu0 %795
  %798 = vset.pattern.permute.xlu0 7
  %799 = vperm.xlu0 %798, %v38
  %v800 = vpop.permute.xlu0 %799
  %802 = vset.pattern.permute.xlu0 7
  %803 = vperm.xlu0 %802, %v39
  %v804 = vpop.permute.xlu0 %803
  %806 = vset.pattern.permute.xlu0 7
  %807 = vperm.xlu0 %806, %v40
  %v808 = vpop.permute.xlu0 %807
  %810 = vset.pattern.permute.xlu0 7
  %811 = vperm.xlu0 %810, %v41
  %v812 = vpop.permute.xlu0 %811
  %814 = vset.pattern.permute.xlu0 7
  %815 = vperm.xlu0 %814, %v42
  %v816 = vpop.permute.xlu0 %815
  %818 = vset.pattern.permute.xlu0 7
  %819 = vperm.xlu0 %818, %v43
  %v820 = vpop.permute.xlu0 %819
  %822 = vset.pattern.permute.xlu0 7
  %823 = vperm.xlu0 %822, %v44
  %v824 = vpop.permute.xlu0 %823
  %826 = vset.pattern.permute.xlu0 7
  %827 = vperm.xlu0 %826, %v45
  %v828 = vpop.permute.xlu0 %827
  %v830 = vlaneseq
  %v831 = vshrl.u32 %v830, 7
  %v832 = vsub.s32 7, %v831
  %v833 = vrot.slane %v48, %v832
  %v834 = vmul.f32 %v768, %v833
  %v835 = vmul.f32 %v772, %v833
  %v836 = vmul.f32 %v776, %v833
  %v837 = vmul.f32 %v780, %v833
  %v838 = vmul.f32 %v784, %v833
  %v839 = vmul.f32 %v788, %v833
  %v840 = vmul.f32 %v792, %v833
  %v841 = vmul.f32 %v796, %v833
  %v842 = vmul.f32 %v800, %v833
  %v843 = vmul.f32 %v804, %v833
  %v844 = vmul.f32 %v808, %v833
  %v845 = vmul.f32 %v812, %v833
  %v846 = vmul.f32 %v816, %v833
  %v847 = vmul.f32 %v820, %v833
  %v848 = vmul.f32 %v824, %v833
  %v849 = vmul.f32 %v828, %v833
  %v850 = vadd.f32 %v750, %v834
  %v851 = vadd.f32 %v751, %v835
  %v852 = vadd.f32 %v752, %v836
  %v853 = vadd.f32 %v753, %v837
  %v854 = vadd.f32 %v754, %v838
  %v855 = vadd.f32 %v755, %v839
  %v856 = vadd.f32 %v756, %v840
  %v857 = vadd.f32 %v757, %v841
  %v858 = vadd.f32 %v758, %v842
  %v859 = vadd.f32 %v759, %v843
  %v860 = vadd.f32 %v760, %v844
  %v861 = vadd.f32 %v761, %v845
  %v862 = vadd.f32 %v762, %v846
  %v863 = vadd.f32 %v763, %v847
  %v864 = vadd.f32 %v764, %v848
  %v865 = vadd.f32 %v765, %v849
  %866 = vset.pattern.permute.xlu0 8
  %867 = vperm.xlu0 %866, %v30
  %v868 = vpop.permute.xlu0 %867
  %870 = vset.pattern.permute.xlu0 8
  %871 = vperm.xlu0 %870, %v31
  %v872 = vpop.permute.xlu0 %871
  %874 = vset.pattern.permute.xlu0 8
  %875 = vperm.xlu0 %874, %v32
  %v876 = vpop.permute.xlu0 %875
  %878 = vset.pattern.permute.xlu0 8
  %879 = vperm.xlu0 %878, %v33
  %v880 = vpop.permute.xlu0 %879
  %882 = vset.pattern.permute.xlu0 8
  %883 = vperm.xlu0 %882, %v34
  %v884 = vpop.permute.xlu0 %883
  %886 = vset.pattern.permute.xlu0 8
  %887 = vperm.xlu0 %886, %v35
  %v888 = vpop.permute.xlu0 %887
  %890 = vset.pattern.permute.xlu0 8
  %891 = vperm.xlu0 %890, %v36
  %v892 = vpop.permute.xlu0 %891
  %894 = vset.pattern.permute.xlu0 8
  %895 = vperm.xlu0 %894, %v37
  %v896 = vpop.permute.xlu0 %895
  %898 = vset.pattern.permute.xlu0 8
  %899 = vperm.xlu0 %898, %v38
  %v900 = vpop.permute.xlu0 %899
  %902 = vset.pattern.permute.xlu0 8
  %903 = vperm.xlu0 %902, %v39
  %v904 = vpop.permute.xlu0 %903
  %906 = vset.pattern.permute.xlu0 8
  %907 = vperm.xlu0 %906, %v40
  %v908 = vpop.permute.xlu0 %907
  %910 = vset.pattern.permute.xlu0 8
  %911 = vperm.xlu0 %910, %v41
  %v912 = vpop.permute.xlu0 %911
  %914 = vset.pattern.permute.xlu0 8
  %915 = vperm.xlu0 %914, %v42
  %v916 = vpop.permute.xlu0 %915
  %918 = vset.pattern.permute.xlu0 8
  %919 = vperm.xlu0 %918, %v43
  %v920 = vpop.permute.xlu0 %919
  %922 = vset.pattern.permute.xlu0 8
  %923 = vperm.xlu0 %922, %v44
  %v924 = vpop.permute.xlu0 %923
  %926 = vset.pattern.permute.xlu0 8
  %927 = vperm.xlu0 %926, %v45
  %v928 = vpop.permute.xlu0 %927
  %v930 = vlaneseq
  %v931 = vshrl.u32 %v930, 7
  %v932 = vsub.s32 0, %v931
  %v933 = vrot.slane %v49, %v932
  %v934 = vmul.f32 %v868, %v933
  %v935 = vmul.f32 %v872, %v933
  %v936 = vmul.f32 %v876, %v933
  %v937 = vmul.f32 %v880, %v933
  %v938 = vmul.f32 %v884, %v933
  %v939 = vmul.f32 %v888, %v933
  %v940 = vmul.f32 %v892, %v933
  %v941 = vmul.f32 %v896, %v933
  %v942 = vmul.f32 %v900, %v933
  %v943 = vmul.f32 %v904, %v933
  %v944 = vmul.f32 %v908, %v933
  %v945 = vmul.f32 %v912, %v933
  %v946 = vmul.f32 %v916, %v933
  %v947 = vmul.f32 %v920, %v933
  %v948 = vmul.f32 %v924, %v933
  %v949 = vmul.f32 %v928, %v933
  %v950 = vadd.f32 %v850, %v934
  %v951 = vadd.f32 %v851, %v935
  %v952 = vadd.f32 %v852, %v936
  %v953 = vadd.f32 %v853, %v937
  %v954 = vadd.f32 %v854, %v938
  %v955 = vadd.f32 %v855, %v939
  %v956 = vadd.f32 %v856, %v940
  %v957 = vadd.f32 %v857, %v941
  %v958 = vadd.f32 %v858, %v942
  %v959 = vadd.f32 %v859, %v943
  %v960 = vadd.f32 %v860, %v944
  %v961 = vadd.f32 %v861, %v945
  %v962 = vadd.f32 %v862, %v946
  %v963 = vadd.f32 %v863, %v947
  %v964 = vadd.f32 %v864, %v948
  %v965 = vadd.f32 %v865, %v949
  %v966 = vld [vmem:[%s2] sm:$0x1]
  %v968 = vlaneseq
  %v969 = vshrl.u32 %v968, 7
  %v970 = vsub.s32 0, %v969
  %v971 = vrot.slane %v966, %v970
  %v973 = vadd.f32 %v950, %v971
  %v974 = vadd.f32 %v951, %v971
  %v975 = vadd.f32 %v952, %v971
  %v976 = vadd.f32 %v953, %v971
  %v977 = vadd.f32 %v954, %v971
  %v978 = vadd.f32 %v955, %v971
  %v979 = vadd.f32 %v956, %v971
  %v980 = vadd.f32 %v957, %v971
  %v981 = vadd.f32 %v958, %v971
  %v982 = vadd.f32 %v959, %v971
  %v983 = vadd.f32 %v960, %v971
  %v984 = vadd.f32 %v961, %v971
  %v985 = vadd.f32 %v962, %v971
  %v986 = vadd.f32 %v963, %v971
  %v987 = vadd.f32 %v964, %v971
  %v988 = vadd.f32 %v965, %v971
  %v989 = vmax.f32 %v973, 0.0
  %v990 = vmax.f32 %v974, 0.0
  %v991 = vmax.f32 %v975, 0.0
  %v992 = vmax.f32 %v976, 0.0
  %v993 = vmax.f32 %v977, 0.0
  %v994 = vmax.f32 %v978, 0.0
  %v995 = vmax.f32 %v979, 0.0
  %v996 = vmax.f32 %v980, 0.0
  %v997 = vmax.f32 %v981, 0.0
  %v998 = vmax.f32 %v982, 0.0
  %v999 = vmax.f32 %v983, 0.0
  %v1000 = vmax.f32 %v984, 0.0
  %v1001 = vmax.f32 %v985, 0.0
  %v1002 = vmax.f32 %v986, 0.0
  %v1003 = vmax.f32 %v987, 0.0
  %v1004 = vmax.f32 %v988, 0.0
  %v1005 = vpack.c.bf16 %v990, %v989
  %v1006 = vpack.c.bf16 %v992, %v991
  %v1007 = vpack.c.bf16 %v994, %v993
  %v1008 = vpack.c.bf16 %v996, %v995
  %v1009 = vpack.c.bf16 %v998, %v997
  %v1010 = vpack.c.bf16 %v1000, %v999
  %v1011 = vpack.c.bf16 %v1002, %v1001
  %v1012 = vpack.c.bf16 %v1004, %v1003
  %v1021 = vunpack.c.l.b16 %v1005
  %v1022 = vunpack.c.h.b16 %v1005
  %v1023 = vunpack.c.l.b16 %v1006
  %v1024 = vunpack.c.h.b16 %v1006
  %v1025 = vunpack.c.l.b16 %v1007
  %v1026 = vunpack.c.h.b16 %v1007
  %v1027 = vunpack.c.l.b16 %v1008
  %v1028 = vunpack.c.h.b16 %v1008
  %v1029 = vunpack.c.l.b16 %v1009
  %v1030 = vunpack.c.h.b16 %v1009
  %v1031 = vunpack.c.l.b16 %v1010
  %v1032 = vunpack.c.h.b16 %v1010
  %v1033 = vunpack.c.l.b16 %v1011
  %v1034 = vunpack.c.h.b16 %v1011
  %v1035 = vunpack.c.l.b16 %v1012
  %v1036 = vunpack.c.h.b16 %v1012
  %v1037 = vpack.c.b16 %v1021, %v1021
  %v1038 = vpack.c.b16 %v1022, %v1022
  %v1039 = vpack.c.b16 %v1023, %v1023
  %v1040 = vpack.c.b16 %v1024, %v1024
  %v1041 = vpack.c.b16 %v1025, %v1025
  %v1042 = vpack.c.b16 %v1026, %v1026
  %v1043 = vpack.c.b16 %v1027, %v1027
  %v1044 = vpack.c.b16 %v1028, %v1028
  %v1045 = vpack.c.b16 %v1029, %v1029
  %v1046 = vpack.c.b16 %v1030, %v1030
  %v1047 = vpack.c.b16 %v1031, %v1031
  %v1048 = vpack.c.b16 %v1032, %v1032
  %v1049 = vpack.c.b16 %v1033, %v1033
  %v1050 = vpack.c.b16 %v1034, %v1034
  %v1051 = vpack.c.b16 %v1035, %v1035
  %v1052 = vpack.c.b16 %v1036, %v1036
  %vm1069 = vcmask 519168
  %1070 = vst.msk [vmem:[%s3] sm:$0xf] %vm1069, %v1037
  %1071 = vst.msk [vmem:[%s3 + $0x4] sm:$0xf] %vm1069, %v1038
  %1072 = vst.msk [vmem:[%s3 + $0x8] sm:$0xf] %vm1069, %v1039
  %1073 = vst.msk [vmem:[%s3 + $0xc] sm:$0xf] %vm1069, %v1040
  %1074 = vst.msk [vmem:[%s3 + $0x10] sm:$0xf] %vm1069, %v1041
  %1075 = vst.msk [vmem:[%s3 + $0x14] sm:$0xf] %vm1069, %v1042
  %1076 = vst.msk [vmem:[%s3 + $0x18] sm:$0xf] %vm1069, %v1043
  %1077 = vst.msk [vmem:[%s3 + $0x1c] sm:$0xf] %vm1069, %v1044
  %1078 = vst.msk [vmem:[%s3 + $0x20] sm:$0xf] %vm1069, %v1045
  %1079 = vst.msk [vmem:[%s3 + $0x24] sm:$0xf] %vm1069, %v1046
  %1080 = vst.msk [vmem:[%s3 + $0x28] sm:$0xf] %vm1069, %v1047
  %1081 = vst.msk [vmem:[%s3 + $0x2c] sm:$0xf] %vm1069, %v1048
  %1082 = vst.msk [vmem:[%s3 + $0x30] sm:$0xf] %vm1069, %v1049
  %1083 = vst.msk [vmem:[%s3 + $0x34] sm:$0xf] %vm1069, %v1050
  %1084 = vst.msk [vmem:[%s3 + $0x38] sm:$0xf] %vm1069, %v1051
  %1085 = vst.msk [vmem:[%s3 + $0x3c] sm:$0xf] %vm1069, %v1052
  // Predicated region
  $region14: #{multitask_forward.3} parent=0 // pred_check
    _
  $region15: #{multitask_forward.3} parent=0 // pred_check_branch
    %1087 = sbr.rel (0) target = $region17
  $region16: #{multitask_forward.3} parent=0 // pred_region
    _
  $region17: #{multitask_forward.3} parent=0 // pred_fallthru
    _
  // Predicated region
  $region18: #{multitask_forward.3} parent=0 // pred_check
    _
  $region19: #{multitask_forward.3} parent=0 // pred_check_branch
    %1089 = sbr.rel (0) target = $region21
  $region20: #{multitask_forward.3} parent=0 // pred_region
    _
  $region21: #{multitask_forward.3} parent=0 // pred_fallthru
    _

// kernel: multitask_forward.4
$region0: #{multitask_forward.4}
  #allocation0 [shape = 'u32[]', space=smem, size = 0x4, offset = 0x4, fixed_abs, tag = 'smem constant byte address 0x4 - core index']
  #allocation1 [shape = 'u32[144,128]{1,0:T(1,128)}', space=vmem, size = 0x12000, scoped, tag = 'internal scratch']
  %s0 = inlined_call_operand.vmem [shape: bf16[2,5,2,5,128], index: 0, kind: input, shape index: {}, may-alias: {0,1,2}]
  %s1 = inlined_call_operand.vmem [shape: bf16[2,5,2,5,128], index: 1, kind: input, shape index: {}, may-alias: {0,1,2}]
  %s2 = inlined_call_operand.vmem [shape: bf16[2,5,2,5,128], index: 2, kind: input, shape index: {}, may-alias: {0,1,2}]
  %s3 = inlined_call_operand.vmem [shape: bf16[3,2,128,512], index: 3, kind: input, shape index: {}]
  %s4 = inlined_call_operand.vmem [shape: f32[1,512], index: 4, kind: input, shape index: {}]
  %s5 = inlined_call_operand.vmem [shape: bf16[2,4,4,512], index: 5, kind: output, shape index: {}]
  %s6 = sld [smem:[#allocation0]]
  $region53: #{multitask_forward.4} parent=0
    _
  %s8 = ssub.s32 1, %s6
  %s9 = scalar_select 0, %s8, %s6
  loop: start=0, step=1, limit=10
  $region2: #{multitask_forward.4} parent=0 // loop_pre_header
    _
  $region3: #{multitask_forward.4} parent=0 // loop_header
    %s11 = sphi 0, %s15
    %p12 = scmp.ge.s32.totalorder %s11, 10
    %s18 = sphi 0, %s30
    %s19 = sphi 0, %s26
    %s20 = sphi 0, %s18
    %s21 = sphi 0, %s19
    %s22 = sphi 0, %s20
    %s23 = sphi 0, %s21
    %s35 = sphi 0, %s37
    %s38 = sphi 0, %s35
    %s39 = sphi 0, %s38
    %s55 = sphi 0, %s39
    %s63 = sphi 0, %s65
    %s66 = sphi 0, %s63
    %s67 = sphi 0, %s66
    %s83 = sphi 0, %s67
    %s93 = sphi 0, %s95
    %s96 = sphi 0, %s93
    %s97 = sphi 0, %s96
    %s113 = sphi 0, %s97
    %s117 = sphi 0, %s117
    %s119 = sphi 0, %s117
    %s120 = sphi 0, %s119
    %s134 = sphi 0, %s120
    %s138 = sphi 0, %s138
    %s140 = sphi 0, %s138
    %s141 = sphi 0, %s140
    %s155 = sphi 0, %s141
    %s163 = sphi 0, %s165
    %s166 = sphi 0, %s163
    %s167 = sphi 0, %s166
    %s183 = sphi 0, %s167
  $region4: #{multitask_forward.4} parent=0 // loop_header_branch
    %14 = sbr.rel (%p12) target = $region8
  $region5: #{multitask_forward.4} parent=0 // loop_body
    %s16 = ssub.s32 %s11, 1
    %s17 = ssub.s32 %s11, 2
    %s24 = sadd.s32 1, %s19
    %p25 = scmp.ge.s32.totalorder %s24, 4
    %s26 = scalar_select %p25, 0, %s24
    %s27 = sadd.s32 1, %s18
    %s28 = scalar_select %p25, %s27, %s18
    %p29 = scmp.ge.s32.totalorder %s28, 2
    %s30 = scalar_select %p29, 0, %s28
    %s31 = ssub.s32 %s18, %s30
    %s32 = ssub.s32 %s19, %s26
    %s33 = sor.u32 %s31, %s32
    %p34 = scmp.eq.s32.totalorder %s33, 0
    %s36 = sadd.s32 %s35, 1
    %s37 = scalar_select %p34, %s35, %s36
    %p40 = pneg %p34
    %p41 = scmp.eq.s32.totalorder %s11, 7
    %p42 = por %p40, %p41
    %p43 = scmp.ne.s32.totalorder %s35, %s38
    %p44 = scmp.eq.s32.totalorder %s11, 0
    %p45 = por %p43, %p44
    %p46 = scmp.ne.s32.totalorder %s35, %s38
    %p47 = scmp.eq.s32.totalorder %s16, 7
    %p48 = por %p46, %p47
    %p49 = scmp.ne.s32.totalorder %s38, %s39
    %p50 = scmp.eq.s32.totalorder %s16, 0
    %p51 = por %p49, %p50
    %p52 = scmp.ne.s32.totalorder %s38, %s39
    %p53 = scmp.eq.s32.totalorder %s17, 7
    %p54 = por %p52, %p53
    %p56 = scmp.ne.s32.totalorder %s39, %s55
    %p57 = scmp.eq.s32.totalorder %s17, 0
    %p58 = por %p56, %p57
    %s59 = ssub.s32 %s18, %s30
    %s60 = ssub.s32 %s19, %s26
    %s61 = sor.u32 %s59, %s60
    %p62 = scmp.eq.s32.totalorder %s61, 0
    %s64 = sadd.s32 %s63, 1
    %s65 = scalar_select %p62, %s63, %s64
    %p68 = pneg %p62
    %p69 = scmp.eq.s32.totalorder %s11, 7
    %p70 = por %p68, %p69
    %p71 = scmp.ne.s32.totalorder %s63, %s66
    %p72 = scmp.eq.s32.totalorder %s11, 0
    %p73 = por %p71, %p72
    %p74 = scmp.ne.s32.totalorder %s63, %s66
    %p75 = scmp.eq.s32.totalorder %s16, 7
    %p76 = por %p74, %p75
    %p77 = scmp.ne.s32.totalorder %s66, %s67
    %p78 = scmp.eq.s32.totalorder %s16, 0
    %p79 = por %p77, %p78
    %p80 = scmp.ne.s32.totalorder %s66, %s67
    %p81 = scmp.eq.s32.totalorder %s17, 7
    %p82 = por %p80, %p81
    %p84 = scmp.ne.s32.totalorder %s67, %s83
    %p85 = scmp.eq.s32.totalorder %s17, 0
    %p86 = por %p84, %p85
    %s87 = sadd.s32 %s19, 1
    %s88 = sadd.s32 %s26, 1
    %s89 = ssub.s32 %s18, %s30
    %s90 = ssub.s32 %s87, %s88
    %s91 = sor.u32 %s89, %s90
    %p92 = scmp.eq.s32.totalorder %s91, 0
    %s94 = sadd.s32 %s93, 1
    %s95 = scalar_select %p92, %s93, %s94
    %p98 = pneg %p92
    %p99 = scmp.eq.s32.totalorder %s11, 7
    %p100 = por %p98, %p99
    %p101 = scmp.ne.s32.totalorder %s93, %s96
    %p102 = scmp.eq.s32.totalorder %s11, 0
    %p103 = por %p101, %p102
    %p104 = scmp.ne.s32.totalorder %s93, %s96
    %p105 = scmp.eq.s32.totalorder %s16, 7
    %p106 = por %p104, %p105
    %p107 = scmp.ne.s32.totalorder %s96, %s97
    %p108 = scmp.eq.s32.totalorder %s16, 0
    %p109 = por %p107, %p108
    %p110 = scmp.ne.s32.totalorder %s96, %s97
    %p111 = scmp.eq.s32.totalorder %s17, 7
    %p112 = por %p110, %p111
    %p114 = scmp.ne.s32.totalorder %s97, %s113
    %p115 = scmp.eq.s32.totalorder %s17, 0
    %p116 = por %p114, %p115
    %s118 = sadd.s32 %s117, 1
    %p121 = scmp.eq.s32.totalorder %s11, 7
    %p122 = scmp.ne.s32.totalorder %s117, %s119
    %p123 = scmp.eq.s32.totalorder %s11, 0
    %p124 = por %p122, %p123
    %p125 = scmp.ne.s32.totalorder %s117, %s119
    %p126 = scmp.eq.s32.totalorder %s16, 7
    %p127 = por %p125, %p126
    %p128 = scmp.ne.s32.totalorder %s119, %s120
    %p129 = scmp.eq.s32.totalorder %s16, 0
    %p130 = por %p128, %p129
    %p131 = scmp.ne.s32.totalorder %s119, %s120
    %p132 = scmp.eq.s32.totalorder %s17, 7
    %p133 = por %p131, %p132
    %p135 = scmp.ne.s32.totalorder %s120, %s134
    %p136 = scmp.eq.s32.totalorder %s17, 0
    %p137 = por %p135, %p136
    %s139 = sadd.s32 %s138, 1
    %p142 = scmp.eq.s32.totalorder %s11, 7
    %p143 = scmp.ne.s32.totalorder %s138, %s140
    %p144 = scmp.eq.s32.totalorder %s11, 0
    %p145 = por %p143, %p144
    %p146 = scmp.ne.s32.totalorder %s138, %s140
    %p147 = scmp.eq.s32.totalorder %s16, 7
    %p148 = por %p146, %p147
    %p149 = scmp.ne.s32.totalorder %s140, %s141
    %p150 = scmp.eq.s32.totalorder %s16, 0
    %p151 = por %p149, %p150
    %p152 = scmp.ne.s32.totalorder %s140, %s141
    %p153 = scmp.eq.s32.totalorder %s17, 7
    %p154 = por %p152, %p153
    %p156 = scmp.ne.s32.totalorder %s141, %s155
    %p157 = scmp.eq.s32.totalorder %s17, 0
    %p158 = por %p156, %p157
    %s159 = ssub.s32 %s18, %s30
    %s160 = ssub.s32 %s19, %s26
    %s161 = sor.u32 %s159, %s160
    %p162 = scmp.eq.s32.totalorder %s161, 0
    %s164 = sadd.s32 %s163, 1
    %s165 = scalar_select %p162, %s163, %s164
    %p168 = pneg %p162
    %p169 = scmp.eq.s32.totalorder %s11, 7
    %p170 = por %p168, %p169
    %p171 = scmp.ne.s32.totalorder %s163, %s166
    %p172 = scmp.eq.s32.totalorder %s11, 0
    %p173 = por %p171, %p172
    %p174 = scmp.ne.s32.totalorder %s163, %s166
    %p175 = scmp.eq.s32.totalorder %s16, 7
    %p176 = por %p174, %p175
    %p177 = scmp.ne.s32.totalorder %s166, %s167
    %p178 = scmp.eq.s32.totalorder %s16, 0
    %p179 = por %p177, %p178
    %p180 = scmp.ne.s32.totalorder %s166, %s167
    %p181 = scmp.eq.s32.totalorder %s17, 7
    %p182 = por %p180, %p181
    %p184 = scmp.ne.s32.totalorder %s167, %s183
    %p185 = scmp.eq.s32.totalorder %s17, 0
    %p186 = por %p184, %p185
    %p187 = scmp.le.s32.totalorder 1, %s11
    %p188 = scmp.lt.s32.totalorder %s11, 9
    %p189 = pnand %p187, %p188
    %p190 = pneg %p189
    // Predicated region
    $region9: #{multitask_forward.4} parent=5 // pred_check
      _
    $region10: #{multitask_forward.4} parent=5 // pred_check_branch
      %192 = sbr.rel (%p189) target = $region12
    $region11: #{multitask_forward.4} parent=5 // pred_region
      %s193 = ssub.s32 %s11, 1
      // Predicated region
      $region13: #{multitask_forward.4} parent=11 // pred_check
        %p194 = pneg %p130
      $region14: #{multitask_forward.4} parent=11 // pred_check_branch
        %196 = sbr.rel (%p194) target = $region16
      $region15: #{multitask_forward.4} parent=11 // pred_region
        _
      $region16: #{multitask_forward.4} parent=11 // pred_fallthru
        _
      // Predicated region
      $region17: #{multitask_forward.4} parent=11 // pred_check
        %p197 = pneg %p151
      $region18: #{multitask_forward.4} parent=11 // pred_check_branch
        %199 = sbr.rel (%p197) target = $region20
      $region19: #{multitask_forward.4} parent=11 // pred_region
        _
      $region20: #{multitask_forward.4} parent=11 // pred_fallthru
        _
    $region12: #{multitask_forward.4} parent=5 // pred_fallthru
      _
    %p200 = scmp.lt.s32.totalorder %s11, 8
    // Predicated region
    $region21: #{multitask_forward.4} parent=5 // pred_check
      %p201 = pneg %p200
    $region22: #{multitask_forward.4} parent=5 // pred_check_branch
      %203 = sbr.rel (%p201) target = $region24
    $region23: #{multitask_forward.4} parent=5 // pred_region
      // Predicated region
      $region25: #{multitask_forward.4} parent=23 // pred_check
        %p204 = pneg %p45
      $region26: #{multitask_forward.4} parent=23 // pred_check_branch
        %206 = sbr.rel (%p204) target = $region28
      $region27: #{multitask_forward.4} parent=23 // pred_region
        %p207 = scmp.lt.s32.totalorder %s18, 1
        %s208 = scalar_select %p207, %s18, 1
        %p209 = scmp.lt.s32.totalorder %s19, 4
        %s210 = scalar_select %p209, %s19, 4
        %s211 = smul.addr %s210, 2
        %s212 = smul.addr %s208, 10
        %s213 = sadd.s32 %s211, %s212
        %s214 = smul.addr %s213, 4
        %s215 = scalar_lea.vmem %s0, %s214
      $region28: #{multitask_forward.4} parent=23 // pred_fallthru
        _
      // Predicated region
      $region29: #{multitask_forward.4} parent=23 // pred_check
        %p216 = pneg %p73
      $region30: #{multitask_forward.4} parent=23 // pred_check_branch
        %218 = sbr.rel (%p216) target = $region32
      $region31: #{multitask_forward.4} parent=23 // pred_region
        %p219 = scmp.lt.s32.totalorder %s18, 1
        %s220 = scalar_select %p219, %s18, 1
        %p221 = scmp.lt.s32.totalorder %s19, 4
        %s222 = scalar_select %p221, %s19, 4
        %s223 = smul.addr %s222, 2
        %s224 = sadd.s32 1, %s223
        %s225 = smul.addr %s220, 10
        %s226 = sadd.s32 %s224, %s225
        %s227 = smul.addr %s226, 4
        %s228 = scalar_lea.vmem %s1, %s227
      $region32: #{multitask_forward.4} parent=23 // pred_fallthru
        _
      // Predicated region
      $region33: #{multitask_forward.4} parent=23 // pred_check
        %p229 = pneg %p103
      $region34: #{multitask_forward.4} parent=23 // pred_check_branch
        %231 = sbr.rel (%p229) target = $region36
      $region35: #{multitask_forward.4} parent=23 // pred_region
        %s232 = sadd.s32 %s19, 1
        %p233 = scmp.lt.s32.totalorder %s18, 1
        %s234 = scalar_select %p233, %s18, 1
        %p235 = scmp.lt.s32.totalorder %s232, 4
        %s236 = scalar_select %p235, %s232, 4
        %s237 = smul.addr %s236, 2
        %s238 = smul.addr %s234, 10
        %s239 = sadd.s32 %s237, %s238
        %s240 = smul.addr %s239, 4
        %s241 = scalar_lea.vmem %s2, %s240
        %s242 = sadd.s32 %s19, 1
      $region36: #{multitask_forward.4} parent=23 // pred_fallthru
        _
    $region24: #{multitask_forward.4} parent=5 // pred_fallthru
      _
    %p243 = scmp.le.s32.totalorder 1, %s11
    %p244 = scmp.lt.s32.totalorder %s11, 9
    %p245 = pnand %p243, %p244
    %p246 = pneg %p245
    // Predicated region
    $region37: #{multitask_forward.4} parent=5 // pred_check
      _
    $region38: #{multitask_forward.4} parent=5 // pred_check_branch
      %248 = sbr.rel (%p245) target = $region40
    $region39: #{multitask_forward.4} parent=5 // pred_region
      %s249 = ssub.s32 %s11, 1
      %p250 = scmp.lt.s32.totalorder %s20, 1
      %s251 = scalar_select %p250, %s20, 1
      %p252 = scmp.lt.s32.totalorder %s21, 4
      %s253 = scalar_select %p252, %s21, 4
      %s254 = smul.addr %s253, 2
      %s255 = smul.addr %s251, 10
      %s256 = sadd.s32 %s254, %s255
      %s257 = smul.addr %s256, 4
      %s258 = scalar_lea.vmem %s0, %s257
      %p259 = pneg %p51
      %p260 = pneg %p48
      %p261 = scmp.lt.s32.totalorder %s20, 1
      %s262 = scalar_select %p261, %s20, 1
      %p263 = scmp.lt.s32.totalorder %s21, 4
      %s264 = scalar_select %p263, %s21, 4
      %s265 = smul.addr %s264, 2
      %s266 = sadd.s32 1, %s265
      %s267 = smul.addr %s262, 10
      %s268 = sadd.s32 %s266, %s267
      %s269 = smul.addr %s268, 4
      %s270 = scalar_lea.vmem %s1, %s269
      %p271 = pneg %p79
      %p272 = pneg %p76
      %s273 = sadd.s32 %s21, 1
      %p274 = scmp.lt.s32.totalorder %s20, 1
      %s275 = scalar_select %p274, %s20, 1
      %p276 = scmp.lt.s32.totalorder %s273, 4
      %s277 = scalar_select %p276, %s273, 4
      %s278 = smul.addr %s277, 2
      %s279 = smul.addr %s275, 10
      %s280 = sadd.s32 %s278, %s279
      %s281 = smul.addr %s280, 4
      %s282 = scalar_lea.vmem %s2, %s281
      %p283 = pneg %p109
      %p284 = pneg %p106
      %p285 = pneg %p130
      %p286 = pneg %p127
      %p287 = pneg %p151
      %p288 = pneg %p148
      %p289 = pneg %p179
      %p290 = pneg %p176
      %p291 = scmp.lt.s32.totalorder %s20, 1
      %s292 = scalar_select %p291, %s20, 1
      %p293 = scmp.lt.s32.totalorder %s21, 3
      %s294 = scalar_select %p293, %s21, 3
      %s295 = smul.addr %s294, 4
      %s296 = smul.addr %s292, 16
      %s297 = sadd.s32 %s295, %s296
      %s298 = smul.addr %s297, 2
      %s299 = scalar_lea.vmem %s5, %s298
      %p300 = scmp.lt.s32.totalorder %s20, 1
      %s301 = scalar_select %p300, %s20, 1
      %p302 = scmp.lt.s32.totalorder %s21, 4
      %s303 = scalar_select %p302, %s21, 4
      %s304 = smul.addr %s303, 2
      %s305 = smul.addr %s301, 10
      %s306 = sadd.s32 %s304, %s305
      %s307 = smul.addr %s306, 4
      %s308 = scalar_lea.vmem %s0, %s307
      %p309 = scmp.lt.s32.totalorder %s20, 1
      %s310 = scalar_select %p309, %s20, 1
      %p311 = scmp.lt.s32.totalorder %s21, 4
      %s312 = scalar_select %p311, %s21, 4
      %s313 = smul.addr %s312, 2
      %s314 = sadd.s32 1, %s313
      %s315 = smul.addr %s310, 10
      %s316 = sadd.s32 %s314, %s315
      %s317 = smul.addr %s316, 4
      %s318 = scalar_lea.vmem %s1, %s317
      %s319 = sadd.s32 %s21, 1
      %p320 = scmp.lt.s32.totalorder %s20, 1
      %s321 = scalar_select %p320, %s20, 1
      %p322 = scmp.lt.s32.totalorder %s319, 4
      %s323 = scalar_select %p322, %s319, 4
      %s324 = smul.addr %s323, 2
      %s325 = smul.addr %s321, 10
      %s326 = sadd.s32 %s324, %s325
      %s327 = smul.addr %s326, 4
      %s328 = scalar_lea.vmem %s2, %s327
      %s329 = sadd.s32 %s21, 1
      %p330 = scmp.lt.s32.totalorder %s20, 1
      %s331 = scalar_select %p330, %s20, 1
      %p332 = scmp.lt.s32.totalorder %s21, 3
      %s333 = scalar_select %p332, %s21, 3
      %s334 = smul.addr %s333, 4
      %s335 = smul.addr %s331, 16
      %s336 = sadd.s32 %s334, %s335
      %s337 = smul.addr %s336, 2
      %s338 = scalar_lea.vmem %s5, %s337
      %v340 = vld [vmem:[%s308] sm:$0x7]
      %v341 = vld [vmem:[%s3] sm:$0xff]
      %v342 = vld [vmem:[%s3 + $0x8] sm:$0xff]
      %v343 = vld [vmem:[%s3 + $0x10] sm:$0xff]
      %v344 = vld [vmem:[%s3 + $0x18] sm:$0xff]
      %v345 = vld [vmem:[%s3 + $0x20] sm:$0xff]
      %v346 = vld [vmem:[%s3 + $0x28] sm:$0xff]
      %v347 = vld [vmem:[%s3 + $0x30] sm:$0xff]
      %v348 = vld [vmem:[%s3 + $0x38] sm:$0xff]
      %v349 = vld [vmem:[%s3 + $0x40] sm:$0xff]
      %v350 = vld [vmem:[%s3 + $0x48] sm:$0xff]
      %v351 = vld [vmem:[%s3 + $0x50] sm:$0xff]
      %v352 = vld [vmem:[%s3 + $0x58] sm:$0xff]
      %v353 = vld [vmem:[%s3 + $0x60] sm:$0xff]
      %v354 = vld [vmem:[%s3 + $0x68] sm:$0xff]
      %v355 = vld [vmem:[%s3 + $0x70] sm:$0xff]
      %v356 = vld [vmem:[%s3 + $0x78] sm:$0xff]
      %v357 = vld [vmem:[%s3 + $0x80] sm:$0xff]
      %v358 = vld [vmem:[%s3 + $0x88] sm:$0xff]
      %v359 = vld [vmem:[%s3 + $0x90] sm:$0xff]
      %v360 = vld [vmem:[%s3 + $0x98] sm:$0xff]
      %v361 = vld [vmem:[%s3 + $0xa0] sm:$0xff]
      %v362 = vld [vmem:[%s3 + $0xa8] sm:$0xff]
      %v363 = vld [vmem:[%s3 + $0xb0] sm:$0xff]
      %v364 = vld [vmem:[%s3 + $0xb8] sm:$0xff]
      %v365 = vld [vmem:[%s3 + $0xc0] sm:$0xff]
      %v366 = vld [vmem:[%s3 + $0xc8] sm:$0xff]
      %v367 = vld [vmem:[%s3 + $0xd0] sm:$0xff]
      %v368 = vld [vmem:[%s3 + $0xd8] sm:$0xff]
      %v369 = vld [vmem:[%s3 + $0xe0] sm:$0xff]
      %v370 = vld [vmem:[%s3 + $0xe8] sm:$0xff]
      %v371 = vld [vmem:[%s3 + $0xf0] sm:$0xff]
      %v372 = vld [vmem:[%s3 + $0xf8] sm:$0xff]
      %s373 = scalar_lea.vmem %s3, 256
      %v374 = vld [vmem:[%s373] sm:$0xff]
      %v375 = vld [vmem:[%s373 + $0x8] sm:$0xff]
      %v376 = vld [vmem:[%s373 + $0x10] sm:$0xff]
      %v377 = vld [vmem:[%s373 + $0x18] sm:$0xff]
      %v378 = vld [vmem:[%s373 + $0x20] sm:$0xff]
      %v379 = vld [vmem:[%s373 + $0x28] sm:$0xff]
      %v380 = vld [vmem:[%s373 + $0x30] sm:$0xff]
      %v381 = vld [vmem:[%s373 + $0x38] sm:$0xff]
      %v382 = vld [vmem:[%s373 + $0x40] sm:$0xff]
      %v383 = vld [vmem:[%s373 + $0x48] sm:$0xff]
      %v384 = vld [vmem:[%s373 + $0x50] sm:$0xff]
      %v385 = vld [vmem:[%s373 + $0x58] sm:$0xff]
      %v386 = vld [vmem:[%s373 + $0x60] sm:$0xff]
      %v387 = vld [vmem:[%s373 + $0x68] sm:$0xff]
      %v388 = vld [vmem:[%s373 + $0x70] sm:$0xff]
      %v389 = vld [vmem:[%s373 + $0x78] sm:$0xff]
      %v390 = vld [vmem:[%s373 + $0x80] sm:$0xff]
      %v391 = vld [vmem:[%s373 + $0x88] sm:$0xff]
      %v392 = vld [vmem:[%s373 + $0x90] sm:$0xff]
      %v393 = vld [vmem:[%s373 + $0x98] sm:$0xff]
      %v394 = vld [vmem:[%s373 + $0xa0] sm:$0xff]
      %v395 = vld [vmem:[%s373 + $0xa8] sm:$0xff]
      %v396 = vld [vmem:[%s373 + $0xb0] sm:$0xff]
      %v397 = vld [vmem:[%s373 + $0xb8] sm:$0xff]
      %v398 = vld [vmem:[%s373 + $0xc0] sm:$0xff]
      %v399 = vld [vmem:[%s373 + $0xc8] sm:$0xff]
      %v400 = vld [vmem:[%s373 + $0xd0] sm:$0xff]
      %v401 = vld [vmem:[%s373 + $0xd8] sm:$0xff]
      %v402 = vld [vmem:[%s373 + $0xe0] sm:$0xff]
      %v403 = vld [vmem:[%s373 + $0xe8] sm:$0xff]
      %v404 = vld [vmem:[%s373 + $0xf0] sm:$0xff]
      %v405 = vld [vmem:[%s373 + $0xf8] sm:$0xff]
      %v407 = vunpack.c.l.b16 %v340
      %v408 = vpack.c.b16 %v407, %v407
      %v410 = vshrl.u32 %v408, 16
      %v412 = vshll.u32 %v408, 16
      %v414 = vrot.slane %v412, 1
      %v415 = vor.u32 %v410, %v414
      %v449 = vunpack.c.l.b16 %v374
      %v450 = vunpack.c.h.b16 %v374
      %v451 = vunpack.c.l.b16 %v375
      %v452 = vunpack.c.h.b16 %v375
      %v453 = vunpack.c.l.b16 %v376
      %v454 = vunpack.c.h.b16 %v376
      %v455 = vunpack.c.l.b16 %v377
      %v456 = vunpack.c.h.b16 %v377
      %v457 = vunpack.c.l.b16 %v378
      %v458 = vunpack.c.h.b16 %v378
      %v459 = vunpack.c.l.b16 %v379
      %v460 = vunpack.c.h.b16 %v379
      %v461 = vunpack.c.l.b16 %v380
      %v462 = vunpack.c.h.b16 %v380
      %v463 = vunpack.c.l.b16 %v381
      %v464 = vunpack.c.h.b16 %v381
      %v465 = vunpack.c.l.b16 %v382
      %v466 = vunpack.c.h.b16 %v382
      %v467 = vunpack.c.l.b16 %v383
      %v468 = vunpack.c.h.b16 %v383
      %v469 = vunpack.c.l.b16 %v384
      %v470 = vunpack.c.h.b16 %v384
      %v471 = vunpack.c.l.b16 %v385
      %v472 = vunpack.c.h.b16 %v385
      %v473 = vunpack.c.l.b16 %v386
      %v474 = vunpack.c.h.b16 %v386
      %v475 = vunpack.c.l.b16 %v387
      %v476 = vunpack.c.h.b16 %v387
      %v477 = vunpack.c.l.b16 %v388
      %v478 = vunpack.c.h.b16 %v388
      %v479 = vunpack.c.l.b16 %v389
      %v480 = vunpack.c.h.b16 %v389
      %v481 = vunpack.c.l.b16 %v390
      %v482 = vunpack.c.h.b16 %v390
      %v483 = vunpack.c.l.b16 %v391
      %v484 = vunpack.c.h.b16 %v391
      %v485 = vunpack.c.l.b16 %v392
      %v486 = vunpack.c.h.b16 %v392
      %v487 = vunpack.c.l.b16 %v393
      %v488 = vunpack.c.h.b16 %v393
      %v489 = vunpack.c.l.b16 %v394
      %v490 = vunpack.c.h.b16 %v394
      %v491 = vunpack.c.l.b16 %v395
      %v492 = vunpack.c.h.b16 %v395
      %v493 = vunpack.c.l.b16 %v396
      %v494 = vunpack.c.h.b16 %v396
      %v495 = vunpack.c.l.b16 %v397
      %v496 = vunpack.c.h.b16 %v397
      %v497 = vunpack.c.l.b16 %v398
      %v498 = vunpack.c.h.b16 %v398
      %v499 = vunpack.c.l.b16 %v399
      %v500 = vunpack.c.h.b16 %v399
      %v501 = vunpack.c.l.b16 %v400
      %v502 = vunpack.c.h.b16 %v400
      %v503 = vunpack.c.l.b16 %v401
      %v504 = vunpack.c.h.b16 %v401
      %v505 = vunpack.c.l.b16 %v402
      %v506 = vunpack.c.h.b16 %v402
      %v507 = vunpack.c.l.b16 %v403
      %v508 = vunpack.c.h.b16 %v403
      %v509 = vunpack.c.l.b16 %v404
      %v510 = vunpack.c.h.b16 %v404
      %v511 = vunpack.c.l.b16 %v405
      %v512 = vunpack.c.h.b16 %v405
      %v513 = vpack.c.b16 %v453, %v449
      %v514 = vpack.c.b16 %v454, %v450
      %v515 = vpack.c.b16 %v455, %v451
      %v516 = vpack.c.b16 %v456, %v452
      %v517 = vpack.c.b16 %v461, %v457
      %v518 = vpack.c.b16 %v462, %v458
      %v519 = vpack.c.b16 %v463, %v459
      %v520 = vpack.c.b16 %v464, %v460
      %v521 = vpack.c.b16 %v469, %v465
      %v522 = vpack.c.b16 %v470, %v466
      %v523 = vpack.c.b16 %v471, %v467
      %v524 = vpack.c.b16 %v472, %v468
      %v525 = vpack.c.b16 %v477, %v473
      %v526 = vpack.c.b16 %v478, %v474
      %v527 = vpack.c.b16 %v479, %v475
      %v528 = vpack.c.b16 %v480, %v476
      %v529 = vpack.c.b16 %v485, %v481
      %v530 = vpack.c.b16 %v486, %v482
      %v531 = vpack.c.b16 %v487, %v483
      %v532 = vpack.c.b16 %v488, %v484
      %v533 = vpack.c.b16 %v493, %v489
      %v534 = vpack.c.b16 %v494, %v490
      %v535 = vpack.c.b16 %v495, %v491
      %v536 = vpack.c.b16 %v496, %v492
      %v537 = vpack.c.b16 %v501, %v497
      %v538 = vpack.c.b16 %v502, %v498
      %v539 = vpack.c.b16 %v503, %v499
      %v540 = vpack.c.b16 %v504, %v500
      %v541 = vpack.c.b16 %v509, %v505
      %v542 = vpack.c.b16 %v510, %v506
      %v543 = vpack.c.b16 %v511, %v507
      %v544 = vpack.c.b16 %v512, %v508
      %577 = vmatprep.subr.bf16.mxu0 %v514
      %578 = vmatpush1.bf16.msra.mxu0 %v513
      %579 = vmatprep.subr.bf16.mxu0 %v518
      %580 = vmatpush1.bf16.msra.mxu0 %v517
      %581 = vmatprep.subr.bf16.mxu0 %v522
      %582 = vmatpush1.bf16.msra.mxu0 %v521
      %583 = vmatprep.subr.bf16.mxu0 %v526
      %584 = vmatpush1.bf16.msra.mxu0 %v525
      %585 = vmatprep.subr.bf16.mxu0 %v530
      %586 = vmatpush1.bf16.msra.mxu0 %v529
      %587 = vmatprep.subr.bf16.mxu0 %v534
      %588 = vmatpush1.bf16.msra.mxu0 %v533
      %589 = vmatprep.subr.bf16.mxu0 %v538
      %590 = vmatpush1.bf16.msra.mxu0 %v537
      %591 = vmatprep.subr.bf16.mxu0 %v542
      %592 = vmatpush1.bf16.msra.mxu0 %v541
      %593 = vmatprep.subr.bf16.mxu0 0
      %594 = vmatpush1.bf16.msra.mxu0 0
      %595 = vmatprep.subr.bf16.mxu0 0
      %596 = vmatpush1.bf16.msra.mxu0 0
      %597 = vmatprep.subr.bf16.mxu0 0
      %598 = vmatpush1.bf16.msra.mxu0 0
      %599 = vmatprep.subr.bf16.mxu0 0
      %600 = vmatpush1.bf16.msra.mxu0 0
      %601 = vmatprep.subr.bf16.mxu0 0
      %602 = vmatpush1.bf16.msra.mxu0 0
      %603 = vmatprep.subr.bf16.mxu0 0
      %604 = vmatpush1.bf16.msra.mxu0 0
      %605 = vmatprep.subr.bf16.mxu0 0
      %606 = vmatpush1.bf16.msra.mxu0 0
      %607 = vmatprep.subr.bf16.mxu0 0
      %608 = vmatpush1.bf16.msra.mxu0 0
      %609 = vmatprep.mubr.bf16.mxu0 0
      %610 = vmatmul.mubr.bf16.gmra.mrb[0].mxu0 %v415
      %v611 = vpop.f32.mrb[0].mxu0
      %v612 = vadd.f32 0.0, %v611
      %v613 = vpop.f32.mrb[0].mxu0
      %v614 = vadd.f32 0.0, %v613
      %v615 = vpop.f32.mrb[0].mxu0
      %v616 = vpop.f32.mrb[0].mxu0
      %617 = vdwg.mxu0
      %618 = vmatprep.subr.bf16.mxu0 %v516
      %619 = vmatpush1.bf16.msra.mxu0 %v515
      %620 = vmatprep.subr.bf16.mxu0 %v520
      %621 = vmatpush1.bf16.msra.mxu0 %v519
      %622 = vmatprep.subr.bf16.mxu0 %v524
      %623 = vmatpush1.bf16.msra.mxu0 %v523
      %624 = vmatprep.subr.bf16.mxu0 %v528
      %625 = vmatpush1.bf16.msra.mxu0 %v527
      %626 = vmatprep.subr.bf16.mxu0 %v532
      %627 = vmatpush1.bf16.msra.mxu0 %v531
      %628 = vmatprep.subr.bf16.mxu0 %v536
      %629 = vmatpush1.bf16.msra.mxu0 %v535
      %630 = vmatprep.subr.bf16.mxu0 %v540
      %631 = vmatpush1.bf16.msra.mxu0 %v539
      %632 = vmatprep.subr.bf16.mxu0 %v544
      %633 = vmatpush1.bf16.msra.mxu0 %v543
      %634 = vmatprep.subr.bf16.mxu0 0
      %635 = vmatpush1.bf16.msra.mxu0 0
      %636 = vmatprep.subr.bf16.mxu0 0
      %637 = vmatpush1.bf16.msra.mxu0 0
      %638 = vmatprep.subr.bf16.mxu0 0
      %639 = vmatpush1.bf16.msra.mxu0 0
      %640 = vmatprep.subr.bf16.mxu0 0
      %641 = vmatpush1.bf16.msra.mxu0 0
      %642 = vmatprep.subr.bf16.mxu0 0
      %643 = vmatpush1.bf16.msra.mxu0 0
      %644 = vmatprep.subr.bf16.mxu0 0
      %645 = vmatpush1.bf16.msra.mxu0 0
      %646 = vmatprep.subr.bf16.mxu0 0
      %647 = vmatpush1.bf16.msra.mxu0 0
      %648 = vmatprep.subr.bf16.mxu0 0
      %649 = vmatpush1.bf16.msra.mxu0 0
      %650 = vmatprep.mubr.bf16.mxu0 0
      %651 = vmatmul.mubr.bf16.gmra.mrb[0].mxu0 %v415
      %v652 = vpop.f32.mrb[0].mxu0
      %v653 = vadd.f32 0.0, %v652
      %v654 = vpop.f32.mrb[0].mxu0
      %v655 = vadd.f32 0.0, %v654
      %v656 = vpop.f32.mrb[0].mxu0
      %v657 = vpop.f32.mrb[0].mxu0
      %658 = vdwg.mxu0
      %v691 = vunpack.c.l.b16 %v341
      %v692 = vunpack.c.h.b16 %v341
      %v693 = vunpack.c.l.b16 %v342
      %v694 = vunpack.c.h.b16 %v342
      %v695 = vunpack.c.l.b16 %v343
      %v696 = vunpack.c.h.b16 %v343
      %v697 = vunpack.c.l.b16 %v344
      %v698 = vunpack.c.h.b16 %v344
      %v699 = vunpack.c.l.b16 %v345
      %v700 = vunpack.c.h.b16 %v345
      %v701 = vunpack.c.l.b16 %v346
      %v702 = vunpack.c.h.b16 %v346
      %v703 = vunpack.c.l.b16 %v347
      %v704 = vunpack.c.h.b16 %v347
      %v705 = vunpack.c.l.b16 %v348
      %v706 = vunpack.c.h.b16 %v348
      %v707 = vunpack.c.l.b16 %v349
      %v708 = vunpack.c.h.b16 %v349
      %v709 = vunpack.c.l.b16 %v350
      %v710 = vunpack.c.h.b16 %v350
      %v711 = vunpack.c.l.b16 %v351
      %v712 = vunpack.c.h.b16 %v351
      %v713 = vunpack.c.l.b16 %v352
      %v714 = vunpack.c.h.b16 %v352
      %v715 = vunpack.c.l.b16 %v353
      %v716 = vunpack.c.h.b16 %v353
      %v717 = vunpack.c.l.b16 %v354
      %v718 = vunpack.c.h.b16 %v354
      %v719 = vunpack.c.l.b16 %v355
      %v720 = vunpack.c.h.b16 %v355
      %v721 = vunpack.c.l.b16 %v356
      %v722 = vunpack.c.h.b16 %v356
      %v723 = vunpack.c.l.b16 %v357
      %v724 = vunpack.c.h.b16 %v357
      %v725 = vunpack.c.l.b16 %v358
      %v726 = vunpack.c.h.b16 %v358
      %v727 = vunpack.c.l.b16 %v359
      %v728 = vunpack.c.h.b16 %v359
      %v729 = vunpack.c.l.b16 %v360
      %v730 = vunpack.c.h.b16 %v360
      %v731 = vunpack.c.l.b16 %v361
      %v732 = vunpack.c.h.b16 %v361
      %v733 = vunpack.c.l.b16 %v362
      %v734 = vunpack.c.h.b16 %v362
      %v735 = vunpack.c.l.b16 %v363
      %v736 = vunpack.c.h.b16 %v363
      %v737 = vunpack.c.l.b16 %v364
      %v738 = vunpack.c.h.b16 %v364
      %v739 = vunpack.c.l.b16 %v365
      %v740 = vunpack.c.h.b16 %v365
      %v741 = vunpack.c.l.b16 %v366
      %v742 = vunpack.c.h.b16 %v366
      %v743 = vunpack.c.l.b16 %v367
      %v744 = vunpack.c.h.b16 %v367
      %v745 = vunpack.c.l.b16 %v368
      %v746 = vunpack.c.h.b16 %v368
      %v747 = vunpack.c.l.b16 %v369
      %v748 = vunpack.c.h.b16 %v369
      %v749 = vunpack.c.l.b16 %v370
      %v750 = vunpack.c.h.b16 %v370
      %v751 = vunpack.c.l.b16 %v371
      %v752 = vunpack.c.h.b16 %v371
      %v753 = vunpack.c.l.b16 %v372
      %v754 = vunpack.c.h.b16 %v372
      %v755 = vpack.c.b16 %v695, %v691
      %v756 = vpack.c.b16 %v696, %v692
      %v757 = vpack.c.b16 %v697, %v693
      %v758 = vpack.c.b16 %v698, %v694
      %v759 = vpack.c.b16 %v703, %v699
      %v760 = vpack.c.b16 %v704, %v700
      %v761 = vpack.c.b16 %v705, %v701
      %v762 = vpack.c.b16 %v706, %v702
      %v763 = vpack.c.b16 %v711, %v707
      %v764 = vpack.c.b16 %v712, %v708
      %v765 = vpack.c.b16 %v713, %v709
      %v766 = vpack.c.b16 %v714, %v710
      %v767 = vpack.c.b16 %v719, %v715
      %v768 = vpack.c.b16 %v720, %v716
      %v769 = vpack.c.b16 %v721, %v717
      %v770 = vpack.c.b16 %v722, %v718
      %v771 = vpack.c.b16 %v727, %v723
      %v772 = vpack.c.b16 %v728, %v724
      %v773 = vpack.c.b16 %v729, %v725
      %v774 = vpack.c.b16 %v730, %v726
      %v775 = vpack.c.b16 %v735, %v731
      %v776 = vpack.c.b16 %v736, %v732
      %v777 = vpack.c.b16 %v737, %v733
      %v778 = vpack.c.b16 %v738, %v734
      %v779 = vpack.c.b16 %v743, %v739
      %v780 = vpack.c.b16 %v744, %v740
      %v781 = vpack.c.b16 %v745, %v741
      %v782 = vpack.c.b16 %v746, %v742
      %v783 = vpack.c.b16 %v751, %v747
      %v784 = vpack.c.b16 %v752, %v748
      %v785 = vpack.c.b16 %v753, %v749
      %v786 = vpack.c.b16 %v754, %v750
      %819 = vmatprep.subr.bf16.mxu0 %v756
      %820 = vmatpush1.bf16.msra.mxu0 %v755
      %821 = vmatprep.subr.bf16.mxu0 %v760
      %822 = vmatpush1.bf16.msra.mxu0 %v759
      %823 = vmatprep.subr.bf16.mxu0 %v764
      %824 = vmatpush1.bf16.msra.mxu0 %v763
      %825 = vmatprep.subr.bf16.mxu0 %v768
      %826 = vmatpush1.bf16.msra.mxu0 %v767
      %827 = vmatprep.subr.bf16.mxu0 %v772
      %828 = vmatpush1.bf16.msra.mxu0 %v771
      %829 = vmatprep.subr.bf16.mxu0 %v776
      %830 = vmatpush1.bf16.msra.mxu0 %v775
      %831 = vmatprep.subr.bf16.mxu0 %v780
      %832 = vmatpush1.bf16.msra.mxu0 %v779
      %833 = vmatprep.subr.bf16.mxu0 %v784
      %834 = vmatpush1.bf16.msra.mxu0 %v783
      %835 = vmatprep.subr.bf16.mxu0 0
      %836 = vmatpush1.bf16.msra.mxu0 0
      %837 = vmatprep.subr.bf16.mxu0 0
      %838 = vmatpush1.bf16.msra.mxu0 0
      %839 = vmatprep.subr.bf16.mxu0 0
      %840 = vmatpush1.bf16.msra.mxu0 0
      %841 = vmatprep.subr.bf16.mxu0 0
      %842 = vmatpush1.bf16.msra.mxu0 0
      %843 = vmatprep.subr.bf16.mxu0 0
      %844 = vmatpush1.bf16.msra.mxu0 0
      %845 = vmatprep.subr.bf16.mxu0 0
      %846 = vmatpush1.bf16.msra.mxu0 0
      %847 = vmatprep.subr.bf16.mxu0 0
      %848 = vmatpush1.bf16.msra.mxu0 0
      %849 = vmatprep.subr.bf16.mxu0 0
      %850 = vmatpush1.bf16.msra.mxu0 0
      %851 = vmatprep.mubr.bf16.mxu0 0
      %852 = vmatmul.mubr.bf16.gmra.mrb[0].mxu0 %v340
      %v853 = vpop.f32.mrb[0].mxu0
      %v854 = vadd.f32 %v612, %v853
      %v855 = vpop.f32.mrb[0].mxu0
      %v856 = vadd.f32 %v614, %v855
      %v857 = vpop.f32.mrb[0].mxu0
      %v858 = vpop.f32.mrb[0].mxu0
      %859 = vdwg.mxu0
      %860 = vmatprep.subr.bf16.mxu0 %v758
      %861 = vmatpush1.bf16.msra.mxu0 %v757
      %862 = vmatprep.subr.bf16.mxu0 %v762
      %863 = vmatpush1.bf16.msra.mxu0 %v761
      %864 = vmatprep.subr.bf16.mxu0 %v766
      %865 = vmatpush1.bf16.msra.mxu0 %v765
      %866 = vmatprep.subr.bf16.mxu0 %v770
      %867 = vmatpush1.bf16.msra.mxu0 %v769
      %868 = vmatprep.subr.bf16.mxu0 %v774
      %869 = vmatpush1.bf16.msra.mxu0 %v773
      %870 = vmatprep.subr.bf16.mxu0 %v778
      %871 = vmatpush1.bf16.msra.mxu0 %v777
      %872 = vmatprep.subr.bf16.mxu0 %v782
      %873 = vmatpush1.bf16.msra.mxu0 %v781
      %874 = vmatprep.subr.bf16.mxu0 %v786
      %875 = vmatpush1.bf16.msra.mxu0 %v785
      %876 = vmatprep.subr.bf16.mxu0 0
      %877 = vmatpush1.bf16.msra.mxu0 0
      %878 = vmatprep.subr.bf16.mxu0 0
      %879 = vmatpush1.bf16.msra.mxu0 0
      %880 = vmatprep.subr.bf16.mxu0 0
      %881 = vmatpush1.bf16.msra.mxu0 0
      %882 = vmatprep.subr.bf16.mxu0 0
      %883 = vmatpush1.bf16.msra.mxu0 0
      %884 = vmatprep.subr.bf16.mxu0 0
      %885 = vmatpush1.bf16.msra.mxu0 0
      %886 = vmatprep.subr.bf16.mxu0 0
      %887 = vmatpush1.bf16.msra.mxu0 0
      %888 = vmatprep.subr.bf16.mxu0 0
      %889 = vmatpush1.bf16.msra.mxu0 0
      %890 = vmatprep.subr.bf16.mxu0 0
      %891 = vmatpush1.bf16.msra.mxu0 0
      %892 = vmatprep.mubr.bf16.mxu0 0
      %893 = vmatmul.mubr.bf16.gmra.mrb[0].mxu0 %v340
      %v894 = vpop.f32.mrb[0].mxu0
      %v895 = vadd.f32 %v653, %v894
      %v896 = vpop.f32.mrb[0].mxu0
      %v897 = vadd.f32 %v655, %v896
      %v898 = vpop.f32.mrb[0].mxu0
      %v899 = vpop.f32.mrb[0].mxu0
      %900 = vdwg.mxu0
      %v901 = vld [vmem:[%s318] sm:$0x7]
      %s902 = scalar_lea.vmem %s3, 512
      %v903 = vld [vmem:[%s902] sm:$0xff]
      %v904 = vld [vmem:[%s902 + $0x8] sm:$0xff]
      %v905 = vld [vmem:[%s902 + $0x10] sm:$0xff]
      %v906 = vld [vmem:[%s902 + $0x18] sm:$0xff]
      %v907 = vld [vmem:[%s902 + $0x20] sm:$0xff]
      %v908 = vld [vmem:[%s902 + $0x28] sm:$0xff]
      %v909 = vld [vmem:[%s902 + $0x30] sm:$0xff]
      %v910 = vld [vmem:[%s902 + $0x38] sm:$0xff]
      %v911 = vld [vmem:[%s902 + $0x40] sm:$0xff]
      %v912 = vld [vmem:[%s902 + $0x48] sm:$0xff]
      %v913 = vld [vmem:[%s902 + $0x50] sm:$0xff]
      %v914 = vld [vmem:[%s902 + $0x58] sm:$0xff]
      %v915 = vld [vmem:[%s902 + $0x60] sm:$0xff]
      %v916 = vld [vmem:[%s902 + $0x68] sm:$0xff]
      %v917 = vld [vmem:[%s902 + $0x70] sm:$0xff]
      %v918 = vld [vmem:[%s902 + $0x78] sm:$0xff]
      %v919 = vld [vmem:[%s902 + $0x80] sm:$0xff]
      %v920 = vld [vmem:[%s902 + $0x88] sm:$0xff]
      %v921 = vld [vmem:[%s902 + $0x90] sm:$0xff]
      %v922 = vld [vmem:[%s902 + $0x98] sm:$0xff]
      %v923 = vld [vmem:[%s902 + $0xa0] sm:$0xff]
      %v924 = vld [vmem:[%s902 + $0xa8] sm:$0xff]
      %v925 = vld [vmem:[%s902 + $0xb0] sm:$0xff]
      %v926 = vld [vmem:[%s902 + $0xb8] sm:$0xff]
      %v927 = vld [vmem:[%s902 + $0xc0] sm:$0xff]
      %v928 = vld [vmem:[%s902 + $0xc8] sm:$0xff]
      %v929 = vld [vmem:[%s902 + $0xd0] sm:$0xff]
      %v930 = vld [vmem:[%s902 + $0xd8] sm:$0xff]
      %v931 = vld [vmem:[%s902 + $0xe0] sm:$0xff]
      %v932 = vld [vmem:[%s902 + $0xe8] sm:$0xff]
      %v933 = vld [vmem:[%s902 + $0xf0] sm:$0xff]
      %v934 = vld [vmem:[%s902 + $0xf8] sm:$0xff]
      %v967 = vunpack.c.l.b16 %v903
      %v968 = vunpack.c.h.b16 %v903
      %v969 = vunpack.c.l.b16 %v904
      %v970 = vunpack.c.h.b16 %v904
      %v971 = vunpack.c.l.b16 %v905
      %v972 = vunpack.c.h.b16 %v905
      %v973 = vunpack.c.l.b16 %v906
      %v974 = vunpack.c.h.b16 %v906
      %v975 = vunpack.c.l.b16 %v907
      %v976 = vunpack.c.h.b16 %v907
      %v977 = vunpack.c.l.b16 %v908
      %v978 = vunpack.c.h.b16 %v908
      %v979 = vunpack.c.l.b16 %v909
      %v980 = vunpack.c.h.b16 %v909
      %v981 = vunpack.c.l.b16 %v910
      %v982 = vunpack.c.h.b16 %v910
      %v983 = vunpack.c.l.b16 %v911
      %v984 = vunpack.c.h.b16 %v911
      %v985 = vunpack.c.l.b16 %v912
      %v986 = vunpack.c.h.b16 %v912
      %v987 = vunpack.c.l.b16 %v913
      %v988 = vunpack.c.h.b16 %v913
      %v989 = vunpack.c.l.b16 %v914
      %v990 = vunpack.c.h.b16 %v914
      %v991 = vunpack.c.l.b16 %v915
      %v992 = vunpack.c.h.b16 %v915
      %v993 = vunpack.c.l.b16 %v916
      %v994 = vunpack.c.h.b16 %v916
      %v995 = vunpack.c.l.b16 %v917
      %v996 = vunpack.c.h.b16 %v917
      %v997 = vunpack.c.l.b16 %v918
      %v998 = vunpack.c.h.b16 %v918
      %v999 = vunpack.c.l.b16 %v919
      %v1000 = vunpack.c.h.b16 %v919
      %v1001 = vunpack.c.l.b16 %v920
      %v1002 = vunpack.c.h.b16 %v920
      %v1003 = vunpack.c.l.b16 %v921
      %v1004 = vunpack.c.h.b16 %v921
      %v1005 = vunpack.c.l.b16 %v922
      %v1006 = vunpack.c.h.b16 %v922
      %v1007 = vunpack.c.l.b16 %v923
      %v1008 = vunpack.c.h.b16 %v923
      %v1009 = vunpack.c.l.b16 %v924
      %v1010 = vunpack.c.h.b16 %v924
      %v1011 = vunpack.c.l.b16 %v925
      %v1012 = vunpack.c.h.b16 %v925
      %v1013 = vunpack.c.l.b16 %v926
      %v1014 = vunpack.c.h.b16 %v926
      %v1015 = vunpack.c.l.b16 %v927
      %v1016 = vunpack.c.h.b16 %v927
      %v1017 = vunpack.c.l.b16 %v928
      %v1018 = vunpack.c.h.b16 %v928
      %v1019 = vunpack.c.l.b16 %v929
      %v1020 = vunpack.c.h.b16 %v929
      %v1021 = vunpack.c.l.b16 %v930
      %v1022 = vunpack.c.h.b16 %v930
      %v1023 = vunpack.c.l.b16 %v931
      %v1024 = vunpack.c.h.b16 %v931
      %v1025 = vunpack.c.l.b16 %v932
      %v1026 = vunpack.c.h.b16 %v932
      %v1027 = vunpack.c.l.b16 %v933
      %v1028 = vunpack.c.h.b16 %v933
      %v1029 = vunpack.c.l.b16 %v934
      %v1030 = vunpack.c.h.b16 %v934
      %v1031 = vpack.c.b16 %v971, %v967
      %v1032 = vpack.c.b16 %v972, %v968
      %v1033 = vpack.c.b16 %v973, %v969
      %v1034 = vpack.c.b16 %v974, %v970
      %v1035 = vpack.c.b16 %v979, %v975
      %v1036 = vpack.c.b16 %v980, %v976
      %v1037 = vpack.c.b16 %v981, %v977
      %v1038 = vpack.c.b16 %v982, %v978
      %v1039 = vpack.c.b16 %v987, %v983
      %v1040 = vpack.c.b16 %v988, %v984
      %v1041 = vpack.c.b16 %v989, %v985
      %v1042 = vpack.c.b16 %v990, %v986
      %v1043 = vpack.c.b16 %v995, %v991
      %v1044 = vpack.c.b16 %v996, %v992
      %v1045 = vpack.c.b16 %v997, %v993
      %v1046 = vpack.c.b16 %v998, %v994
      %v1047 = vpack.c.b16 %v1003, %v999
      %v1048 = vpack.c.b16 %v1004, %v1000
      %v1049 = vpack.c.b16 %v1005, %v1001
      %v1050 = vpack.c.b16 %v1006, %v1002
      %v1051 = vpack.c.b16 %v1011, %v1007
      %v1052 = vpack.c.b16 %v1012, %v1008
      %v1053 = vpack.c.b16 %v1013, %v1009
      %v1054 = vpack.c.b16 %v1014, %v1010
      %v1055 = vpack.c.b16 %v1019, %v1015
      %v1056 = vpack.c.b16 %v1020, %v1016
      %v1057 = vpack.c.b16 %v1021, %v1017
      %v1058 = vpack.c.b16 %v1022, %v1018
      %v1059 = vpack.c.b16 %v1027, %v1023
      %v1060 = vpack.c.b16 %v1028, %v1024
      %v1061 = vpack.c.b16 %v1029, %v1025
      %v1062 = vpack.c.b16 %v1030, %v1026
      %1095 = vmatprep.subr.bf16.mxu0 %v1032
      %1096 = vmatpush1.bf16.msra.mxu0 %v1031
      %1097 = vmatprep.subr.bf16.mxu0 %v1036
      %1098 = vmatpush1.bf16.msra.mxu0 %v1035
      %1099 = vmatprep.subr.bf16.mxu0 %v1040
      %1100 = vmatpush1.bf16.msra.mxu0 %v1039
      %1101 = vmatprep.subr.bf16.mxu0 %v1044
      %1102 = vmatpush1.bf16.msra.mxu0 %v1043
      %1103 = vmatprep.subr.bf16.mxu0 %v1048
      %1104 = vmatpush1.bf16.msra.mxu0 %v1047
      %1105 = vmatprep.subr.bf16.mxu0 %v1052
      %1106 = vmatpush1.bf16.msra.mxu0 %v1051
      %1107 = vmatprep.subr.bf16.mxu0 %v1056
      %1108 = vmatpush1.bf16.msra.mxu0 %v1055
      %1109 = vmatprep.subr.bf16.mxu0 %v1060
      %1110 = vmatpush1.bf16.msra.mxu0 %v1059
      %1111 = vmatprep.subr.bf16.mxu0 0
      %1112 = vmatpush1.bf16.msra.mxu0 0
      %1113 = vmatprep.subr.bf16.mxu0 0
      %1114 = vmatpush1.bf16.msra.mxu0 0
      %1115 = vmatprep.subr.bf16.mxu0 0
      %1116 = vmatpush1.bf16.msra.mxu0 0
      %1117 = vmatprep.subr.bf16.mxu0 0
      %1118 = vmatpush1.bf16.msra.mxu0 0
      %1119 = vmatprep.subr.bf16.mxu0 0
      %1120 = vmatpush1.bf16.msra.mxu0 0
      %1121 = vmatprep.subr.bf16.mxu0 0
      %1122 = vmatpush1.bf16.msra.mxu0 0
      %1123 = vmatprep.subr.bf16.mxu0 0
      %1124 = vmatpush1.bf16.msra.mxu0 0
      %1125 = vmatprep.subr.bf16.mxu0 0
      %1126 = vmatpush1.bf16.msra.mxu0 0
      %1127 = vmatprep.mubr.bf16.mxu0 0
      %1128 = vmatmul.mubr.bf16.gmra.mrb[0].mxu0 %v901
      %v1129 = vpop.f32.mrb[0].mxu0
      %v1130 = vadd.f32 0.0, %v1129
      %v1131 = vpop.f32.mrb[0].mxu0
      %v1132 = vadd.f32 0.0, %v1131
      %v1133 = vpop.f32.mrb[0].mxu0
      %v1134 = vpop.f32.mrb[0].mxu0
      %1135 = vdwg.mxu0
      %1136 = vmatprep.subr.bf16.mxu0 %v1034
      %1137 = vmatpush1.bf16.msra.mxu0 %v1033
      %1138 = vmatprep.subr.bf16.mxu0 %v1038
      %1139 = vmatpush1.bf16.msra.mxu0 %v1037
      %1140 = vmatprep.subr.bf16.mxu0 %v1042
      %1141 = vmatpush1.bf16.msra.mxu0 %v1041
      %1142 = vmatprep.subr.bf16.mxu0 %v1046
      %1143 = vmatpush1.bf16.msra.mxu0 %v1045
      %1144 = vmatprep.subr.bf16.mxu0 %v1050
      %1145 = vmatpush1.bf16.msra.mxu0 %v1049
      %1146 = vmatprep.subr.bf16.mxu0 %v1054
      %1147 = vmatpush1.bf16.msra.mxu0 %v1053
      %1148 = vmatprep.subr.bf16.mxu0 %v1058
      %1149 = vmatpush1.bf16.msra.mxu0 %v1057
      %1150 = vmatprep.subr.bf16.mxu0 %v1062
      %1151 = vmatpush1.bf16.msra.mxu0 %v1061
      %1152 = vmatprep.subr.bf16.mxu0 0
      %1153 = vmatpush1.bf16.msra.mxu0 0
      %1154 = vmatprep.subr.bf16.mxu0 0
      %1155 = vmatpush1.bf16.msra.mxu0 0
      %1156 = vmatprep.subr.bf16.mxu0 0
      %1157 = vmatpush1.bf16.msra.mxu0 0
      %1158 = vmatprep.subr.bf16.mxu0 0
      %1159 = vmatpush1.bf16.msra.mxu0 0
      %1160 = vmatprep.subr.bf16.mxu0 0
      %1161 = vmatpush1.bf16.msra.mxu0 0
      %1162 = vmatprep.subr.bf16.mxu0 0
      %1163 = vmatpush1.bf16.msra.mxu0 0
      %1164 = vmatprep.subr.bf16.mxu0 0
      %1165 = vmatpush1.bf16.msra.mxu0 0
      %1166 = vmatprep.subr.bf16.mxu0 0
      %1167 = vmatpush1.bf16.msra.mxu0 0
      %1168 = vmatprep.mubr.bf16.mxu0 0
      %1169 = vmatmul.mubr.bf16.gmra.mrb[0].mxu0 %v901
      %v1170 = vpop.f32.mrb[0].mxu0
      %v1171 = vadd.f32 0.0, %v1170
      %v1172 = vpop.f32.mrb[0].mxu0
      %v1173 = vadd.f32 0.0, %v1172
      %v1174 = vpop.f32.mrb[0].mxu0
      %v1175 = vpop.f32.mrb[0].mxu0
      %1176 = vdwg.mxu0
      %v1177 = vadd.f32 %v854, %v1130
      %v1178 = vadd.f32 %v856, %v1132
      %v1179 = vadd.f32 %v895, %v1171
      %v1180 = vadd.f32 %v897, %v1173
      %s1181 = scalar_lea.vmem %s3, 768
      %v1182 = vld [vmem:[%s1181] sm:$0xff]
      %v1183 = vld [vmem:[%s1181 + $0x8] sm:$0xff]
      %v1184 = vld [vmem:[%s1181 + $0x10] sm:$0xff]
      %v1185 = vld [vmem:[%s1181 + $0x18] sm:$0xff]
      %v1186 = vld [vmem:[%s1181 + $0x20] sm:$0xff]
      %v1187 = vld [vmem:[%s1181 + $0x28] sm:$0xff]
      %v1188 = vld [vmem:[%s1181 + $0x30] sm:$0xff]
      %v1189 = vld [vmem:[%s1181 + $0x38] sm:$0xff]
      %v1190 = vld [vmem:[%s1181 + $0x40] sm:$0xff]
      %v1191 = vld [vmem:[%s1181 + $0x48] sm:$0xff]
      %v1192 = vld [vmem:[%s1181 + $0x50] sm:$0xff]
      %v1193 = vld [vmem:[%s1181 + $0x58] sm:$0xff]
      %v1194 = vld [vmem:[%s1181 + $0x60] sm:$0xff]
      %v1195 = vld [vmem:[%s1181 + $0x68] sm:$0xff]
      %v1196 = vld [vmem:[%s1181 + $0x70] sm:$0xff]
      %v1197 = vld [vmem:[%s1181 + $0x78] sm:$0xff]
      %v1198 = vld [vmem:[%s1181 + $0x80] sm:$0xff]
      %v1199 = vld [vmem:[%s1181 + $0x88] sm:$0xff]
      %v1200 = vld [vmem:[%s1181 + $0x90] sm:$0xff]
      %v1201 = vld [vmem:[%s1181 + $0x98] sm:$0xff]
      %v1202 = vld [vmem:[%s1181 + $0xa0] sm:$0xff]
      %v1203 = vld [vmem:[%s1181 + $0xa8] sm:$0xff]
      %v1204 = vld [vmem:[%s1181 + $0xb0] sm:$0xff]
      %v1205 = vld [vmem:[%s1181 + $0xb8] sm:$0xff]
      %v1206 = vld [vmem:[%s1181 + $0xc0] sm:$0xff]
      %v1207 = vld [vmem:[%s1181 + $0xc8] sm:$0xff]
      %v1208 = vld [vmem:[%s1181 + $0xd0] sm:$0xff]
      %v1209 = vld [vmem:[%s1181 + $0xd8] sm:$0xff]
      %v1210 = vld [vmem:[%s1181 + $0xe0] sm:$0xff]
      %v1211 = vld [vmem:[%s1181 + $0xe8] sm:$0xff]
      %v1212 = vld [vmem:[%s1181 + $0xf0] sm:$0xff]
      %v1213 = vld [vmem:[%s1181 + $0xf8] sm:$0xff]
      %v1215 = vunpack.c.l.b16 %v901
      %v1216 = vpack.c.b16 %v1215, %v1215
      %v1218 = vshrl.u32 %v1216, 16
      %v1220 = vshll.u32 %v1216, 16
      %v1222 = vrot.slane %v1220, 1
      %v1223 = vor.u32 %v1218, %v1222
      %v1257 = vunpack.c.l.b16 %v1182
      %v1258 = vunpack.c.h.b16 %v1182
      %v1259 = vunpack.c.l.b16 %v1183
      %v1260 = vunpack.c.h.b16 %v1183
      %v1261 = vunpack.c.l.b16 %v1184
      %v1262 = vunpack.c.h.b16 %v1184
      %v1263 = vunpack.c.l.b16 %v1185
      %v1264 = vunpack.c.h.b16 %v1185
      %v1265 = vunpack.c.l.b16 %v1186
      %v1266 = vunpack.c.h.b16 %v1186
      %v1267 = vunpack.c.l.b16 %v1187
      %v1268 = vunpack.c.h.b16 %v1187
      %v1269 = vunpack.c.l.b16 %v1188
      %v1270 = vunpack.c.h.b16 %v1188
      %v1271 = vunpack.c.l.b16 %v1189
      %v1272 = vunpack.c.h.b16 %v1189
      %v1273 = vunpack.c.l.b16 %v1190
      %v1274 = vunpack.c.h.b16 %v1190
      %v1275 = vunpack.c.l.b16 %v1191
      %v1276 = vunpack.c.h.b16 %v1191
      %v1277 = vunpack.c.l.b16 %v1192
      %v1278 = vunpack.c.h.b16 %v1192
      %v1279 = vunpack.c.l.b16 %v1193
      %v1280 = vunpack.c.h.b16 %v1193
      %v1281 = vunpack.c.l.b16 %v1194
      %v1282 = vunpack.c.h.b16 %v1194
      %v1283 = vunpack.c.l.b16 %v1195
      %v1284 = vunpack.c.h.b16 %v1195
      %v1285 = vunpack.c.l.b16 %v1196
      %v1286 = vunpack.c.h.b16 %v1196
      %v1287 = vunpack.c.l.b16 %v1197
      %v1288 = vunpack.c.h.b16 %v1197
      %v1289 = vunpack.c.l.b16 %v1198
      %v1290 = vunpack.c.h.b16 %v1198
      %v1291 = vunpack.c.l.b16 %v1199
      %v1292 = vunpack.c.h.b16 %v1199
      %v1293 = vunpack.c.l.b16 %v1200
      %v1294 = vunpack.c.h.b16 %v1200
      %v1295 = vunpack.c.l.b16 %v1201
      %v1296 = vunpack.c.h.b16 %v1201
      %v1297 = vunpack.c.l.b16 %v1202
      %v1298 = vunpack.c.h.b16 %v1202
      %v1299 = vunpack.c.l.b16 %v1203
      %v1300 = vunpack.c.h.b16 %v1203
      %v1301 = vunpack.c.l.b16 %v1204
      %v1302 = vunpack.c.h.b16 %v1204
      %v1303 = vunpack.c.l.b16 %v1205
      %v1304 = vunpack.c.h.b16 %v1205
      %v1305 = vunpack.c.l.b16 %v1206
      %v1306 = vunpack.c.h.b16 %v1206
      %v1307 = vunpack.c.l.b16 %v1207
      %v1308 = vunpack.c.h.b16 %v1207
      %v1309 = vunpack.c.l.b16 %v1208
      %v1310 = vunpack.c.h.b16 %v1208
      %v1311 = vunpack.c.l.b16 %v1209
      %v1312 = vunpack.c.h.b16 %v1209
      %v1313 = vunpack.c.l.b16 %v1210
      %v1314 = vunpack.c.h.b16 %v1210
      %v1315 = vunpack.c.l.b16 %v1211
      %v1316 = vunpack.c.h.b16 %v1211
      %v1317 = vunpack.c.l.b16 %v1212
      %v1318 = vunpack.c.h.b16 %v1212
      %v1319 = vunpack.c.l.b16 %v1213
      %v1320 = vunpack.c.h.b16 %v1213
      %v1321 = vpack.c.b16 %v1261, %v1257
      %v1322 = vpack.c.b16 %v1262, %v1258
      %v1323 = vpack.c.b16 %v1263, %v1259
      %v1324 = vpack.c.b16 %v1264, %v1260
      %v1325 = vpack.c.b16 %v1269, %v1265
      %v1326 = vpack.c.b16 %v1270, %v1266
      %v1327 = vpack.c.b16 %v1271, %v1267
      %v1328 = vpack.c.b16 %v1272, %v1268
      %v1329 = vpack.c.b16 %v1277, %v1273
      %v1330 = vpack.c.b16 %v1278, %v1274
      %v1331 = vpack.c.b16 %v1279, %v1275
      %v1332 = vpack.c.b16 %v1280, %v1276
      %v1333 = vpack.c.b16 %v1285, %v1281
      %v1334 = vpack.c.b16 %v1286, %v1282
      %v1335 = vpack.c.b16 %v1287, %v1283
      %v1336 = vpack.c.b16 %v1288, %v1284
      %v1337 = vpack.c.b16 %v1293, %v1289
      %v1338 = vpack.c.b16 %v1294, %v1290
      %v1339 = vpack.c.b16 %v1295, %v1291
      %v1340 = vpack.c.b16 %v1296, %v1292
      %v1341 = vpack.c.b16 %v1301, %v1297
      %v1342 = vpack.c.b16 %v1302, %v1298
      %v1343 = vpack.c.b16 %v1303, %v1299
      %v1344 = vpack.c.b16 %v1304, %v1300
      %v1345 = vpack.c.b16 %v1309, %v1305
      %v1346 = vpack.c.b16 %v1310, %v1306
      %v1347 = vpack.c.b16 %v1311, %v1307
      %v1348 = vpack.c.b16 %v1312, %v1308
      %v1349 = vpack.c.b16 %v1317, %v1313
      %v1350 = vpack.c.b16 %v1318, %v1314
      %v1351 = vpack.c.b16 %v1319, %v1315
      %v1352 = vpack.c.b16 %v1320, %v1316
      %1385 = vmatprep.subr.bf16.mxu0 %v1322
      %1386 = vmatpush1.bf16.msra.mxu0 %v1321
      %1387 = vmatprep.subr.bf16.mxu0 %v1326
      %1388 = vmatpush1.bf16.msra.mxu0 %v1325
      %1389 = vmatprep.subr.bf16.mxu0 %v1330
      %1390 = vmatpush1.bf16.msra.mxu0 %v1329
      %1391 = vmatprep.subr.bf16.mxu0 %v1334
      %1392 = vmatpush1.bf16.msra.mxu0 %v1333
      %1393 = vmatprep.subr.bf16.mxu0 %v1338
      %1394 = vmatpush1.bf16.msra.mxu0 %v1337
      %1395 = vmatprep.subr.bf16.mxu0 %v1342
      %1396 = vmatpush1.bf16.msra.mxu0 %v1341
      %1397 = vmatprep.subr.bf16.mxu0 %v1346
      %1398 = vmatpush1.bf16.msra.mxu0 %v1345
      %1399 = vmatprep.subr.bf16.mxu0 %v1350
      %1400 = vmatpush1.bf16.msra.mxu0 %v1349
      %1401 = vmatprep.subr.bf16.mxu0 0
      %1402 = vmatpush1.bf16.msra.mxu0 0
      %1403 = vmatprep.subr.bf16.mxu0 0
      %1404 = vmatpush1.bf16.msra.mxu0 0
      %1405 = vmatprep.subr.bf16.mxu0 0
      %1406 = vmatpush1.bf16.msra.mxu0 0
      %1407 = vmatprep.subr.bf16.mxu0 0
      %1408 = vmatpush1.bf16.msra.mxu0 0
      %1409 = vmatprep.subr.bf16.mxu0 0
      %1410 = vmatpush1.bf16.msra.mxu0 0
      %1411 = vmatprep.subr.bf16.mxu0 0
      %1412 = vmatpush1.bf16.msra.mxu0 0
      %1413 = vmatprep.subr.bf16.mxu0 0
      %1414 = vmatpush1.bf16.msra.mxu0 0
      %1415 = vmatprep.subr.bf16.mxu0 0
      %1416 = vmatpush1.bf16.msra.mxu0 0
      %1417 = vmatprep.mubr.bf16.mxu0 0
      %1418 = vmatmul.mubr.bf16.gmra.mrb[0].mxu0 %v1223
      %v1419 = vpop.f32.mrb[0].mxu0
      %v1420 = vadd.f32 0.0, %v1419
      %v1421 = vpop.f32.mrb[0].mxu0
      %v1422 = vadd.f32 0.0, %v1421
      %v1423 = vpop.f32.mrb[0].mxu0
      %v1424 = vpop.f32.mrb[0].mxu0
      %1425 = vdwg.mxu0
      %1426 = vmatprep.subr.bf16.mxu0 %v1324
      %1427 = vmatpush1.bf16.msra.mxu0 %v1323
      %1428 = vmatprep.subr.bf16.mxu0 %v1328
      %1429 = vmatpush1.bf16.msra.mxu0 %v1327
      %1430 = vmatprep.subr.bf16.mxu0 %v1332
      %1431 = vmatpush1.bf16.msra.mxu0 %v1331
      %1432 = vmatprep.subr.bf16.mxu0 %v1336
      %1433 = vmatpush1.bf16.msra.mxu0 %v1335
      %1434 = vmatprep.subr.bf16.mxu0 %v1340
      %1435 = vmatpush1.bf16.msra.mxu0 %v1339
      %1436 = vmatprep.subr.bf16.mxu0 %v1344
      %1437 = vmatpush1.bf16.msra.mxu0 %v1343
      %1438 = vmatprep.subr.bf16.mxu0 %v1348
      %1439 = vmatpush1.bf16.msra.mxu0 %v1347
      %1440 = vmatprep.subr.bf16.mxu0 %v1352
      %1441 = vmatpush1.bf16.msra.mxu0 %v1351
      %1442 = vmatprep.subr.bf16.mxu0 0
      %1443 = vmatpush1.bf16.msra.mxu0 0
      %1444 = vmatprep.subr.bf16.mxu0 0
      %1445 = vmatpush1.bf16.msra.mxu0 0
      %1446 = vmatprep.subr.bf16.mxu0 0
      %1447 = vmatpush1.bf16.msra.mxu0 0
      %1448 = vmatprep.subr.bf16.mxu0 0
      %1449 = vmatpush1.bf16.msra.mxu0 0
      %1450 = vmatprep.subr.bf16.mxu0 0
      %1451 = vmatpush1.bf16.msra.mxu0 0
      %1452 = vmatprep.subr.bf16.mxu0 0
      %1453 = vmatpush1.bf16.msra.mxu0 0
      %1454 = vmatprep.subr.bf16.mxu0 0
      %1455 = vmatpush1.bf16.msra.mxu0 0
      %1456 = vmatprep.subr.bf16.mxu0 0
      %1457 = vmatpush1.bf16.msra.mxu0 0
      %1458 = vmatprep.mubr.bf16.mxu0 0
      %1459 = vmatmul.mubr.bf16.gmra.mrb[0].mxu0 %v1223
      %v1460 = vpop.f32.mrb[0].mxu0
      %v1461 = vadd.f32 0.0, %v1460
      %v1462 = vpop.f32.mrb[0].mxu0
      %v1463 = vadd.f32 0.0, %v1462
      %v1464 = vpop.f32.mrb[0].mxu0
      %v1465 = vpop.f32.mrb[0].mxu0
      %1466 = vdwg.mxu0
      %v1467 = vadd.f32 %v1177, %v1420
      %v1468 = vadd.f32 %v1178, %v1422
      %v1469 = vadd.f32 %v1179, %v1461
      %v1470 = vadd.f32 %v1180, %v1463
      %v1471 = vld [vmem:[%s328] sm:$0x7]
      %s1472 = scalar_lea.vmem %s3, 1024
      %v1473 = vld [vmem:[%s1472] sm:$0xff]
      %v1474 = vld [vmem:[%s1472 + $0x8] sm:$0xff]
      %v1475 = vld [vmem:[%s1472 + $0x10] sm:$0xff]
      %v1476 = vld [vmem:[%s1472 + $0x18] sm:$0xff]
      %v1477 = vld [vmem:[%s1472 + $0x20] sm:$0xff]
      %v1478 = vld [vmem:[%s1472 + $0x28] sm:$0xff]
      %v1479 = vld [vmem:[%s1472 + $0x30] sm:$0xff]
      %v1480 = vld [vmem:[%s1472 + $0x38] sm:$0xff]
      %v1481 = vld [vmem:[%s1472 + $0x40] sm:$0xff]
      %v1482 = vld [vmem:[%s1472 + $0x48] sm:$0xff]
      %v1483 = vld [vmem:[%s1472 + $0x50] sm:$0xff]
      %v1484 = vld [vmem:[%s1472 + $0x58] sm:$0xff]
      %v1485 = vld [vmem:[%s1472 + $0x60] sm:$0xff]
      %v1486 = vld [vmem:[%s1472 + $0x68] sm:$0xff]
      %v1487 = vld [vmem:[%s1472 + $0x70] sm:$0xff]
      %v1488 = vld [vmem:[%s1472 + $0x78] sm:$0xff]
      %v1489 = vld [vmem:[%s1472 + $0x80] sm:$0xff]
      %v1490 = vld [vmem:[%s1472 + $0x88] sm:$0xff]
      %v1491 = vld [vmem:[%s1472 + $0x90] sm:$0xff]
      %v1492 = vld [vmem:[%s1472 + $0x98] sm:$0xff]
      %v1493 = vld [vmem:[%s1472 + $0xa0] sm:$0xff]
      %v1494 = vld [vmem:[%s1472 + $0xa8] sm:$0xff]
      %v1495 = vld [vmem:[%s1472 + $0xb0] sm:$0xff]
      %v1496 = vld [vmem:[%s1472 + $0xb8] sm:$0xff]
      %v1497 = vld [vmem:[%s1472 + $0xc0] sm:$0xff]
      %v1498 = vld [vmem:[%s1472 + $0xc8] sm:$0xff]
      %v1499 = vld [vmem:[%s1472 + $0xd0] sm:$0xff]
      %v1500 = vld [vmem:[%s1472 + $0xd8] sm:$0xff]
      %v1501 = vld [vmem:[%s1472 + $0xe0] sm:$0xff]
      %v1502 = vld [vmem:[%s1472 + $0xe8] sm:$0xff]
      %v1503 = vld [vmem:[%s1472 + $0xf0] sm:$0xff]
      %v1504 = vld [vmem:[%s1472 + $0xf8] sm:$0xff]
      %v1537 = vunpack.c.l.b16 %v1473
      %v1538 = vunpack.c.h.b16 %v1473
      %v1539 = vunpack.c.l.b16 %v1474
      %v1540 = vunpack.c.h.b16 %v1474
      %v1541 = vunpack.c.l.b16 %v1475
      %v1542 = vunpack.c.h.b16 %v1475
      %v1543 = vunpack.c.l.b16 %v1476
      %v1544 = vunpack.c.h.b16 %v1476
      %v1545 = vunpack.c.l.b16 %v1477
      %v1546 = vunpack.c.h.b16 %v1477
      %v1547 = vunpack.c.l.b16 %v1478
      %v1548 = vunpack.c.h.b16 %v1478
      %v1549 = vunpack.c.l.b16 %v1479
      %v1550 = vunpack.c.h.b16 %v1479
      %v1551 = vunpack.c.l.b16 %v1480
      %v1552 = vunpack.c.h.b16 %v1480
      %v1553 = vunpack.c.l.b16 %v1481
      %v1554 = vunpack.c.h.b16 %v1481
      %v1555 = vunpack.c.l.b16 %v1482
      %v1556 = vunpack.c.h.b16 %v1482
      %v1557 = vunpack.c.l.b16 %v1483
      %v1558 = vunpack.c.h.b16 %v1483
      %v1559 = vunpack.c.l.b16 %v1484
      %v1560 = vunpack.c.h.b16 %v1484
      %v1561 = vunpack.c.l.b16 %v1485
      %v1562 = vunpack.c.h.b16 %v1485
      %v1563 = vunpack.c.l.b16 %v1486
      %v1564 = vunpack.c.h.b16 %v1486
      %v1565 = vunpack.c.l.b16 %v1487
      %v1566 = vunpack.c.h.b16 %v1487
      %v1567 = vunpack.c.l.b16 %v1488
      %v1568 = vunpack.c.h.b16 %v1488
      %v1569 = vunpack.c.l.b16 %v1489
      %v1570 = vunpack.c.h.b16 %v1489
      %v1571 = vunpack.c.l.b16 %v1490
      %v1572 = vunpack.c.h.b16 %v1490
      %v1573 = vunpack.c.l.b16 %v1491
      %v1574 = vunpack.c.h.b16 %v1491
      %v1575 = vunpack.c.l.b16 %v1492
      %v1576 = vunpack.c.h.b16 %v1492
      %v1577 = vunpack.c.l.b16 %v1493
      %v1578 = vunpack.c.h.b16 %v1493
      %v1579 = vunpack.c.l.b16 %v1494
      %v1580 = vunpack.c.h.b16 %v1494
      %v1581 = vunpack.c.l.b16 %v1495
      %v1582 = vunpack.c.h.b16 %v1495
      %v1583 = vunpack.c.l.b16 %v1496
      %v1584 = vunpack.c.h.b16 %v1496
      %v1585 = vunpack.c.l.b16 %v1497
      %v1586 = vunpack.c.h.b16 %v1497
      %v1587 = vunpack.c.l.b16 %v1498
      %v1588 = vunpack.c.h.b16 %v1498
      %v1589 = vunpack.c.l.b16 %v1499
      %v1590 = vunpack.c.h.b16 %v1499
      %v1591 = vunpack.c.l.b16 %v1500
      %v1592 = vunpack.c.h.b16 %v1500
      %v1593 = vunpack.c.l.b16 %v1501
      %v1594 = vunpack.c.h.b16 %v1501
      %v1595 = vunpack.c.l.b16 %v1502
      %v1596 = vunpack.c.h.b16 %v1502
      %v1597 = vunpack.c.l.b16 %v1503
      %v1598 = vunpack.c.h.b16 %v1503
      %v1599 = vunpack.c.l.b16 %v1504
      %v1600 = vunpack.c.h.b16 %v1504
      %v1601 = vpack.c.b16 %v1541, %v1537
      %v1602 = vpack.c.b16 %v1542, %v1538
      %v1603 = vpack.c.b16 %v1543, %v1539
      %v1604 = vpack.c.b16 %v1544, %v1540
      %v1605 = vpack.c.b16 %v1549, %v1545
      %v1606 = vpack.c.b16 %v1550, %v1546
      %v1607 = vpack.c.b16 %v1551, %v1547
      %v1608 = vpack.c.b16 %v1552, %v1548
      %v1609 = vpack.c.b16 %v1557, %v1553
      %v1610 = vpack.c.b16 %v1558, %v1554
      %v1611 = vpack.c.b16 %v1559, %v1555
      %v1612 = vpack.c.b16 %v1560, %v1556
      %v1613 = vpack.c.b16 %v1565, %v1561
      %v1614 = vpack.c.b16 %v1566, %v1562
      %v1615 = vpack.c.b16 %v1567, %v1563
      %v1616 = vpack.c.b16 %v1568, %v1564
      %v1617 = vpack.c.b16 %v1573, %v1569
      %v1618 = vpack.c.b16 %v1574, %v1570
      %v1619 = vpack.c.b16 %v1575, %v1571
      %v1620 = vpack.c.b16 %v1576, %v1572
      %v1621 = vpack.c.b16 %v1581, %v1577
      %v1622 = vpack.c.b16 %v1582, %v1578
      %v1623 = vpack.c.b16 %v1583, %v1579
      %v1624 = vpack.c.b16 %v1584, %v1580
      %v1625 = vpack.c.b16 %v1589, %v1585
      %v1626 = vpack.c.b16 %v1590, %v1586
      %v1627 = vpack.c.b16 %v1591, %v1587
      %v1628 = vpack.c.b16 %v1592, %v1588
      %v1629 = vpack.c.b16 %v1597, %v1593
      %v1630 = vpack.c.b16 %v1598, %v1594
      %v1631 = vpack.c.b16 %v1599, %v1595
      %v1632 = vpack.c.b16 %v1600, %v1596
      %1665 = vmatprep.subr.bf16.mxu0 %v1602
      %1666 = vmatpush1.bf16.msra.mxu0 %v1601
      %1667 = vmatprep.subr.bf16.mxu0 %v1606
      %1668 = vmatpush1.bf16.msra.mxu0 %v1605
      %1669 = vmatprep.subr.bf16.mxu0 %v1610
      %1670 = vmatpush1.bf16.msra.mxu0 %v1609
      %1671 = vmatprep.subr.bf16.mxu0 %v1614
      %1672 = vmatpush1.bf16.msra.mxu0 %v1613
      %1673 = vmatprep.subr.bf16.mxu0 %v1618
      %1674 = vmatpush1.bf16.msra.mxu0 %v1617
      %1675 = vmatprep.subr.bf16.mxu0 %v1622
      %1676 = vmatpush1.bf16.msra.mxu0 %v1621
      %1677 = vmatprep.subr.bf16.mxu0 %v1626
      %1678 = vmatpush1.bf16.msra.mxu0 %v1625
      %1679 = vmatprep.subr.bf16.mxu0 %v1630
      %1680 = vmatpush1.bf16.msra.mxu0 %v1629
      %1681 = vmatprep.subr.bf16.mxu0 0
      %1682 = vmatpush1.bf16.msra.mxu0 0
      %1683 = vmatprep.subr.bf16.mxu0 0
      %1684 = vmatpush1.bf16.msra.mxu0 0
      %1685 = vmatprep.subr.bf16.mxu0 0
      %1686 = vmatpush1.bf16.msra.mxu0 0
      %1687 = vmatprep.subr.bf16.mxu0 0
      %1688 = vmatpush1.bf16.msra.mxu0 0
      %1689 = vmatprep.subr.bf16.mxu0 0
      %1690 = vmatpush1.bf16.msra.mxu0 0
      %1691 = vmatprep.subr.bf16.mxu0 0
      %1692 = vmatpush1.bf16.msra.mxu0 0
      %1693 = vmatprep.subr.bf16.mxu0 0
      %1694 = vmatpush1.bf16.msra.mxu0 0
      %1695 = vmatprep.subr.bf16.mxu0 0
      %1696 = vmatpush1.bf16.msra.mxu0 0
      %1697 = vmatprep.mubr.bf16.mxu0 0
      %1698 = vmatmul.mubr.bf16.gmra.mrb[0].mxu0 %v1471
      %v1699 = vpop.f32.mrb[0].mxu0
      %v1700 = vadd.f32 0.0, %v1699
      %v1701 = vpop.f32.mrb[0].mxu0
      %v1702 = vadd.f32 0.0, %v1701
      %v1703 = vpop.f32.mrb[0].mxu0
      %v1704 = vpop.f32.mrb[0].mxu0
      %1705 = vdwg.mxu0
      %1706 = vmatprep.subr.bf16.mxu0 %v1604
      %1707 = vmatpush1.bf16.msra.mxu0 %v1603
      %1708 = vmatprep.subr.bf16.mxu0 %v1608
      %1709 = vmatpush1.bf16.msra.mxu0 %v1607
      %1710 = vmatprep.subr.bf16.mxu0 %v1612
      %1711 = vmatpush1.bf16.msra.mxu0 %v1611
      %1712 = vmatprep.subr.bf16.mxu0 %v1616
      %1713 = vmatpush1.bf16.msra.mxu0 %v1615
      %1714 = vmatprep.subr.bf16.mxu0 %v1620
      %1715 = vmatpush1.bf16.msra.mxu0 %v1619
      %1716 = vmatprep.subr.bf16.mxu0 %v1624
      %1717 = vmatpush1.bf16.msra.mxu0 %v1623
      %1718 = vmatprep.subr.bf16.mxu0 %v1628
      %1719 = vmatpush1.bf16.msra.mxu0 %v1627
      %1720 = vmatprep.subr.bf16.mxu0 %v1632
      %1721 = vmatpush1.bf16.msra.mxu0 %v1631
      %1722 = vmatprep.subr.bf16.mxu0 0
      %1723 = vmatpush1.bf16.msra.mxu0 0
      %1724 = vmatprep.subr.bf16.mxu0 0
      %1725 = vmatpush1.bf16.msra.mxu0 0
      %1726 = vmatprep.subr.bf16.mxu0 0
      %1727 = vmatpush1.bf16.msra.mxu0 0
      %1728 = vmatprep.subr.bf16.mxu0 0
      %1729 = vmatpush1.bf16.msra.mxu0 0
      %1730 = vmatprep.subr.bf16.mxu0 0
      %1731 = vmatpush1.bf16.msra.mxu0 0
      %1732 = vmatprep.subr.bf16.mxu0 0
      %1733 = vmatpush1.bf16.msra.mxu0 0
      %1734 = vmatprep.subr.bf16.mxu0 0
      %1735 = vmatpush1.bf16.msra.mxu0 0
      %1736 = vmatprep.subr.bf16.mxu0 0
      %1737 = vmatpush1.bf16.msra.mxu0 0
      %1738 = vmatprep.mubr.bf16.mxu0 0
      %1739 = vmatmul.mubr.bf16.gmra.mrb[0].mxu0 %v1471
      %v1740 = vpop.f32.mrb[0].mxu0
      %v1741 = vadd.f32 0.0, %v1740
      %v1742 = vpop.f32.mrb[0].mxu0
      %v1743 = vadd.f32 0.0, %v1742
      %v1744 = vpop.f32.mrb[0].mxu0
      %v1745 = vpop.f32.mrb[0].mxu0
      %1746 = vdwg.mxu0
      %v1747 = vadd.f32 %v1467, %v1700
      %v1748 = vadd.f32 %v1468, %v1702
      %v1749 = vadd.f32 %v1469, %v1741
      %v1750 = vadd.f32 %v1470, %v1743
      %s1751 = scalar_lea.vmem %s3, 1280
      %v1752 = vld [vmem:[%s1751] sm:$0xff]
      %v1753 = vld [vmem:[%s1751 + $0x8] sm:$0xff]
      %v1754 = vld [vmem:[%s1751 + $0x10] sm:$0xff]
      %v1755 = vld [vmem:[%s1751 + $0x18] sm:$0xff]
      %v1756 = vld [vmem:[%s1751 + $0x20] sm:$0xff]
      %v1757 = vld [vmem:[%s1751 + $0x28] sm:$0xff]
      %v1758 = vld [vmem:[%s1751 + $0x30] sm:$0xff]
      %v1759 = vld [vmem:[%s1751 + $0x38] sm:$0xff]
      %v1760 = vld [vmem:[%s1751 + $0x40] sm:$0xff]
      %v1761 = vld [vmem:[%s1751 + $0x48] sm:$0xff]
      %v1762 = vld [vmem:[%s1751 + $0x50] sm:$0xff]
      %v1763 = vld [vmem:[%s1751 + $0x58] sm:$0xff]
      %v1764 = vld [vmem:[%s1751 + $0x60] sm:$0xff]
      %v1765 = vld [vmem:[%s1751 + $0x68] sm:$0xff]
      %v1766 = vld [vmem:[%s1751 + $0x70] sm:$0xff]
      %v1767 = vld [vmem:[%s1751 + $0x78] sm:$0xff]
      %v1768 = vld [vmem:[%s1751 + $0x80] sm:$0xff]
      %v1769 = vld [vmem:[%s1751 + $0x88] sm:$0xff]
      %v1770 = vld [vmem:[%s1751 + $0x90] sm:$0xff]
      %v1771 = vld [vmem:[%s1751 + $0x98] sm:$0xff]
      %v1772 = vld [vmem:[%s1751 + $0xa0] sm:$0xff]
      %v1773 = vld [vmem:[%s1751 + $0xa8] sm:$0xff]
      %v1774 = vld [vmem:[%s1751 + $0xb0] sm:$0xff]
      %v1775 = vld [vmem:[%s1751 + $0xb8] sm:$0xff]
      %v1776 = vld [vmem:[%s1751 + $0xc0] sm:$0xff]
      %v1777 = vld [vmem:[%s1751 + $0xc8] sm:$0xff]
      %v1778 = vld [vmem:[%s1751 + $0xd0] sm:$0xff]
      %v1779 = vld [vmem:[%s1751 + $0xd8] sm:$0xff]
      %v1780 = vld [vmem:[%s1751 + $0xe0] sm:$0xff]
      %v1781 = vld [vmem:[%s1751 + $0xe8] sm:$0xff]
      %v1782 = vld [vmem:[%s1751 + $0xf0] sm:$0xff]
      %v1783 = vld [vmem:[%s1751 + $0xf8] sm:$0xff]
      %v1785 = vunpack.c.l.b16 %v1471
      %v1786 = vpack.c.b16 %v1785, %v1785
      %v1788 = vshrl.u32 %v1786, 16
      %v1790 = vshll.u32 %v1786, 16
      %v1792 = vrot.slane %v1790, 1
      %v1793 = vor.u32 %v1788, %v1792
      %v1827 = vunpack.c.l.b16 %v1752
      %v1828 = vunpack.c.h.b16 %v1752
      %v1829 = vunpack.c.l.b16 %v1753
      %v1830 = vunpack.c.h.b16 %v1753
      %v1831 = vunpack.c.l.b16 %v1754
      %v1832 = vunpack.c.h.b16 %v1754
      %v1833 = vunpack.c.l.b16 %v1755
      %v1834 = vunpack.c.h.b16 %v1755
      %v1835 = vunpack.c.l.b16 %v1756
      %v1836 = vunpack.c.h.b16 %v1756
      %v1837 = vunpack.c.l.b16 %v1757
      %v1838 = vunpack.c.h.b16 %v1757
      %v1839 = vunpack.c.l.b16 %v1758
      %v1840 = vunpack.c.h.b16 %v1758
      %v1841 = vunpack.c.l.b16 %v1759
      %v1842 = vunpack.c.h.b16 %v1759
      %v1843 = vunpack.c.l.b16 %v1760
      %v1844 = vunpack.c.h.b16 %v1760
      %v1845 = vunpack.c.l.b16 %v1761
      %v1846 = vunpack.c.h.b16 %v1761
      %v1847 = vunpack.c.l.b16 %v1762
      %v1848 = vunpack.c.h.b16 %v1762
      %v1849 = vunpack.c.l.b16 %v1763
      %v1850 = vunpack.c.h.b16 %v1763
      %v1851 = vunpack.c.l.b16 %v1764
      %v1852 = vunpack.c.h.b16 %v1764
      %v1853 = vunpack.c.l.b16 %v1765
      %v1854 = vunpack.c.h.b16 %v1765
      %v1855 = vunpack.c.l.b16 %v1766
      %v1856 = vunpack.c.h.b16 %v1766
      %v1857 = vunpack.c.l.b16 %v1767
      %v1858 = vunpack.c.h.b16 %v1767
      %v1859 = vunpack.c.l.b16 %v1768
      %v1860 = vunpack.c.h.b16 %v1768
      %v1861 = vunpack.c.l.b16 %v1769
      %v1862 = vunpack.c.h.b16 %v1769
      %v1863 = vunpack.c.l.b16 %v1770
      %v1864 = vunpack.c.h.b16 %v1770
      %v1865 = vunpack.c.l.b16 %v1771
      %v1866 = vunpack.c.h.b16 %v1771
      %v1867 = vunpack.c.l.b16 %v1772
      %v1868 = vunpack.c.h.b16 %v1772
      %v1869 = vunpack.c.l.b16 %v1773
      %v1870 = vunpack.c.h.b16 %v1773
      %v1871 = vunpack.c.l.b16 %v1774
      %v1872 = vunpack.c.h.b16 %v1774
      %v1873 = vunpack.c.l.b16 %v1775
      %v1874 = vunpack.c.h.b16 %v1775
      %v1875 = vunpack.c.l.b16 %v1776
      %v1876 = vunpack.c.h.b16 %v1776
      %v1877 = vunpack.c.l.b16 %v1777
      %v1878 = vunpack.c.h.b16 %v1777
      %v1879 = vunpack.c.l.b16 %v1778
      %v1880 = vunpack.c.h.b16 %v1778
      %v1881 = vunpack.c.l.b16 %v1779
      %v1882 = vunpack.c.h.b16 %v1779
      %v1883 = vunpack.c.l.b16 %v1780
      %v1884 = vunpack.c.h.b16 %v1780
      %v1885 = vunpack.c.l.b16 %v1781
      %v1886 = vunpack.c.h.b16 %v1781
      %v1887 = vunpack.c.l.b16 %v1782
      %v1888 = vunpack.c.h.b16 %v1782
      %v1889 = vunpack.c.l.b16 %v1783
      %v1890 = vunpack.c.h.b16 %v1783
      %v1891 = vpack.c.b16 %v1831, %v1827
      %v1892 = vpack.c.b16 %v1832, %v1828
      %v1893 = vpack.c.b16 %v1833, %v1829
      %v1894 = vpack.c.b16 %v1834, %v1830
      %v1895 = vpack.c.b16 %v1839, %v1835
      %v1896 = vpack.c.b16 %v1840, %v1836
      %v1897 = vpack.c.b16 %v1841, %v1837
      %v1898 = vpack.c.b16 %v1842, %v1838
      %v1899 = vpack.c.b16 %v1847, %v1843
      %v1900 = vpack.c.b16 %v1848, %v1844
      %v1901 = vpack.c.b16 %v1849, %v1845
      %v1902 = vpack.c.b16 %v1850, %v1846
      %v1903 = vpack.c.b16 %v1855, %v1851
      %v1904 = vpack.c.b16 %v1856, %v1852
      %v1905 = vpack.c.b16 %v1857, %v1853
      %v1906 = vpack.c.b16 %v1858, %v1854
      %v1907 = vpack.c.b16 %v1863, %v1859
      %v1908 = vpack.c.b16 %v1864, %v1860
      %v1909 = vpack.c.b16 %v1865, %v1861
      %v1910 = vpack.c.b16 %v1866, %v1862
      %v1911 = vpack.c.b16 %v1871, %v1867
      %v1912 = vpack.c.b16 %v1872, %v1868
      %v1913 = vpack.c.b16 %v1873, %v1869
      %v1914 = vpack.c.b16 %v1874, %v1870
      %v1915 = vpack.c.b16 %v1879, %v1875
      %v1916 = vpack.c.b16 %v1880, %v1876
      %v1917 = vpack.c.b16 %v1881, %v1877
      %v1918 = vpack.c.b16 %v1882, %v1878
      %v1919 = vpack.c.b16 %v1887, %v1883
      %v1920 = vpack.c.b16 %v1888, %v1884
      %v1921 = vpack.c.b16 %v1889, %v1885
      %v1922 = vpack.c.b16 %v1890, %v1886
      %1955 = vmatprep.subr.bf16.mxu0 %v1892
      %1956 = vmatpush1.bf16.msra.mxu0 %v1891
      %1957 = vmatprep.subr.bf16.mxu0 %v1896
      %1958 = vmatpush1.bf16.msra.mxu0 %v1895
      %1959 = vmatprep.subr.bf16.mxu0 %v1900
      %1960 = vmatpush1.bf16.msra.mxu0 %v1899
      %1961 = vmatprep.subr.bf16.mxu0 %v1904
      %1962 = vmatpush1.bf16.msra.mxu0 %v1903
      %1963 = vmatprep.subr.bf16.mxu0 %v1908
      %1964 = vmatpush1.bf16.msra.mxu0 %v1907
      %1965 = vmatprep.subr.bf16.mxu0 %v1912
      %1966 = vmatpush1.bf16.msra.mxu0 %v1911
      %1967 = vmatprep.subr.bf16.mxu0 %v1916
      %1968 = vmatpush1.bf16.msra.mxu0 %v1915
      %1969 = vmatprep.subr.bf16.mxu0 %v1920
      %1970 = vmatpush1.bf16.msra.mxu0 %v1919
      %1971 = vmatprep.subr.bf16.mxu0 0
      %1972 = vmatpush1.bf16.msra.mxu0 0
      %1973 = vmatprep.subr.bf16.mxu0 0
      %1974 = vmatpush1.bf16.msra.mxu0 0
      %1975 = vmatprep.subr.bf16.mxu0 0
      %1976 = vmatpush1.bf16.msra.mxu0 0
      %1977 = vmatprep.subr.bf16.mxu0 0
      %1978 = vmatpush1.bf16.msra.mxu0 0
      %1979 = vmatprep.subr.bf16.mxu0 0
      %1980 = vmatpush1.bf16.msra.mxu0 0
      %1981 = vmatprep.subr.bf16.mxu0 0
      %1982 = vmatpush1.bf16.msra.mxu0 0
      %1983 = vmatprep.subr.bf16.mxu0 0
      %1984 = vmatpush1.bf16.msra.mxu0 0
      %1985 = vmatprep.subr.bf16.mxu0 0
      %1986 = vmatpush1.bf16.msra.mxu0 0
      %1987 = vmatprep.mubr.bf16.mxu0 0
      %1988 = vmatmul.mubr.bf16.gmra.mrb[0].mxu0 %v1793
      %v1989 = vpop.f32.mrb[0].mxu0
      %v1990 = vadd.f32 0.0, %v1989
      %v1991 = vpop.f32.mrb[0].mxu0
      %v1992 = vadd.f32 0.0, %v1991
      %v1993 = vpop.f32.mrb[0].mxu0
      %v1994 = vpop.f32.mrb[0].mxu0
      %1995 = vdwg.mxu0
      %1996 = vmatprep.subr.bf16.mxu0 %v1894
      %1997 = vmatpush1.bf16.msra.mxu0 %v1893
      %1998 = vmatprep.subr.bf16.mxu0 %v1898
      %1999 = vmatpush1.bf16.msra.mxu0 %v1897
      %2000 = vmatprep.subr.bf16.mxu0 %v1902
      %2001 = vmatpush1.bf16.msra.mxu0 %v1901
      %2002 = vmatprep.subr.bf16.mxu0 %v1906
      %2003 = vmatpush1.bf16.msra.mxu0 %v1905
      %2004 = vmatprep.subr.bf16.mxu0 %v1910
      %2005 = vmatpush1.bf16.msra.mxu0 %v1909
      %2006 = vmatprep.subr.bf16.mxu0 %v1914
      %2007 = vmatpush1.bf16.msra.mxu0 %v1913
      %2008 = vmatprep.subr.bf16.mxu0 %v1918
      %2009 = vmatpush1.bf16.msra.mxu0 %v1917
      %2010 = vmatprep.subr.bf16.mxu0 %v1922
      %2011 = vmatpush1.bf16.msra.mxu0 %v1921
      %2012 = vmatprep.subr.bf16.mxu0 0
      %2013 = vmatpush1.bf16.msra.mxu0 0
      %2014 = vmatprep.subr.bf16.mxu0 0
      %2015 = vmatpush1.bf16.msra.mxu0 0
      %2016 = vmatprep.subr.bf16.mxu0 0
      %2017 = vmatpush1.bf16.msra.mxu0 0
      %2018 = vmatprep.subr.bf16.mxu0 0
      %2019 = vmatpush1.bf16.msra.mxu0 0
      %2020 = vmatprep.subr.bf16.mxu0 0
      %2021 = vmatpush1.bf16.msra.mxu0 0
      %2022 = vmatprep.subr.bf16.mxu0 0
      %2023 = vmatpush1.bf16.msra.mxu0 0
      %2024 = vmatprep.subr.bf16.mxu0 0
      %2025 = vmatpush1.bf16.msra.mxu0 0
      %2026 = vmatprep.subr.bf16.mxu0 0
      %2027 = vmatpush1.bf16.msra.mxu0 0
      %2028 = vmatprep.mubr.bf16.mxu0 0
      %2029 = vmatmul.mubr.bf16.gmra.mrb[0].mxu0 %v1793
      %v2030 = vpop.f32.mrb[0].mxu0
      %v2031 = vadd.f32 0.0, %v2030
      %v2032 = vpop.f32.mrb[0].mxu0
      %v2033 = vadd.f32 0.0, %v2032
      %v2034 = vpop.f32.mrb[0].mxu0
      %v2035 = vpop.f32.mrb[0].mxu0
      %2036 = vdwg.mxu0
      %v2037 = vadd.f32 %v1747, %v1990
      %v2038 = vadd.f32 %v1748, %v1992
      %v2039 = vadd.f32 %v1749, %v2031
      %v2040 = vadd.f32 %v1750, %v2033
      %v2041 = vld [vmem:[%s4] sm:$0xf]
      %v2043 = vlaneseq
      %v2044 = vshrl.u32 %v2043, 7
      %v2045 = vsub.s32 0, %v2044
      %v2046 = vrot.slane %v2041, %v2045
      %v2047 = vlaneseq
      %v2048 = vshrl.u32 %v2047, 7
      %v2049 = vsub.s32 1, %v2048
      %v2050 = vrot.slane %v2041, %v2049
      %v2051 = vlaneseq
      %v2052 = vshrl.u32 %v2051, 7
      %v2053 = vsub.s32 2, %v2052
      %v2054 = vrot.slane %v2041, %v2053
      %v2055 = vlaneseq
      %v2056 = vshrl.u32 %v2055, 7
      %v2057 = vsub.s32 3, %v2056
      %v2058 = vrot.slane %v2041, %v2057
      %v2063 = vadd.f32 %v2037, %v2046
      %v2064 = vadd.f32 %v2038, %v2050
      %v2065 = vadd.f32 %v2039, %v2054
      %v2066 = vadd.f32 %v2040, %v2058
      %v2067 = vmax.f32 %v2063, 0.0
      %v2068 = vmax.f32 %v2064, 0.0
      %v2069 = vmax.f32 %v2065, 0.0
      %v2070 = vmax.f32 %v2066, 0.0
      %v2071 = vpack.c.bf16 %v2067, %v2067
      %v2072 = vpack.c.bf16 %v2068, %v2068
      %v2073 = vpack.c.bf16 %v2069, %v2069
      %v2074 = vpack.c.bf16 %v2070, %v2070
      %v2079 = vcombine.low %v2071, %v2072
      %v2080 = vcombine.low %v2073, %v2074
      %v2082 = vunpack.c.l.s4 1983009808
      %v2083 = vunpack.c.0.s8 %v2082
      %v2084 = vlaneseq
      %v2085 = vshrl.u32 %v2084, 7
      %v2086 = vsub.s32 %v2083, %v2085
      %v2087 = vrot.slane %v2079, %v2086
      %v2089 = vunpack.c.l.s4 1983009808
      %v2090 = vunpack.c.0.s8 %v2089
      %v2091 = vlaneseq
      %v2092 = vshrl.u32 %v2091, 7
      %v2093 = vsub.s32 %v2090, %v2092
      %v2094 = vrot.slane %v2080, %v2093
      %v2095 = vcombine.low %v2087, %v2094
      %2097 = vst [vmem:[%s338] sm:$0xff] %v2095
      %p2098 = scmp.lt.s32.totalorder %s20, 1
      %s2099 = scalar_select %p2098, %s20, 1
      %p2100 = scmp.lt.s32.totalorder %s21, 3
      %s2101 = scalar_select %p2100, %s21, 3
      %s2102 = smul.addr %s2101, 4
      %s2103 = smul.addr %s2099, 16
      %s2104 = sadd.s32 %s2102, %s2103
      %s2105 = smul.addr %s2104, 2
      %s2106 = scalar_lea.vmem %s5, %s2105
      // Predicated region
      $region41: #{multitask_forward.4} parent=39 // pred_check
        %p2107 = pneg %p176
      $region42: #{multitask_forward.4} parent=39 // pred_check_branch
        %2109 = sbr.rel (%p2107) target = $region44
      $region43: #{multitask_forward.4} parent=39 // pred_region
        _
      $region44: #{multitask_forward.4} parent=39 // pred_fallthru
        _
    $region40: #{multitask_forward.4} parent=5 // pred_fallthru
      _
    %p2110 = scmp.le.s32.totalorder 2, %s11
    // Predicated region
    $region45: #{multitask_forward.4} parent=5 // pred_check
      %p2111 = pneg %p2110
    $region46: #{multitask_forward.4} parent=5 // pred_check_branch
      %2113 = sbr.rel (%p2111) target = $region48
    $region47: #{multitask_forward.4} parent=5 // pred_region
      %s2114 = ssub.s32 %s11, 2
      // Predicated region
      $region49: #{multitask_forward.4} parent=47 // pred_check
        %p2115 = pneg %p182
      $region50: #{multitask_forward.4} parent=47 // pred_check_branch
        %2117 = sbr.rel (%p2115) target = $region52
      $region51: #{multitask_forward.4} parent=47 // pred_region
        %p2118 = scmp.lt.s32.totalorder %s22, 1
        %s2119 = scalar_select %p2118, %s22, 1
        %p2120 = scmp.lt.s32.totalorder %s23, 3
        %s2121 = scalar_select %p2120, %s23, 3
        %s2122 = smul.addr %s2121, 4
        %s2123 = smul.addr %s2119, 16
        %s2124 = sadd.s32 %s2122, %s2123
        %s2125 = smul.addr %s2124, 2
        %s2126 = scalar_lea.vmem %s5, %s2125
      $region52: #{multitask_forward.4} parent=47 // pred_fallthru
        _
    $region48: #{multitask_forward.4} parent=5 // pred_fallthru
      _
  $region6: #{multitask_forward.4} parent=0 // loop_footer
    %s15 = sadd.s32 1, %s11
  $region7: #{multitask_forward.4} parent=0 // loop_footer_branch
    %10 = sbr.rel target = $region3
  $region8: #{multitask_forward.4} parent=0 // loop_exit
    _

// kernel: multitask_forward.5
$region0: #{multitask_forward.5}
  #allocation0 [shape = 'u32[]', space=smem, size = 0x4, offset = 0x4, fixed_abs, tag = 'smem constant byte address 0x4 - core index']
  #allocation1 [shape = 'u32[144,128]{1,0:T(1,128)}', space=vmem, size = 0x12000, scoped, tag = 'internal scratch']
  #allocation2 [shape = 'f32[1,512]{1,0:T(1,128)}', space=vmem, size = 0x800, scoped, tag = 'scratch operand']
  #allocation3 [shape = 'f32[1,1]{1,0:T(1,128)S(1)}', space=vmem, size = 0x200, scoped, tag = 'scoped memory for multitask_forward.5']
  %s0 = inlined_call_operand.vmem [shape: bf16[2,16,512], index: 0, kind: input, shape index: {}]
  %s1 = inlined_call_operand.vmem [shape: bf16[512,1], index: 1, kind: input, shape index: {}]
  %s2 = inlined_call_operand.<no memory space> [shape: f32[1,1], index: 2, kind: input, shape index: {}]
  %s3 = inlined_call_operand.vmem [shape: f32[512,3], index: 3, kind: input, shape index: {}]
  %s4 = inlined_call_operand.vmem [shape: f32[1,3], index: 4, kind: input, shape index: {}]
  %s5 = inlined_call_operand.hbm [shape: f32[2,1,3], index: 5, kind: output, shape index: {0}]
  %s6 = inlined_call_operand.vmem [shape: f32[2,16,1], index: 6, kind: output, shape index: {1}]
  %7 = xla_tuple %s5, %s6
  %s8 = sld [smem:[#allocation0]]
  $region69: #{multitask_forward.5} parent=0
    _
  %s10 = ssub.s32 1, %s8
  %s11 = scalar_select 0, %s10, %s8
  %v12 = vstv %s2
  %13 = vst [vmem:[#allocation3] sm:$0x1] %v12
  $region1: #{multitask_forward.5} parent=0
    #allocation4 [shape = 'u8[1024]{0}', space=vmem, size = 0x400, scoped, tag = 'output window, operand 0']
    #allocation5 [shape = 's32[2]{0}', space=sflag, size = 0x8, scoped, tag = 'scoped memory for multitask_forward.5']
    %14 = vsyncpa [#allocation5], 0
    %s15 = scalar_lea.sflag [#allocation5], 1
    %16 = vsyncpa %s15, 0
    loop: start=0, step=1, limit=4
    $region2: #{multitask_forward.5} parent=1 // loop_pre_header
      _
    $region3: #{multitask_forward.5} parent=1 // loop_header
      %s18 = sphi 0, %s22
      %p19 = scmp.ge.s32.totalorder %s18, 4
      %s25 = sphi 0, %s37
      %s26 = sphi 0, %s33
      %s27 = sphi 0, %s25
      %s28 = sphi 0, %s26
      %s29 = sphi 0, %s27
      %s30 = sphi 0, %s28
      %s42 = sphi 0, %s44
      %s45 = sphi 0, %s42
      %s46 = sphi 0, %s45
      %s62 = sphi 0, %s46
      %s66 = sphi 0, %s66
      %s68 = sphi 0, %s66
      %s69 = sphi 0, %s68
      %s83 = sphi 0, %s69
      %s87 = sphi 0, %s87
      %s89 = sphi 0, %s87
      %s90 = sphi 0, %s89
      %s104 = sphi 0, %s90
      %s108 = sphi 0, %s108
      %s110 = sphi 0, %s108
      %s111 = sphi 0, %s110
      %s125 = sphi 0, %s111
      %s129 = sphi 0, %s129
      %s131 = sphi 0, %s129
      %s132 = sphi 0, %s131
      %s146 = sphi 0, %s132
      %s152 = sphi 0, %s154
      %s155 = sphi 0, %s152
      %s156 = sphi 0, %s155
      %s172 = sphi 0, %s156
      %s178 = sphi 0, %s180
      %s181 = sphi 0, %s178
      %s182 = sphi 0, %s181
      %s198 = sphi 0, %s182
    $region4: #{multitask_forward.5} parent=1 // loop_header_branch
      %21 = sbr.rel (%p19) target = $region8
    $region5: #{multitask_forward.5} parent=1 // loop_body
      %s23 = ssub.s32 %s18, 1
      %s24 = ssub.s32 %s18, 2
      %s31 = sadd.s32 1, %s26
      %p32 = scmp.ge.s32.totalorder %s31, 1
      %s33 = scalar_select %p32, 0, %s31
      %s34 = sadd.s32 1, %s25
      %s35 = scalar_select %p32, %s34, %s25
      %p36 = scmp.ge.s32.totalorder %s35, 2
      %s37 = scalar_select %p36, 0, %s35
      %s38 = ssub.s32 %s25, %s37
      %s39 = ssub.s32 %s26, %s33
      %s40 = sor.u32 %s38, %s39
      %p41 = scmp.eq.s32.totalorder %s40, 0
      %s43 = sadd.s32 %s42, 1
      %s44 = scalar_select %p41, %s42, %s43
      %p47 = pneg %p41
      %p48 = scmp.eq.s32.totalorder %s18, 1
      %p49 = por %p47, %p48
      %p50 = scmp.ne.s32.totalorder %s42, %s45
      %p51 = scmp.eq.s32.totalorder %s18, 0
      %p52 = por %p50, %p51
      %p53 = scmp.ne.s32.totalorder %s42, %s45
      %p54 = scmp.eq.s32.totalorder %s23, 1
      %p55 = por %p53, %p54
      %p56 = scmp.ne.s32.totalorder %s45, %s46
      %p57 = scmp.eq.s32.totalorder %s23, 0
      %p58 = por %p56, %p57
      %p59 = scmp.ne.s32.totalorder %s45, %s46
      %p60 = scmp.eq.s32.totalorder %s24, 1
      %p61 = por %p59, %p60
      %p63 = scmp.ne.s32.totalorder %s46, %s62
      %p64 = scmp.eq.s32.totalorder %s24, 0
      %p65 = por %p63, %p64
      %s67 = sadd.s32 %s66, 1
      %p70 = scmp.eq.s32.totalorder %s18, 1
      %p71 = scmp.ne.s32.totalorder %s66, %s68
      %p72 = scmp.eq.s32.totalorder %s18, 0
      %p73 = por %p71, %p72
      %p74 = scmp.ne.s32.totalorder %s66, %s68
      %p75 = scmp.eq.s32.totalorder %s23, 1
      %p76 = por %p74, %p75
      %p77 = scmp.ne.s32.totalorder %s68, %s69
      %p78 = scmp.eq.s32.totalorder %s23, 0
      %p79 = por %p77, %p78
      %p80 = scmp.ne.s32.totalorder %s68, %s69
      %p81 = scmp.eq.s32.totalorder %s24, 1
      %p82 = por %p80, %p81
      %p84 = scmp.ne.s32.totalorder %s69, %s83
      %p85 = scmp.eq.s32.totalorder %s24, 0
      %p86 = por %p84, %p85
      %s88 = sadd.s32 %s87, 1
      %p91 = scmp.eq.s32.totalorder %s18, 1
      %p92 = scmp.ne.s32.totalorder %s87, %s89
      %p93 = scmp.eq.s32.totalorder %s18, 0
      %p94 = por %p92, %p93
      %p95 = scmp.ne.s32.totalorder %s87, %s89
      %p96 = scmp.eq.s32.totalorder %s23, 1
      %p97 = por %p95, %p96
      %p98 = scmp.ne.s32.totalorder %s89, %s90
      %p99 = scmp.eq.s32.totalorder %s23, 0
      %p100 = por %p98, %p99
      %p101 = scmp.ne.s32.totalorder %s89, %s90
      %p102 = scmp.eq.s32.totalorder %s24, 1
      %p103 = por %p101, %p102
      %p105 = scmp.ne.s32.totalorder %s90, %s104
      %p106 = scmp.eq.s32.totalorder %s24, 0
      %p107 = por %p105, %p106
      %s109 = sadd.s32 %s108, 1
      %p112 = scmp.eq.s32.totalorder %s18, 1
      %p113 = scmp.ne.s32.totalorder %s108, %s110
      %p114 = scmp.eq.s32.totalorder %s18, 0
      %p115 = por %p113, %p114
      %p116 = scmp.ne.s32.totalorder %s108, %s110
      %p117 = scmp.eq.s32.totalorder %s23, 1
      %p118 = por %p116, %p117
      %p119 = scmp.ne.s32.totalorder %s110, %s111
      %p120 = scmp.eq.s32.totalorder %s23, 0
      %p121 = por %p119, %p120
      %p122 = scmp.ne.s32.totalorder %s110, %s111
      %p123 = scmp.eq.s32.totalorder %s24, 1
      %p124 = por %p122, %p123
      %p126 = scmp.ne.s32.totalorder %s111, %s125
      %p127 = scmp.eq.s32.totalorder %s24, 0
      %p128 = por %p126, %p127
      %s130 = sadd.s32 %s129, 1
      %p133 = scmp.eq.s32.totalorder %s18, 1
      %p134 = scmp.ne.s32.totalorder %s129, %s131
      %p135 = scmp.eq.s32.totalorder %s18, 0
      %p136 = por %p134, %p135
      %p137 = scmp.ne.s32.totalorder %s129, %s131
      %p138 = scmp.eq.s32.totalorder %s23, 1
      %p139 = por %p137, %p138
      %p140 = scmp.ne.s32.totalorder %s131, %s132
      %p141 = scmp.eq.s32.totalorder %s23, 0
      %p142 = por %p140, %p141
      %p143 = scmp.ne.s32.totalorder %s131, %s132
      %p144 = scmp.eq.s32.totalorder %s24, 1
      %p145 = por %p143, %p144
      %p147 = scmp.ne.s32.totalorder %s132, %s146
      %p148 = scmp.eq.s32.totalorder %s24, 0
      %p149 = por %p147, %p148
      %s150 = ssub.s32 %s25, %s37
      %p151 = scmp.eq.s32.totalorder %s150, 0
      %s153 = sadd.s32 %s152, 1
      %s154 = scalar_select %p151, %s152, %s153
      %p157 = pneg %p151
      %p158 = scmp.eq.s32.totalorder %s18, 1
      %p159 = por %p157, %p158
      %p160 = scmp.ne.s32.totalorder %s152, %s155
      %p161 = scmp.eq.s32.totalorder %s18, 0
      %p162 = por %p160, %p161
      %p163 = scmp.ne.s32.totalorder %s152, %s155
      %p164 = scmp.eq.s32.totalorder %s23, 1
      %p165 = por %p163, %p164
      %p166 = scmp.ne.s32.totalorder %s155, %s156
      %p167 = scmp.eq.s32.totalorder %s23, 0
      %p168 = por %p166, %p167
      %p169 = scmp.ne.s32.totalorder %s155, %s156
      %p170 = scmp.eq.s32.totalorder %s24, 1
      %p171 = por %p169, %p170
      %p173 = scmp.ne.s32.totalorder %s156, %s172
      %p174 = scmp.eq.s32.totalorder %s24, 0
      %p175 = por %p173, %p174
      %s176 = ssub.s32 %s25, %s37
      %p177 = scmp.eq.s32.totalorder %s176, 0
      %s179 = sadd.s32 %s178, 1
      %s180 = scalar_select %p177, %s178, %s179
      %p183 = pneg %p177
      %p184 = scmp.eq.s32.totalorder %s18, 1
      %p185 = por %p183, %p184
      %p186 = scmp.ne.s32.totalorder %s178, %s181
      %p187 = scmp.eq.s32.totalorder %s18, 0
      %p188 = por %p186, %p187
      %p189 = scmp.ne.s32.totalorder %s178, %s181
      %p190 = scmp.eq.s32.totalorder %s23, 1
      %p191 = por %p189, %p190
      %p192 = scmp.ne.s32.totalorder %s181, %s182
      %p193 = scmp.eq.s32.totalorder %s23, 0
      %p194 = por %p192, %p193
      %p195 = scmp.ne.s32.totalorder %s181, %s182
      %p196 = scmp.eq.s32.totalorder %s24, 1
      %p197 = por %p195, %p196
      %p199 = scmp.ne.s32.totalorder %s182, %s198
      %p200 = scmp.eq.s32.totalorder %s24, 0
      %p201 = por %p199, %p200
      %p202 = scmp.le.s32.totalorder 1, %s18
      %p203 = scmp.lt.s32.totalorder %s18, 3
      %p204 = pnand %p202, %p203
      %p205 = pneg %p204
      // Predicated region
      $region9: #{multitask_forward.5} parent=5 // pred_check
        _
      $region10: #{multitask_forward.5} parent=5 // pred_check_branch
        %207 = sbr.rel (%p204) target = $region12
      $region11: #{multitask_forward.5} parent=5 // pred_region
        %s208 = ssub.s32 %s18, 1
        // Predicated region
        $region13: #{multitask_forward.5} parent=11 // pred_check
          %p209 = pneg %p79
        $region14: #{multitask_forward.5} parent=11 // pred_check_branch
          %211 = sbr.rel (%p209) target = $region16
        $region15: #{multitask_forward.5} parent=11 // pred_region
          _
        $region16: #{multitask_forward.5} parent=11 // pred_fallthru
          _
        // Predicated region
        $region17: #{multitask_forward.5} parent=11 // pred_check
          %p212 = pneg %p100
        $region18: #{multitask_forward.5} parent=11 // pred_check_branch
          %214 = sbr.rel (%p212) target = $region20
        $region19: #{multitask_forward.5} parent=11 // pred_region
          _
        $region20: #{multitask_forward.5} parent=11 // pred_fallthru
          _
        // Predicated region
        $region21: #{multitask_forward.5} parent=11 // pred_check
          %p215 = pneg %p121
        $region22: #{multitask_forward.5} parent=11 // pred_check_branch
          %217 = sbr.rel (%p215) target = $region24
        $region23: #{multitask_forward.5} parent=11 // pred_region
          _
        $region24: #{multitask_forward.5} parent=11 // pred_fallthru
          _
        // Predicated region
        $region25: #{multitask_forward.5} parent=11 // pred_check
          %p218 = pneg %p142
        $region26: #{multitask_forward.5} parent=11 // pred_check_branch
          %220 = sbr.rel (%p218) target = $region28
        $region27: #{multitask_forward.5} parent=11 // pred_region
          _
        $region28: #{multitask_forward.5} parent=11 // pred_fallthru
          _
      $region12: #{multitask_forward.5} parent=5 // pred_fallthru
        _
      %p221 = scmp.lt.s32.totalorder %s18, 2
      // Predicated region
      $region29: #{multitask_forward.5} parent=5 // pred_check
        %p222 = pneg %p221
      $region30: #{multitask_forward.5} parent=5 // pred_check_branch
        %224 = sbr.rel (%p222) target = $region32
      $region31: #{multitask_forward.5} parent=5 // pred_region
        // Predicated region
        $region33: #{multitask_forward.5} parent=31 // pred_check
          %p225 = pneg %p52
        $region34: #{multitask_forward.5} parent=31 // pred_check_branch
          %227 = sbr.rel (%p225) target = $region36
        $region35: #{multitask_forward.5} parent=31 // pred_region
          %s228 = smul.u32 2, %s26
          %p229 = scmp.lt.s32.totalorder %s25, 1
          %s230 = scalar_select %p229, %s25, 1
          %p231 = scmp.lt.s32.totalorder %s228, 1
          %s232 = scalar_select %p231, %s228, 1
          %s233 = smul.addr %s232, 4
          %s234 = smul.addr %s230, 8
          %s235 = sadd.s32 %s233, %s234
          %s236 = smul.addr %s235, 4
          %s237 = scalar_lea.vmem %s0, %s236
          %s238 = smul.u32 2, %s26
        $region36: #{multitask_forward.5} parent=31 // pred_fallthru
          _
      $region32: #{multitask_forward.5} parent=5 // pred_fallthru
        _
      %p239 = scmp.le.s32.totalorder 1, %s18
      %p240 = scmp.lt.s32.totalorder %s18, 3
      %p241 = pnand %p239, %p240
      %p242 = pneg %p241
      // Predicated region
      $region37: #{multitask_forward.5} parent=5 // pred_check
        _
      $region38: #{multitask_forward.5} parent=5 // pred_check_branch
        %244 = sbr.rel (%p241) target = $region40
      $region39: #{multitask_forward.5} parent=5 // pred_region
        %s245 = ssub.s32 %s18, 1
        %s246 = smul.u32 2, %s28
        %p247 = scmp.lt.s32.totalorder %s27, 1
        %s248 = scalar_select %p247, %s27, 1
        %p249 = scmp.lt.s32.totalorder %s246, 1
        %s250 = scalar_select %p249, %s246, 1
        %s251 = smul.addr %s250, 4
        %s252 = smul.addr %s248, 8
        %s253 = sadd.s32 %s251, %s252
        %s254 = smul.addr %s253, 4
        %s255 = scalar_lea.vmem %s0, %s254
        %p256 = pneg %p58
        %p257 = pneg %p55
        %p258 = pneg %p79
        %p259 = pneg %p76
        %p260 = pneg %p100
        %p261 = pneg %p97
        %p262 = pneg %p121
        %p263 = pneg %p118
        %p264 = pneg %p142
        %p265 = pneg %p139
        %p266 = pneg %p168
        %p267 = pneg %p165
        %s268 = sand.u32 %s155, 1
        %s269 = scalar_lea.sflag [#allocation5], %s268
        %s270 = sand.u32 %s155, 1
        %s271 = scalar_lea.vmem [#allocation4], %s270
        %p272 = pneg %p194
        %p273 = pneg %p191
        %p274 = scmp.lt.s32.totalorder %s27, 1
        %s275 = scalar_select %p274, %s27, 1
        %s276 = smul.addr %s275, 2
        %s277 = smul.addr %s276, 8
        %s278 = scalar_lea.vmem %s6, %s277
        %s279 = smul.u32 2, %s28
        %p280 = scmp.lt.s32.totalorder %s27, 1
        %s281 = scalar_select %p280, %s27, 1
        %p282 = scmp.lt.s32.totalorder %s279, 1
        %s283 = scalar_select %p282, %s279, 1
        %s284 = smul.addr %s283, 4
        %s285 = smul.addr %s281, 8
        %s286 = sadd.s32 %s284, %s285
        %s287 = smul.addr %s286, 4
        %s288 = scalar_lea.vmem %s0, %s287
        %s289 = smul.u32 2, %s28
        %p290 = scmp.lt.s32.totalorder %s27, 1
        %s291 = scalar_select %p290, %s27, 1
        %s292 = smul.addr %s291, 2
        %s293 = smul.addr %s292, 8
        %s294 = scalar_lea.vmem %s6, %s293
        %p296 = scmp.eq.s32.totalorder %s28, 0
        // Predicated region
        $region41: #{multitask_forward.5} parent=39 // pred_check
          %p297 = pneg %p296
        $region42: #{multitask_forward.5} parent=39 // pred_check_branch
          %299 = sbr.rel (%p297) target = $region44
        $region43: #{multitask_forward.5} parent=39 // pred_region
          %v300 = vlaneseq
          %vm301 = vcmp.ge.s32.totalorder %v300, 0
          %vm302 = vcmp.lt.s32.totalorder %v300, 512
          %vm303 = vmand %vm301, %vm302
          %304 = vst.msk [vmem:[#allocation2] sm:$0xf] %vm303, 0.0
        $region44: #{multitask_forward.5} parent=39 // pred_fallthru
          _
        %v305 = vld [vmem:[%s288] sm:$0xff]
        %v306 = vld [vmem:[%s288 + $0x8] sm:$0xff]
        %v307 = vld [vmem:[%s288 + $0x10] sm:$0xff]
        %v308 = vld [vmem:[%s288 + $0x18] sm:$0xff]
        %v309 = vld [vmem:[#allocation2] sm:$0xf]
        %v310 = vunpack.c.l.bf16 %v305
        %v311 = vunpack.c.h.bf16 %v305
        %v312 = vunpack.c.l.bf16 %v306
        %v313 = vunpack.c.h.bf16 %v306
        %v314 = vunpack.c.l.bf16 %v307
        %v315 = vunpack.c.h.bf16 %v307
        %v316 = vunpack.c.l.bf16 %v308
        %v317 = vunpack.c.h.bf16 %v308
        %v318 = vadd.f32 %v310, %v314
        %v319 = vrot.slane %v318, 4
        %v320 = vadd.f32 %v318, %v319
        %v321 = vrot.slane %v320, 2
        %v322 = vadd.f32 %v320, %v321
        %v323 = vrot.slane %v322, 1
        %v324 = vadd.f32 %v322, %v323
        %v325 = vadd.f32 %v311, %v315
        %v326 = vrot.slane %v325, 4
        %v327 = vadd.f32 %v325, %v326
        %v328 = vrot.slane %v327, 2
        %v329 = vadd.f32 %v327, %v328
        %v330 = vrot.slane %v329, 1
        %v331 = vadd.f32 %v329, %v330
        %v332 = vadd.f32 %v312, %v316
        %v333 = vrot.slane %v332, 4
        %v334 = vadd.f32 %v332, %v333
        %v335 = vrot.slane %v334, 2
        %v336 = vadd.f32 %v334, %v335
        %v337 = vrot.slane %v336, 1
        %v338 = vadd.f32 %v336, %v337
        %v339 = vadd.f32 %v313, %v317
        %v340 = vrot.slane %v339, 4
        %v341 = vadd.f32 %v339, %v340
        %v342 = vrot.slane %v341, 2
        %v343 = vadd.f32 %v341, %v342
        %v344 = vrot.slane %v343, 1
        %v345 = vadd.f32 %v343, %v344
        %v350 = vcombine.low %v324, %v331
        %v351 = vcombine.low %v338, %v345
        %v353 = vunpack.c.l.s4 1966171168
        %v354 = vunpack.c.0.s8 %v353
        %v355 = vlaneseq
        %v356 = vshrl.u32 %v355, 7
        %v357 = vsub.s32 %v354, %v356
        %v358 = vrot.slane %v350, %v357
        %v360 = vunpack.c.l.s4 1966171168
        %v361 = vunpack.c.0.s8 %v360
        %v362 = vlaneseq
        %v363 = vshrl.u32 %v362, 7
        %v364 = vsub.s32 %v361, %v363
        %v365 = vrot.slane %v351, %v364
        %v366 = vcombine.low %v358, %v365
        %v368 = vunpack.c.l.s4 1966171168
        %v369 = vunpack.c.0.s8 %v368
        %v370 = vlaneseq
        %v371 = vshrl.u32 %v370, 7
        %v372 = vsub.s32 %v369, %v371
        %v373 = vrot.slane %v366, %v372
        %v375 = vadd.f32 %v309, %v373
        %v376 = vlaneseq
        %vm377 = vcmp.ge.s32.totalorder %v376, 0
        %vm378 = vcmp.lt.s32.totalorder %v376, 512
        %vm379 = vmand %vm377, %vm378
        %380 = vst.msk [vmem:[#allocation2] sm:$0xf] %vm379, %v375
        %v381 = vld [vmem:[%s1] sm:$0xf]
        %v382 = vld [vmem:[%s1 + $0x4] sm:$0xf]
        %v383 = vld [vmem:[%s1 + $0x8] sm:$0xf]
        %v384 = vld [vmem:[%s1 + $0xc] sm:$0xf]
        %v385 = vld [vmem:[%s1 + $0x10] sm:$0xf]
        %v386 = vld [vmem:[%s1 + $0x14] sm:$0xf]
        %v387 = vld [vmem:[%s1 + $0x18] sm:$0xf]
        %v388 = vld [vmem:[%s1 + $0x1c] sm:$0xf]
        %v389 = vld [vmem:[%s1 + $0x20] sm:$0xf]
        %v390 = vld [vmem:[%s1 + $0x24] sm:$0xf]
        %v391 = vld [vmem:[%s1 + $0x28] sm:$0xf]
        %v392 = vld [vmem:[%s1 + $0x2c] sm:$0xf]
        %v393 = vld [vmem:[%s1 + $0x30] sm:$0xf]
        %v394 = vld [vmem:[%s1 + $0x34] sm:$0xf]
        %v395 = vld [vmem:[%s1 + $0x38] sm:$0xf]
        %v396 = vld [vmem:[%s1 + $0x3c] sm:$0xf]
        %v397 = vld [vmem:[%s1 + $0x40] sm:$0xf]
        %v398 = vld [vmem:[%s1 + $0x44] sm:$0xf]
        %v399 = vld [vmem:[%s1 + $0x48] sm:$0xf]
        %v400 = vld [vmem:[%s1 + $0x4c] sm:$0xf]
        %v401 = vld [vmem:[%s1 + $0x50] sm:$0xf]
        %v402 = vld [vmem:[%s1 + $0x54] sm:$0xf]
        %v403 = vld [vmem:[%s1 + $0x58] sm:$0xf]
        %v404 = vld [vmem:[%s1 + $0x5c] sm:$0xf]
        %v405 = vld [vmem:[%s1 + $0x60] sm:$0xf]
        %v406 = vld [vmem:[%s1 + $0x64] sm:$0xf]
        %v407 = vld [vmem:[%s1 + $0x68] sm:$0xf]
        %v408 = vld [vmem:[%s1 + $0x6c] sm:$0xf]
        %v409 = vld [vmem:[%s1 + $0x70] sm:$0xf]
        %v410 = vld [vmem:[%s1 + $0x74] sm:$0xf]
        %v411 = vld [vmem:[%s1 + $0x78] sm:$0xf]
        %v412 = vld [vmem:[%s1 + $0x7c] sm:$0xf]
        %v413 = vld [vmem:[%s1 + $0x80] sm:$0xf]
        %v414 = vld [vmem:[%s1 + $0x84] sm:$0xf]
        %v415 = vld [vmem:[%s1 + $0x88] sm:$0xf]
        %v416 = vld [vmem:[%s1 + $0x8c] sm:$0xf]
        %v417 = vld [vmem:[%s1 + $0x90] sm:$0xf]
        %v418 = vld [vmem:[%s1 + $0x94] sm:$0xf]
        %v419 = vld [vmem:[%s1 + $0x98] sm:$0xf]
        %v420 = vld [vmem:[%s1 + $0x9c] sm:$0xf]
        %v421 = vld [vmem:[%s1 + $0xa0] sm:$0xf]
        %v422 = vld [vmem:[%s1 + $0xa4] sm:$0xf]
        %v423 = vld [vmem:[%s1 + $0xa8] sm:$0xf]
        %v424 = vld [vmem:[%s1 + $0xac] sm:$0xf]
        %v425 = vld [vmem:[%s1 + $0xb0] sm:$0xf]
        %v426 = vld [vmem:[%s1 + $0xb4] sm:$0xf]
        %v427 = vld [vmem:[%s1 + $0xb8] sm:$0xf]
        %v428 = vld [vmem:[%s1 + $0xbc] sm:$0xf]
        %v429 = vld [vmem:[%s1 + $0xc0] sm:$0xf]
        %v430 = vld [vmem:[%s1 + $0xc4] sm:$0xf]
        %v431 = vld [vmem:[%s1 + $0xc8] sm:$0xf]
        %v432 = vld [vmem:[%s1 + $0xcc] sm:$0xf]
        %v433 = vld [vmem:[%s1 + $0xd0] sm:$0xf]
        %v434 = vld [vmem:[%s1 + $0xd4] sm:$0xf]
        %v435 = vld [vmem:[%s1 + $0xd8] sm:$0xf]
        %v436 = vld [vmem:[%s1 + $0xdc] sm:$0xf]
        %v437 = vld [vmem:[%s1 + $0xe0] sm:$0xf]
        %v438 = vld [vmem:[%s1 + $0xe4] sm:$0xf]
        %v439 = vld [vmem:[%s1 + $0xe8] sm:$0xf]
        %v440 = vld [vmem:[%s1 + $0xec] sm:$0xf]
        %v441 = vld [vmem:[%s1 + $0xf0] sm:$0xf]
        %v442 = vld [vmem:[%s1 + $0xf4] sm:$0xf]
        %v443 = vld [vmem:[%s1 + $0xf8] sm:$0xf]
        %v444 = vld [vmem:[%s1 + $0xfc] sm:$0xf]
        %v445 = vld [vmem:[#allocation3] sm:$0x1]
        %v447 = vlaneseq
        %v448 = vshrl.u32 %v447, 7
        %v449 = vsub.s32 0, %v448
        %v450 = vrot.slane %v445, %v449
        %v456 = vunpack.c.l.b16 %v305
        %v457 = vunpack.c.h.b16 %v305
        %v458 = vunpack.c.l.b16 %v306
        %v459 = vunpack.c.h.b16 %v306
        %v460 = vunpack.c.l.b16 %v307
        %v461 = vunpack.c.h.b16 %v307
        %v462 = vunpack.c.l.b16 %v308
        %v463 = vunpack.c.h.b16 %v308
        %v464 = vpack.c.b16 %v460, %v456
        %v465 = vpack.c.b16 %v461, %v457
        %v466 = vpack.c.b16 %v462, %v458
        %v467 = vpack.c.b16 %v463, %v459
        %v536 = vunpack.c.l.b16 %v381
        %v537 = vunpack.c.l.b16 %v382
        %v538 = vunpack.c.l.b16 %v383
        %v539 = vunpack.c.l.b16 %v384
        %v540 = vunpack.c.l.b16 %v385
        %v541 = vunpack.c.l.b16 %v386
        %v542 = vunpack.c.l.b16 %v387
        %v543 = vunpack.c.l.b16 %v388
        %v544 = vunpack.c.l.b16 %v389
        %v545 = vunpack.c.l.b16 %v390
        %v546 = vunpack.c.l.b16 %v391
        %v547 = vunpack.c.l.b16 %v392
        %v548 = vunpack.c.l.b16 %v393
        %v549 = vunpack.c.l.b16 %v394
        %v550 = vunpack.c.l.b16 %v395
        %v551 = vunpack.c.l.b16 %v396
        %v552 = vunpack.c.l.b16 %v397
        %v553 = vunpack.c.l.b16 %v398
        %v554 = vunpack.c.l.b16 %v399
        %v555 = vunpack.c.l.b16 %v400
        %v556 = vunpack.c.l.b16 %v401
        %v557 = vunpack.c.l.b16 %v402
        %v558 = vunpack.c.l.b16 %v403
        %v559 = vunpack.c.l.b16 %v404
        %v560 = vunpack.c.l.b16 %v405
        %v561 = vunpack.c.l.b16 %v406
        %v562 = vunpack.c.l.b16 %v407
        %v563 = vunpack.c.l.b16 %v408
        %v564 = vunpack.c.l.b16 %v409
        %v565 = vunpack.c.l.b16 %v410
        %v566 = vunpack.c.l.b16 %v411
        %v567 = vunpack.c.l.b16 %v412
        %v568 = vunpack.c.l.b16 %v413
        %v569 = vunpack.c.l.b16 %v414
        %v570 = vunpack.c.l.b16 %v415
        %v571 = vunpack.c.l.b16 %v416
        %v572 = vunpack.c.l.b16 %v417
        %v573 = vunpack.c.l.b16 %v418
        %v574 = vunpack.c.l.b16 %v419
        %v575 = vunpack.c.l.b16 %v420
        %v576 = vunpack.c.l.b16 %v421
        %v577 = vunpack.c.l.b16 %v422
        %v578 = vunpack.c.l.b16 %v423
        %v579 = vunpack.c.l.b16 %v424
        %v580 = vunpack.c.l.b16 %v425
        %v581 = vunpack.c.l.b16 %v426
        %v582 = vunpack.c.l.b16 %v427
        %v583 = vunpack.c.l.b16 %v428
        %v584 = vunpack.c.l.b16 %v429
        %v585 = vunpack.c.l.b16 %v430
        %v586 = vunpack.c.l.b16 %v431
        %v587 = vunpack.c.l.b16 %v432
        %v588 = vunpack.c.l.b16 %v433
        %v589 = vunpack.c.l.b16 %v434
        %v590 = vunpack.c.l.b16 %v435
        %v591 = vunpack.c.l.b16 %v436
        %v592 = vunpack.c.l.b16 %v437
        %v593 = vunpack.c.l.b16 %v438
        %v594 = vunpack.c.l.b16 %v439
        %v595 = vunpack.c.l.b16 %v440
        %v596 = vunpack.c.l.b16 %v441
        %v597 = vunpack.c.l.b16 %v442
        %v598 = vunpack.c.l.b16 %v443
        %v599 = vunpack.c.l.b16 %v444
        %v600 = vpack.c.b16 %v537, %v536
        %v601 = vpack.c.b16 %v539, %v538
        %v602 = vpack.c.b16 %v541, %v540
        %v603 = vpack.c.b16 %v543, %v542
        %v604 = vpack.c.b16 %v545, %v544
        %v605 = vpack.c.b16 %v547, %v546
        %v606 = vpack.c.b16 %v549, %v548
        %v607 = vpack.c.b16 %v551, %v550
        %v608 = vpack.c.b16 %v553, %v552
        %v609 = vpack.c.b16 %v555, %v554
        %v610 = vpack.c.b16 %v557, %v556
        %v611 = vpack.c.b16 %v559, %v558
        %v612 = vpack.c.b16 %v561, %v560
        %v613 = vpack.c.b16 %v563, %v562
        %v614 = vpack.c.b16 %v565, %v564
        %v615 = vpack.c.b16 %v567, %v566
        %v616 = vpack.c.b16 %v569, %v568
        %v617 = vpack.c.b16 %v571, %v570
        %v618 = vpack.c.b16 %v573, %v572
        %v619 = vpack.c.b16 %v575, %v574
        %v620 = vpack.c.b16 %v577, %v576
        %v621 = vpack.c.b16 %v579, %v578
        %v622 = vpack.c.b16 %v581, %v580
        %v623 = vpack.c.b16 %v583, %v582
        %v624 = vpack.c.b16 %v585, %v584
        %v625 = vpack.c.b16 %v587, %v586
        %v626 = vpack.c.b16 %v589, %v588
        %v627 = vpack.c.b16 %v591, %v590
        %v628 = vpack.c.b16 %v593, %v592
        %v629 = vpack.c.b16 %v595, %v594
        %v630 = vpack.c.b16 %v597, %v596
        %v631 = vpack.c.b16 %v599, %v598
        %664 = vmatprep.subr.bf16.mxu0 0
        %665 = vmatpush1.bf16.msra.mxu0 %v600
        %666 = vmatprep.subr.bf16.mxu0 0
        %667 = vmatpush1.bf16.msra.mxu0 %v601
        %668 = vmatprep.subr.bf16.mxu0 0
        %669 = vmatpush1.bf16.msra.mxu0 %v602
        %670 = vmatprep.subr.bf16.mxu0 0
        %671 = vmatpush1.bf16.msra.mxu0 %v603
        %672 = vmatprep.subr.bf16.mxu0 0
        %673 = vmatpush1.bf16.msra.mxu0 %v604
        %674 = vmatprep.subr.bf16.mxu0 0
        %675 = vmatpush1.bf16.msra.mxu0 %v605
        %676 = vmatprep.subr.bf16.mxu0 0
        %677 = vmatpush1.bf16.msra.mxu0 %v606
        %678 = vmatprep.subr.bf16.mxu0 0
        %679 = vmatpush1.bf16.msra.mxu0 %v607
        %680 = vmatprep.subr.bf16.mxu0 0
        %681 = vmatpush1.bf16.msra.mxu0 %v608
        %682 = vmatprep.subr.bf16.mxu0 0
        %683 = vmatpush1.bf16.msra.mxu0 %v609
        %684 = vmatprep.subr.bf16.mxu0 0
        %685 = vmatpush1.bf16.msra.mxu0 %v610
        %686 = vmatprep.subr.bf16.mxu0 0
        %687 = vmatpush1.bf16.msra.mxu0 %v611
        %688 = vmatprep.subr.bf16.mxu0 0
        %689 = vmatpush1.bf16.msra.mxu0 %v612
        %690 = vmatprep.subr.bf16.mxu0 0
        %691 = vmatpush1.bf16.msra.mxu0 %v613
        %692 = vmatprep.subr.bf16.mxu0 0
        %693 = vmatpush1.bf16.msra.mxu0 %v614
        %694 = vmatprep.subr.bf16.mxu0 0
        %695 = vmatpush1.bf16.msra.mxu0 %v615
        %696 = vmatprep.mubr.bf16.mxu0 %v465
        %697 = vmatmul.mubr.bf16.gmra.mrb[0].mxu0 %v464
        %v698 = vpop.f32.mrb[0].mxu0
        %v699 = vadd.f32 %v450, %v698
        %v700 = vpop.f32.mrb[0].mxu0
        %v701 = vpop.f32.mrb[0].mxu0
        %v702 = vadd.f32 %v450, %v701
        %v703 = vpop.f32.mrb[0].mxu0
        %704 = vdwg.mxu0
        %705 = vmatprep.subr.bf16.mxu0 0
        %706 = vmatpush1.bf16.msra.mxu0 %v616
        %707 = vmatprep.subr.bf16.mxu0 0
        %708 = vmatpush1.bf16.msra.mxu0 %v617
        %709 = vmatprep.subr.bf16.mxu0 0
        %710 = vmatpush1.bf16.msra.mxu0 %v618
        %711 = vmatprep.subr.bf16.mxu0 0
        %712 = vmatpush1.bf16.msra.mxu0 %v619
        %713 = vmatprep.subr.bf16.mxu0 0
        %714 = vmatpush1.bf16.msra.mxu0 %v620
        %715 = vmatprep.subr.bf16.mxu0 0
        %716 = vmatpush1.bf16.msra.mxu0 %v621
        %717 = vmatprep.subr.bf16.mxu0 0
        %718 = vmatpush1.bf16.msra.mxu0 %v622
        %719 = vmatprep.subr.bf16.mxu0 0
        %720 = vmatpush1.bf16.msra.mxu0 %v623
        %721 = vmatprep.subr.bf16.mxu0 0
        %722 = vmatpush1.bf16.msra.mxu0 %v624
        %723 = vmatprep.subr.bf16.mxu0 0
        %724 = vmatpush1.bf16.msra.mxu0 %v625
        %725 = vmatprep.subr.bf16.mxu0 0
        %726 = vmatpush1.bf16.msra.mxu0 %v626
        %727 = vmatprep.subr.bf16.mxu0 0
        %728 = vmatpush1.bf16.msra.mxu0 %v627
        %729 = vmatprep.subr.bf16.mxu0 0
        %730 = vmatpush1.bf16.msra.mxu0 %v628
        %731 = vmatprep.subr.bf16.mxu0 0
        %732 = vmatpush1.bf16.msra.mxu0 %v629
        %733 = vmatprep.subr.bf16.mxu0 0
        %734 = vmatpush1.bf16.msra.mxu0 %v630
        %735 = vmatprep.subr.bf16.mxu0 0
        %736 = vmatpush1.bf16.msra.mxu0 %v631
        %737 = vmatprep.mubr.bf16.mxu0 %v467
        %738 = vmatmul.mubr.bf16.gmra.mrb[0].mxu0 %v466
        %v739 = vpop.f32.mrb[0].mxu0
        %v740 = vadd.f32 %v699, %v739
        %v741 = vpop.f32.mrb[0].mxu0
        %v742 = vpop.f32.mrb[0].mxu0
        %v743 = vadd.f32 %v702, %v742
        %v744 = vpop.f32.mrb[0].mxu0
        %745 = vdwg.mxu0
        %s746 = smul.u32 %s28, 16
        %v747 = vxor.u32 %v740, 2147483648
        %v748 = vxor.u32 %v743, 2147483648
        %v749 = vmul.f32 %v747, 1.442695
        %v750 = vpow.pop %v749
        %v751 = vmul.f32 %v748, 1.442695
        %v752 = vpow.pop %v751
        %v753 = vadd.f32 %v750, 1.0
        %v754 = vadd.f32 %v752, 1.0
        %v755 = vrcp.pop %v753
        %v756 = vmul.f32 1.0, %v755
        %v757 = vrcp.pop %v754
        %v758 = vmul.f32 1.0, %v757
        %s759 = scalar_lea.vmem %s294, %s746
        %vm760 = vcmask 7168
        %761 = vst.msk [vmem:[%s759] sm:$0xff] %vm760, %v756
        %762 = vst.msk [vmem:[%s759 + $0x8] sm:$0xff] %vm760, %v758
        // Predicated region
        $region45: #{multitask_forward.5} parent=39 // pred_check
          %p763 = pneg %p296
        $region46: #{multitask_forward.5} parent=39 // pred_check_branch
          %765 = sbr.rel (%p763) target = $region48
        $region47: #{multitask_forward.5} parent=39 // pred_region
          %v766 = vld [vmem:[#allocation2] sm:$0xf]
          %v767 = vmul.f32 %v766, 0.0625
          %v768 = vld [vmem:[%s3] sm:$0xff]
          %v769 = vld [vmem:[%s3 + $0x8] sm:$0xff]
          %v770 = vld [vmem:[%s3 + $0x10] sm:$0xff]
          %v771 = vld [vmem:[%s3 + $0x18] sm:$0xff]
          %v772 = vld [vmem:[%s3 + $0x20] sm:$0xff]
          %v773 = vld [vmem:[%s3 + $0x28] sm:$0xff]
          %v774 = vld [vmem:[%s3 + $0x30] sm:$0xff]
          %v775 = vld [vmem:[%s3 + $0x38] sm:$0xff]
          %v776 = vld [vmem:[%s3 + $0x40] sm:$0xff]
          %v777 = vld [vmem:[%s3 + $0x48] sm:$0xff]
          %v778 = vld [vmem:[%s3 + $0x50] sm:$0xff]
          %v779 = vld [vmem:[%s3 + $0x58] sm:$0xff]
          %v780 = vld [vmem:[%s3 + $0x60] sm:$0xff]
          %v781 = vld [vmem:[%s3 + $0x68] sm:$0xff]
          %v782 = vld [vmem:[%s3 + $0x70] sm:$0xff]
          %v783 = vld [vmem:[%s3 + $0x78] sm:$0xff]
          %v784 = vld [vmem:[%s3 + $0x80] sm:$0xff]
          %v785 = vld [vmem:[%s3 + $0x88] sm:$0xff]
          %v786 = vld [vmem:[%s3 + $0x90] sm:$0xff]
          %v787 = vld [vmem:[%s3 + $0x98] sm:$0xff]
          %v788 = vld [vmem:[%s3 + $0xa0] sm:$0xff]
          %v789 = vld [vmem:[%s3 + $0xa8] sm:$0xff]
          %v790 = vld [vmem:[%s3 + $0xb0] sm:$0xff]
          %v791 = vld [vmem:[%s3 + $0xb8] sm:$0xff]
          %v792 = vld [vmem:[%s3 + $0xc0] sm:$0xff]
          %v793 = vld [vmem:[%s3 + $0xc8] sm:$0xff]
          %v794 = vld [vmem:[%s3 + $0xd0] sm:$0xff]
          %v795 = vld [vmem:[%s3 + $0xd8] sm:$0xff]
          %v796 = vld [vmem:[%s3 + $0xe0] sm:$0xff]
          %v797 = vld [vmem:[%s3 + $0xe8] sm:$0xff]
          %v798 = vld [vmem:[%s3 + $0xf0] sm:$0xff]
          %v799 = vld [vmem:[%s3 + $0xf8] sm:$0xff]
          %v800 = vld [vmem:[%s3 + $0x100] sm:$0xff]
          %v801 = vld [vmem:[%s3 + $0x108] sm:$0xff]
          %v802 = vld [vmem:[%s3 + $0x110] sm:$0xff]
          %v803 = vld [vmem:[%s3 + $0x118] sm:$0xff]
          %v804 = vld [vmem:[%s3 + $0x120] sm:$0xff]
          %v805 = vld [vmem:[%s3 + $0x128] sm:$0xff]
          %v806 = vld [vmem:[%s3 + $0x130] sm:$0xff]
          %v807 = vld [vmem:[%s3 + $0x138] sm:$0xff]
          %v808 = vld [vmem:[%s3 + $0x140] sm:$0xff]
          %v809 = vld [vmem:[%s3 + $0x148] sm:$0xff]
          %v810 = vld [vmem:[%s3 + $0x150] sm:$0xff]
          %v811 = vld [vmem:[%s3 + $0x158] sm:$0xff]
          %v812 = vld [vmem:[%s3 + $0x160] sm:$0xff]
          %v813 = vld [vmem:[%s3 + $0x168] sm:$0xff]
          %v814 = vld [vmem:[%s3 + $0x170] sm:$0xff]
          %v815 = vld [vmem:[%s3 + $0x178] sm:$0xff]
          %v816 = vld [vmem:[%s3 + $0x180] sm:$0xff]
          %v817 = vld [vmem:[%s3 + $0x188] sm:$0xff]
          %v818 = vld [vmem:[%s3 + $0x190] sm:$0xff]
          %v819 = vld [vmem:[%s3 + $0x198] sm:$0xff]
          %v820 = vld [vmem:[%s3 + $0x1a0] sm:$0xff]
          %v821 = vld [vmem:[%s3 + $0x1a8] sm:$0xff]
          %v822 = vld [vmem:[%s3 + $0x1b0] sm:$0xff]
          %v823 = vld [vmem:[%s3 + $0x1b8] sm:$0xff]
          %v824 = vld [vmem:[%s3 + $0x1c0] sm:$0xff]
          %v825 = vld [vmem:[%s3 + $0x1c8] sm:$0xff]
          %v826 = vld [vmem:[%s3 + $0x1d0] sm:$0xff]
          %v827 = vld [vmem:[%s3 + $0x1d8] sm:$0xff]
          %v828 = vld [vmem:[%s3 + $0x1e0] sm:$0xff]
          %v829 = vld [vmem:[%s3 + $0x1e8] sm:$0xff]
          %v830 = vld [vmem:[%s3 + $0x1f0] sm:$0xff]
          %v831 = vld [vmem:[%s3 + $0x1f8] sm:$0xff]
          %v832 = vld [vmem:[%s4] sm:$0x1]
          %v834 = vlaneseq
          %v835 = vshrl.u32 %v834, 7
          %v836 = vsub.s32 0, %v835
          %v837 = vrot.slane %v767, %v836
          %v838 = vlaneseq
          %v839 = vshrl.u32 %v838, 7
          %v840 = vsub.s32 1, %v839
          %v841 = vrot.slane %v767, %v840
          %v842 = vlaneseq
          %v843 = vshrl.u32 %v842, 7
          %v844 = vsub.s32 2, %v843
          %v845 = vrot.slane %v767, %v844
          %v846 = vlaneseq
          %v847 = vshrl.u32 %v846, 7
          %v848 = vsub.s32 3, %v847
          %v849 = vrot.slane %v767, %v848
          %854 = vmatprep.subr.mxu0 0.0
          %855 = vmatpush1.msra.mxu0 %v768
          %856 = vmatprep.subr.mxu0 0.0
          %857 = vmatpush1.msra.mxu0 %v769
          %858 = vmatprep.subr.mxu0 0.0
          %859 = vmatpush1.msra.mxu0 %v770
          %860 = vmatprep.subr.mxu0 0.0
          %861 = vmatpush1.msra.mxu0 %v771
          %862 = vmatprep.subr.mxu0 0.0
          %863 = vmatpush1.msra.mxu0 %v772
          %864 = vmatprep.subr.mxu0 0.0
          %865 = vmatpush1.msra.mxu0 %v773
          %866 = vmatprep.subr.mxu0 0.0
          %867 = vmatpush1.msra.mxu0 %v774
          %868 = vmatprep.subr.mxu0 0.0
          %869 = vmatpush1.msra.mxu0 %v775
          %870 = vmatprep.subr.mxu0 0.0
          %871 = vmatpush1.msra.mxu0 %v776
          %872 = vmatprep.subr.mxu0 0.0
          %873 = vmatpush1.msra.mxu0 %v777
          %874 = vmatprep.subr.mxu0 0.0
          %875 = vmatpush1.msra.mxu0 %v778
          %876 = vmatprep.subr.mxu0 0.0
          %877 = vmatpush1.msra.mxu0 %v779
          %878 = vmatprep.subr.mxu0 0.0
          %879 = vmatpush1.msra.mxu0 %v780
          %880 = vmatprep.subr.mxu0 0.0
          %881 = vmatpush1.msra.mxu0 %v781
          %882 = vmatprep.subr.mxu0 0.0
          %883 = vmatpush1.msra.mxu0 %v782
          %884 = vmatprep.subr.mxu0 0.0
          %885 = vmatpush1.msra.mxu0 %v783
          %886 = vmatprep.subr.mxu0 0.0
          %887 = vmatpush1.msra.mxu0 %v784
          %888 = vmatprep.subr.mxu0 0.0
          %889 = vmatpush1.msra.mxu0 %v785
          %890 = vmatprep.subr.mxu0 0.0
          %891 = vmatpush1.msra.mxu0 %v786
          %892 = vmatprep.subr.mxu0 0.0
          %893 = vmatpush1.msra.mxu0 %v787
          %894 = vmatprep.subr.mxu0 0.0
          %895 = vmatpush1.msra.mxu0 %v788
          %896 = vmatprep.subr.mxu0 0.0
          %897 = vmatpush1.msra.mxu0 %v789
          %898 = vmatprep.subr.mxu0 0.0
          %899 = vmatpush1.msra.mxu0 %v790
          %900 = vmatprep.subr.mxu0 0.0
          %901 = vmatpush1.msra.mxu0 %v791
          %902 = vmatprep.subr.mxu0 0.0
          %903 = vmatpush1.msra.mxu0 %v792
          %904 = vmatprep.subr.mxu0 0.0
          %905 = vmatpush1.msra.mxu0 %v793
          %906 = vmatprep.subr.mxu0 0.0
          %907 = vmatpush1.msra.mxu0 %v794
          %908 = vmatprep.subr.mxu0 0.0
          %909 = vmatpush1.msra.mxu0 %v795
          %910 = vmatprep.subr.mxu0 0.0
          %911 = vmatpush1.msra.mxu0 %v796
          %912 = vmatprep.subr.mxu0 0.0
          %913 = vmatpush1.msra.mxu0 %v797
          %914 = vmatprep.subr.mxu0 0.0
          %915 = vmatpush1.msra.mxu0 %v798
          %916 = vmatprep.subr.mxu0 0.0
          %917 = vmatpush1.msra.mxu0 %v799
          %918 = vmatprep.mubr.f32.mxu0 %v841
          %919 = vmatmul.mubr.f32.gmra.mrb[0].mxu0 %v837
          %v920 = vpop.f32.mrb[0].mxu0
          %v921 = vadd.f32 %v832, %v920
          %v922 = vpop.f32.mrb[0].mxu0
          %923 = vdwg.mxu0
          %924 = vmatprep.subr.mxu0 0.0
          %925 = vmatpush1.msra.mxu0 %v800
          %926 = vmatprep.subr.mxu0 0.0
          %927 = vmatpush1.msra.mxu0 %v801
          %928 = vmatprep.subr.mxu0 0.0
          %929 = vmatpush1.msra.mxu0 %v802
          %930 = vmatprep.subr.mxu0 0.0
          %931 = vmatpush1.msra.mxu0 %v803
          %932 = vmatprep.subr.mxu0 0.0
          %933 = vmatpush1.msra.mxu0 %v804
          %934 = vmatprep.subr.mxu0 0.0
          %935 = vmatpush1.msra.mxu0 %v805
          %936 = vmatprep.subr.mxu0 0.0
          %937 = vmatpush1.msra.mxu0 %v806
          %938 = vmatprep.subr.mxu0 0.0
          %939 = vmatpush1.msra.mxu0 %v807
          %940 = vmatprep.subr.mxu0 0.0
          %941 = vmatpush1.msra.mxu0 %v808
          %942 = vmatprep.subr.mxu0 0.0
          %943 = vmatpush1.msra.mxu0 %v809
          %944 = vmatprep.subr.mxu0 0.0
          %945 = vmatpush1.msra.mxu0 %v810
          %946 = vmatprep.subr.mxu0 0.0
          %947 = vmatpush1.msra.mxu0 %v811
          %948 = vmatprep.subr.mxu0 0.0
          %949 = vmatpush1.msra.mxu0 %v812
          %950 = vmatprep.subr.mxu0 0.0
          %951 = vmatpush1.msra.mxu0 %v813
          %952 = vmatprep.subr.mxu0 0.0
          %953 = vmatpush1.msra.mxu0 %v814
          %954 = vmatprep.subr.mxu0 0.0
          %955 = vmatpush1.msra.mxu0 %v815
          %956 = vmatprep.subr.mxu0 0.0
          %957 = vmatpush1.msra.mxu0 %v816
          %958 = vmatprep.subr.mxu0 0.0
          %959 = vmatpush1.msra.mxu0 %v817
          %960 = vmatprep.subr.mxu0 0.0
          %961 = vmatpush1.msra.mxu0 %v818
          %962 = vmatprep.subr.mxu0 0.0
          %963 = vmatpush1.msra.mxu0 %v819
          %964 = vmatprep.subr.mxu0 0.0
          %965 = vmatpush1.msra.mxu0 %v820
          %966 = vmatprep.subr.mxu0 0.0
          %967 = vmatpush1.msra.mxu0 %v821
          %968 = vmatprep.subr.mxu0 0.0
          %969 = vmatpush1.msra.mxu0 %v822
          %970 = vmatprep.subr.mxu0 0.0
          %971 = vmatpush1.msra.mxu0 %v823
          %972 = vmatprep.subr.mxu0 0.0
          %973 = vmatpush1.msra.mxu0 %v824
          %974 = vmatprep.subr.mxu0 0.0
          %975 = vmatpush1.msra.mxu0 %v825
          %976 = vmatprep.subr.mxu0 0.0
          %977 = vmatpush1.msra.mxu0 %v826
          %978 = vmatprep.subr.mxu0 0.0
          %979 = vmatpush1.msra.mxu0 %v827
          %980 = vmatprep.subr.mxu0 0.0
          %981 = vmatpush1.msra.mxu0 %v828
          %982 = vmatprep.subr.mxu0 0.0
          %983 = vmatpush1.msra.mxu0 %v829
          %984 = vmatprep.subr.mxu0 0.0
          %985 = vmatpush1.msra.mxu0 %v830
          %986 = vmatprep.subr.mxu0 0.0
          %987 = vmatpush1.msra.mxu0 %v831
          %988 = vmatprep.mubr.f32.mxu0 %v849
          %989 = vmatmul.mubr.f32.gmra.mrb[0].mxu0 %v845
          %v990 = vpop.f32.mrb[0].mxu0
          %v991 = vadd.f32 %v921, %v990
          %v992 = vpop.f32.mrb[0].mxu0
          %993 = vdwg.mxu0
          %vm994 = vcmask 16384
          %995 = vst.msk [vmem:[%s271] sm:$0x1] %vm994, %v991
          %v996 = vsel %vm994, %v991, -inf
          %997 = vmax.xlane.f32.xlu0 %v996
          %v998 = vpop.xlane.xlu0 %997
          %vm999 = vcmp.ge.f32.partialorder %v991, %v998
          %v1000 = vsel %vm999, 1, 0
          %v1001 = vcvt.s32.f32 %v1000
          %v1002 = vld [vmem:[%s294] sm:$0xff]
          %v1003 = vld [vmem:[%s294 + $0x8] sm:$0xff]
          %s1004 = vtos %v1001
          %s1005 = ssub.f32 1.0, %s1004
          %v1006 = vstv %s1005
          %v1007 = vmul.f32 %v1002, %v1006
          %v1008 = vmul.f32 %v1003, %v1006
          %1009 = vst.msk [vmem:[%s294] sm:$0xff] %vm760, %v1007
          %1010 = vst.msk [vmem:[%s294 + $0x8] sm:$0xff] %vm760, %v1008
        $region48: #{multitask_forward.5} parent=39 // pred_fallthru
          _
        %s1011 = sand.u32 %s155, 1
        %s1012 = scalar_lea.sflag [#allocation5], %s1011
        %s1013 = sand.u32 %s155, 1
        %s1014 = scalar_lea.vmem [#allocation4], %s1013
        %p1015 = scmp.lt.s32.totalorder %s27, 1
        %s1016 = scalar_select %p1015, %s27, 1
        %s1017 = smul.addr %s1016, 2
        %s1018 = smul.addr %s1017, 8
        %s1019 = scalar_lea.vmem %s6, %s1018
        // Predicated region
        $region49: #{multitask_forward.5} parent=39 // pred_check
          %p1020 = pneg %p165
        $region50: #{multitask_forward.5} parent=39 // pred_check_branch
          %1022 = sbr.rel (%p1020) target = $region52
        $region51: #{multitask_forward.5} parent=39 // pred_region
          %s1024 = ssub.s32 16, 16
          %1025 = vsyncadd %s1012, %s1024
          %s1026 = smul.addr %s27, 16
          %s1027 = scalar_lea.hbm %s5, %s1026
          %s1029 = sshll.u32 %s1014, 4
          %s1030 = int_to_ptr.vmem [resolvable:$true] %s1029
          %1032 = dma.vmem_to_hbm [thread:$0]  %s1030, 16, %s1027, %s1012
        $region52: #{multitask_forward.5} parent=39 // pred_fallthru
          _
        // Predicated region
        $region53: #{multitask_forward.5} parent=39 // pred_check
          %p1033 = pneg %p191
        $region54: #{multitask_forward.5} parent=39 // pred_check_branch
          %1035 = sbr.rel (%p1033) target = $region56
        $region55: #{multitask_forward.5} parent=39 // pred_region
          _
        $region56: #{multitask_forward.5} parent=39 // pred_fallthru
          _
      $region40: #{multitask_forward.5} parent=5 // pred_fallthru
        _
      %p1036 = scmp.le.s32.totalorder 2, %s18
      // Predicated region
      $region57: #{multitask_forward.5} parent=5 // pred_check
        %p1037 = pneg %p1036
      $region58: #{multitask_forward.5} parent=5 // pred_check_branch
        %1039 = sbr.rel (%p1037) target = $region60
      $region59: #{multitask_forward.5} parent=5 // pred_region
        %s1040 = ssub.s32 %s18, 2
        // Predicated region
        $region61: #{multitask_forward.5} parent=59 // pred_check
          %p1041 = pneg %p171
        $region62: #{multitask_forward.5} parent=59 // pred_check_branch
          %1043 = sbr.rel (%p1041) target = $region64
        $region63: #{multitask_forward.5} parent=59 // pred_region
          %s1044 = sand.u32 %s156, 1
          %s1045 = scalar_lea.sflag [#allocation5], %s1044
          %s1046 = sand.u32 %s156, 1
          %s1047 = scalar_lea.vmem [#allocation4], %s1046
          %1048 = dma.done %s1045, 16
        $region64: #{multitask_forward.5} parent=59 // pred_fallthru
          _
        // Predicated region
        $region65: #{multitask_forward.5} parent=59 // pred_check
          %p1049 = pneg %p197
        $region66: #{multitask_forward.5} parent=59 // pred_check_branch
          %1051 = sbr.rel (%p1049) target = $region68
        $region67: #{multitask_forward.5} parent=59 // pred_region
          %p1052 = scmp.lt.s32.totalorder %s29, 1
          %s1053 = scalar_select %p1052, %s29, 1
          %s1054 = smul.addr %s1053, 2
          %s1055 = smul.addr %s1054, 8
          %s1056 = scalar_lea.vmem %s6, %s1055
        $region68: #{multitask_forward.5} parent=59 // pred_fallthru
          _
      $region60: #{multitask_forward.5} parent=5 // pred_fallthru
        _
    $region6: #{multitask_forward.5} parent=1 // loop_footer
      %s22 = sadd.s32 1, %s18
    $region7: #{multitask_forward.5} parent=1 // loop_footer_branch
      %17 = sbr.rel target = $region3
    $region8: #{multitask_forward.5} parent=1 // loop_exit
      _
    %1057 = vsyncpa [#allocation5], 1
    %s1058 = scalar_lea.sflag [#allocation5], 1
    %1059 = vsyncpa %s1058, 1

</llo_original>
